<compile_context>
chip_gen: v5e
topology: v5e:2x2
jax: 0.10.0
libtpu: 0.0.40
codegen_flags: <defaults>
</compile_context>

<pallas_src>
import functools

import jax
import jax.numpy as jnp
from jax.experimental import pallas as pl
from jax.experimental.pallas import tpu as pltpu

_PREC = jax.lax.Precision.HIGHEST
_TAPS = tuple((dy, dx) for dy in (-1, 0, 1) for dx in (-1, 0, 1))


def _drc_kernel(fusion_ref, xr_ref, xd_ref, mask_ref,
                segw_ref, segb_ref, w3_ref, b3_ref, bns_ref, bnb_ref,
                fws_ref, fwc_ref, fb_ref,
                rc_ref, dc_ref, rf_ref, df_ref, *, W, nc):
    f = fusion_ref[0]                                          # (Cin, HW) lane-dense
    hw = f.shape[-1]

    # --- both branches' 1x1 seg convs as ONE MXU matmul --------------------
    missing = jnp.dot(segw_ref[...], f,
                      preferred_element_type=jnp.float32,
                      precision=_PREC) + segb_ref[...]         # (2nc, HW)

    # --- 3x3 conv, padding=1: 9 shifted taps -> one deep matmul ------------
    taps = []
    for (dy, dx) in _TAPS:
        off = dy * W + dx
        if off == 0:
            taps.append(missing)
        else:
            # shifted[:, p] = missing[:, p + off]  (wrap positions are masked off)
            taps.append(pltpu.roll(missing, shift=(-off) % hw, axis=1))
    stacked = jnp.concatenate(taps, axis=0) * mask_ref[...]    # (9*2nc, HW)

    conv3 = jnp.dot(w3_ref[...], stacked,
                    preferred_element_type=jnp.float32,
                    precision=_PREC) + b3_ref[...]             # (2nc, HW)

    # Folded (inference) BatchNorm + ReLU, residual add.
    comple = missing + jnp.maximum(conv3 * bns_ref[...] + bnb_ref[...], 0.0)

    # Fusion 1x1 conv on cat([x_side, comple]) == two block-diagonal matmuls.
    x_side = jnp.concatenate([xr_ref[0], xd_ref[0]], axis=0)   # (2nc, HW)
    fused = (jnp.dot(fws_ref[...], x_side,
                     preferred_element_type=jnp.float32, precision=_PREC)
             + jnp.dot(fwc_ref[...], comple,
                       preferred_element_type=jnp.float32, precision=_PREC)
             + fb_ref[...])

    rc_ref[0] = comple[:nc].astype(rc_ref.dtype)
    dc_ref[0] = comple[nc:].astype(dc_ref.dtype)
    rf_ref[0] = fused[:nc].astype(rf_ref.dtype)
    df_ref[0] = fused[nc:].astype(df_ref.dtype)


def drc_forward(fusion, x_r, x_d, params, *, eps=1e-5):
    """fusion: (B, Cin, H, W); x_r, x_d: (B, nc, H, W); params: dict of conv/BN tensors."""
    B, Cin, H, W = fusion.shape
    nc = params["rgb_seg_w"].shape[0]
    HW = H * W

    # Pure-view reshapes: HW stays the (lane-dense) minor axis.
    f2 = fusion.reshape(B, Cin, HW)
    xr2 = x_r.reshape(B, nc, HW)
    xd2 = x_d.reshape(B, nc, HW)

    def per_branch(prefix):
        seg_w = params[prefix + "_seg_w"].reshape(nc, Cin)
        seg_b = params[prefix + "_seg_b"].reshape(nc, 1)
        # (O, I, 3, 3) -> (O, 3, 3, I) -> (O, 9, I); tap k = (dy+1)*3 + (dx+1)
        w3 = jnp.transpose(params[prefix + "_c3_w"], (0, 2, 3, 1)).reshape(nc, 9, nc)
        b3 = params[prefix + "_c3_b"].reshape(nc, 1)
        gamma = params[prefix + "_bn_g"]
        beta = params[prefix + "_bn_b"]
        mean = params[prefix + "_bn_m"]
        var = params[prefix + "_bn_v"]
        scale = gamma / jnp.sqrt(var + eps)
        shift = beta - mean * scale
        fw = params[prefix + "_fu_w"].reshape(nc, 2 * nc)
        fb = params[prefix + "_fu_b"].reshape(nc, 1)
        return (seg_w, seg_b, w3, b3, scale.reshape(nc, 1), shift.reshape(nc, 1),
                fw[:, :nc], fw[:, nc:], fb)

    (r_sw, r_sb, r_w3, r_b3, r_sc, r_sh, r_f1, r_f2, r_fb) = per_branch("rgb")
    (d_sw, d_sb, d_w3, d_b3, d_sc, d_sh, d_f1, d_f2, d_fb) = per_branch("d")

    nc2 = 2 * nc
    segw = jnp.concatenate([r_sw, d_sw], axis=0)                       # (2nc, Cin)
    segb = jnp.concatenate([r_sb, d_sb], axis=0)                       # (2nc, 1)

    # Block-structured 3x3 weight acting on the stacked-tap slab (9*2nc rows).
    w3 = jnp.zeros((nc2, 9, nc2), jnp.float32)
    w3 = w3.at[:nc, :, :nc].set(r_w3).at[nc:, :, nc:].set(d_w3)
    w3 = w3.reshape(nc2, 9 * nc2)                                      # (2nc, 18nc)
    b3 = jnp.concatenate([r_b3, d_b3], axis=0)

    bns = jnp.concatenate([r_sc, d_sc], axis=0)
    bnb = jnp.concatenate([r_sh, d_sh], axis=0)

    fws = jnp.zeros((nc2, nc2), jnp.float32)
    fws = fws.at[:nc, :nc].set(r_f1).at[nc:, nc:].set(d_f1)            # acts on x_side
    fwc = jnp.zeros((nc2, nc2), jnp.float32)
    fwc = fwc.at[:nc, :nc].set(r_f2).at[nc:, nc:].set(d_f2)            # acts on comple
    fb = jnp.concatenate([r_fb, d_fb], axis=0)

    # Zero-padding masks for the 9 taps, precomputed on host (no in-kernel div/mod).
    yy, xx = jnp.meshgrid(jnp.arange(H), jnp.arange(W), indexing="ij")
    mask_rows = []
    for dy, dx in _TAPS:
        valid = ((yy + dy >= 0) & (yy + dy < H) & (xx + dx >= 0) & (xx + dx < W))
        mask_rows.append(valid.reshape(1, HW))
    mask9 = jnp.concatenate(mask_rows, axis=0).astype(jnp.float32)     # (9, HW)
    mask = jnp.repeat(mask9[:, None, :], nc2, axis=1).reshape(9 * nc2, HW)

    weights = (segw, segb, w3, b3, bns, bnb, fws, fwc, fb)
    inputs = (f2, xr2, xd2, mask) + weights

    in_specs = [
        pl.BlockSpec((1, Cin, HW), lambda b: (b, 0, 0)),
        pl.BlockSpec((1, nc, HW), lambda b: (b, 0, 0)),
        pl.BlockSpec((1, nc, HW), lambda b: (b, 0, 0)),
        pl.BlockSpec(mask.shape, lambda b: (0, 0)),
    ] + [pl.BlockSpec(w.shape, lambda b: (0, 0)) for w in weights]

    out_spec = pl.BlockSpec((1, nc, HW), lambda b: (b, 0, 0))
    out_shape = jax.ShapeDtypeStruct((B, nc, HW), fusion.dtype)

    flops = int(B * 2 * HW * (nc2 * Cin + nc2 * 9 * nc2 + 2 * nc2 * nc2))
    bytes_accessed = int(4 * (B * Cin * HW + 2 * B * nc * HW + 4 * B * nc * HW
                              + 9 * nc2 * HW
                              + nc2 * Cin + 9 * nc2 * nc2 + 2 * nc2 * nc2 + 5 * nc2))

    kernel = functools.partial(_drc_kernel, W=W, nc=nc)

    rc, dc, rf, df = pl.pallas_call(
        kernel,
        out_shape=(out_shape, out_shape, out_shape, out_shape),
        grid=(B,),
        in_specs=in_specs,
        out_specs=(out_spec, out_spec, out_spec, out_spec),
        compiler_params=pltpu.CompilerParams(
            dimension_semantics=("parallel",)),
        cost_estimate=pl.CostEstimate(flops=flops, transcendentals=0,
                                      bytes_accessed=bytes_accessed),
    )(*inputs)

    return (rc.reshape(B, nc, H, W), dc.reshape(B, nc, H, W),
            rf.reshape(B, nc, H, W), df.reshape(B, nc, H, W))


def _reference(fusion, x_r, x_d, params, *, eps=1e-5):
    dn = ("NCHW", "OIHW", "NCHW")

    def conv(x, w, b, pad):
        y = jax.lax.conv_general_dilated(x, w, (1, 1), pad, dimension_numbers=dn,
                                         precision=_PREC)
        return y + b[None, :, None, None]

    def branch(prefix, x_side):
        missing = conv(fusion, params[prefix + "_seg_w"], params[prefix + "_seg_b"], "VALID")
        c3 = conv(missing, params[prefix + "_c3_w"], params[prefix + "_c3_b"],
                  ((1, 1), (1, 1)))
        g = params[prefix + "_bn_g"][None, :, None, None]
        be = params[prefix + "_bn_b"][None, :, None, None]
        m = params[prefix + "_bn_m"][None, :, None, None]
        v = params[prefix + "_bn_v"][None, :, None, None]
        bn = (c3 - m) / jnp.sqrt(v + eps) * g + be
        comple = missing + jnp.maximum(bn, 0.0)
        cat = jnp.concatenate([x_side, comple], axis=1)
        fused = conv(cat, params[prefix + "_fu_w"], params[prefix + "_fu_b"], "VALID")
        return comple, fused

    rc, rf = branch("rgb", x_r)
    dc, df = branch("d", x_d)
    return rc, dc, rf, df


if __name__ == "__main__":
    B, Cin, nc, H, W = 2, 32, 8, 16, 16   # in_channel=32, n_class=8

    keys = iter(jax.random.split(jax.random.PRNGKey(0), 32))

    def rnd(shape, scale=0.1):
        return jax.random.normal(next(keys), shape, dtype=jnp.float32) * scale

    params = {}
    for prefix in ("rgb", "d"):
        params[prefix + "_seg_w"] = rnd((nc, Cin, 1, 1))
        params[prefix + "_seg_b"] = rnd((nc,))
        params[prefix + "_c3_w"] = rnd((nc, nc, 3, 3))
        params[prefix + "_c3_b"] = rnd((nc,))
        params[prefix + "_bn_g"] = 1.0 + rnd((nc,))
        params[prefix + "_bn_b"] = rnd((nc,))
        params[prefix + "_bn_m"] = rnd((nc,))
        params[prefix + "_bn_v"] = 1.0 + jnp.abs(rnd((nc,)))
        params[prefix + "_fu_w"] = rnd((nc, 2 * nc, 1, 1))
        params[prefix + "_fu_b"] = rnd((nc,))

    fusion = jax.random.normal(next(keys), (B, Cin, H, W), dtype=jnp.float32)
    x_r = jax.random.normal(next(keys), (B, nc, H, W), dtype=jnp.float32)
    x_d = jax.random.normal(next(keys), (B, nc, H, W), dtype=jnp.float32)

    outs = drc_forward(fusion, x_r, x_d, params)
    outs = jax.block_until_ready(outs)

    refs = _reference(fusion, x_r, x_d, params)
    names = ("rgb_comple", "depth_comple", "rgb_fusion", "depth_fusion")
    for name, o, r in zip(names, outs, refs):
        assert o.shape == r.shape, (name, o.shape, r.shape)
        err = float(jnp.max(jnp.abs(o - r)))
        assert jnp.allclose(o, r, atol=1e-4, rtol=1e-4), (name, err)

    print("KERNEL_OK")
</pallas_src>

<mosaic_0001>
module attributes {stable_mosaic.version = 11 : i64} {
  func.func @_drc_kernel(%arg0: i32, %arg1: memref<1x32x256xf32, #tpu.memory_space<vmem>>, %arg2: memref<1x8x256xf32, #tpu.memory_space<vmem>>, %arg3: memref<1x8x256xf32, #tpu.memory_space<vmem>>, %arg4: memref<144x256xf32, #tpu.memory_space<vmem>>, %arg5: memref<16x32xf32, #tpu.memory_space<vmem>>, %arg6: memref<16x1xf32, #tpu.memory_space<vmem>>, %arg7: memref<16x144xf32, #tpu.memory_space<vmem>>, %arg8: memref<16x1xf32, #tpu.memory_space<vmem>>, %arg9: memref<16x1xf32, #tpu.memory_space<vmem>>, %arg10: memref<16x1xf32, #tpu.memory_space<vmem>>, %arg11: memref<16x16xf32, #tpu.memory_space<vmem>>, %arg12: memref<16x16xf32, #tpu.memory_space<vmem>>, %arg13: memref<16x1xf32, #tpu.memory_space<vmem>>, %arg14: memref<1x8x256xf32, #tpu.memory_space<vmem>>, %arg15: memref<1x8x256xf32, #tpu.memory_space<vmem>>, %arg16: memref<1x8x256xf32, #tpu.memory_space<vmem>>, %arg17: memref<1x8x256xf32, #tpu.memory_space<vmem>>) attributes {dimension_semantics = [#tpu.dimension_semantics<parallel>], iteration_bounds = array<i64: 2>, scalar_prefetch = 0 : i64, scratch_operands = 0 : i64, tpu.core_type = #tpu.core_type<tc>, window_params = [{transform_indices = @transform_0, window_bounds = array<i64: 1, 32, 256>}, {transform_indices = @transform_1, window_bounds = array<i64: 1, 8, 256>}, {transform_indices = @transform_2, window_bounds = array<i64: 1, 8, 256>}, {pipeline_mode = #tpu.pipeline_mode<synchronous>, transform_indices = @transform_3, window_bounds = array<i64: 144, 256>}, {pipeline_mode = #tpu.pipeline_mode<synchronous>, transform_indices = @transform_4, window_bounds = array<i64: 16, 32>}, {pipeline_mode = #tpu.pipeline_mode<synchronous>, transform_indices = @transform_5, window_bounds = array<i64: 16, 1>}, {pipeline_mode = #tpu.pipeline_mode<synchronous>, transform_indices = @transform_6, window_bounds = array<i64: 16, 144>}, {pipeline_mode = #tpu.pipeline_mode<synchronous>, transform_indices = @transform_7, window_bounds = array<i64: 16, 1>}, {pipeline_mode = #tpu.pipeline_mode<synchronous>, transform_indices = @transform_8, window_bounds = array<i64: 16, 1>}, {pipeline_mode = #tpu.pipeline_mode<synchronous>, transform_indices = @transform_9, window_bounds = array<i64: 16, 1>}, {pipeline_mode = #tpu.pipeline_mode<synchronous>, transform_indices = @transform_10, window_bounds = array<i64: 16, 16>}, {pipeline_mode = #tpu.pipeline_mode<synchronous>, transform_indices = @transform_11, window_bounds = array<i64: 16, 16>}, {pipeline_mode = #tpu.pipeline_mode<synchronous>, transform_indices = @transform_12, window_bounds = array<i64: 16, 1>}, {transform_indices = @transform_13, window_bounds = array<i64: 1, 8, 256>}, {transform_indices = @transform_14, window_bounds = array<i64: 1, 8, 256>}, {transform_indices = @transform_15, window_bounds = array<i64: 1, 8, 256>}, {transform_indices = @transform_16, window_bounds = array<i64: 1, 8, 256>}]} {
    %c0 = arith.constant 0 : index
    %c0_0 = arith.constant 0 : index
    %c0_1 = arith.constant 0 : index
    %0 = vector.load %arg1[%c0, %c0_0, %c0_1] : memref<1x32x256xf32, #tpu.memory_space<vmem>>, vector<1x32x256xf32>
    %1 = vector.shape_cast %0 : vector<1x32x256xf32> to vector<32x256xf32>
    %c0_2 = arith.constant 0 : index
    %c0_3 = arith.constant 0 : index
    %2 = vector.load %arg5[%c0_2, %c0_3] : memref<16x32xf32, #tpu.memory_space<vmem>>, vector<16x32xf32>
    %cst = arith.constant dense<0.000000e+00> : vector<16x256xf32>
    %3 = tpu.matmul %2, %1, %cst {dimension_numbers = #tpu.dot_dimension_numbers<[1], [0], [0], [1], [0, 0, 1, 1], [], []>, precision = #tpu.contract_precision<fp32>} : vector<16x32xf32>, vector<32x256xf32>, vector<16x256xf32> -> vector<16x256xf32>
    %c0_4 = arith.constant 0 : index
    %c0_5 = arith.constant 0 : index
    %4 = vector.load %arg6[%c0_4, %c0_5] : memref<16x1xf32, #tpu.memory_space<vmem>>, vector<16x1xf32>
    %5 = vector.broadcast %4 : vector<16x1xf32> to vector<16x256xf32>
    %6 = arith.addf %3, %5 : vector<16x256xf32>
    %c17_i32 = arith.constant 17 : i32
    %7 = tpu.dynamic_rotate %6 by %c17_i32 dim 1 : vector<16x256xf32>, i32 -> vector<16x256xf32>
    %c16_i32 = arith.constant 16 : i32
    %8 = tpu.dynamic_rotate %6 by %c16_i32 dim 1 : vector<16x256xf32>, i32 -> vector<16x256xf32>
    %c15_i32 = arith.constant 15 : i32
    %9 = tpu.dynamic_rotate %6 by %c15_i32 dim 1 : vector<16x256xf32>, i32 -> vector<16x256xf32>
    %c1_i32 = arith.constant 1 : i32
    %10 = tpu.dynamic_rotate %6 by %c1_i32 dim 1 : vector<16x256xf32>, i32 -> vector<16x256xf32>
    %c255_i32 = arith.constant 255 : i32
    %11 = tpu.dynamic_rotate %6 by %c255_i32 dim 1 : vector<16x256xf32>, i32 -> vector<16x256xf32>
    %c241_i32 = arith.constant 241 : i32
    %12 = tpu.dynamic_rotate %6 by %c241_i32 dim 1 : vector<16x256xf32>, i32 -> vector<16x256xf32>
    %c240_i32 = arith.constant 240 : i32
    %13 = tpu.dynamic_rotate %6 by %c240_i32 dim 1 : vector<16x256xf32>, i32 -> vector<16x256xf32>
    %c239_i32 = arith.constant 239 : i32
    %14 = tpu.dynamic_rotate %6 by %c239_i32 dim 1 : vector<16x256xf32>, i32 -> vector<16x256xf32>
    %15 = tpu.concatenate %7, %8, %9, %10, %6, %11, %12, %13, %14 in 0 : vector<16x256xf32>, vector<16x256xf32>, vector<16x256xf32>, vector<16x256xf32>, vector<16x256xf32>, vector<16x256xf32>, vector<16x256xf32>, vector<16x256xf32>, vector<16x256xf32> -> vector<144x256xf32>
    %c0_6 = arith.constant 0 : index
    %c0_7 = arith.constant 0 : index
    %16 = vector.load %arg4[%c0_6, %c0_7] : memref<144x256xf32, #tpu.memory_space<vmem>>, vector<144x256xf32>
    %17 = arith.mulf %15, %16 : vector<144x256xf32>
    %c0_8 = arith.constant 0 : index
    %c0_9 = arith.constant 0 : index
    %18 = vector.load %arg7[%c0_8, %c0_9] : memref<16x144xf32, #tpu.memory_space<vmem>>, vector<16x144xf32>
    %cst_10 = arith.constant dense<0.000000e+00> : vector<16x256xf32>
    %19 = tpu.matmul %18, %17, %cst_10 {dimension_numbers = #tpu.dot_dimension_numbers<[1], [0], [0], [1], [0, 0, 1, 1], [], []>, precision = #tpu.contract_precision<fp32>} : vector<16x144xf32>, vector<144x256xf32>, vector<16x256xf32> -> vector<16x256xf32>
    %c0_11 = arith.constant 0 : index
    %c0_12 = arith.constant 0 : index
    %20 = vector.load %arg8[%c0_11, %c0_12] : memref<16x1xf32, #tpu.memory_space<vmem>>, vector<16x1xf32>
    %21 = vector.broadcast %20 : vector<16x1xf32> to vector<16x256xf32>
    %22 = arith.addf %19, %21 : vector<16x256xf32>
    %c0_13 = arith.constant 0 : index
    %c0_14 = arith.constant 0 : index
    %23 = vector.load %arg9[%c0_13, %c0_14] : memref<16x1xf32, #tpu.memory_space<vmem>>, vector<16x1xf32>
    %24 = vector.broadcast %23 : vector<16x1xf32> to vector<16x256xf32>
    %25 = arith.mulf %22, %24 : vector<16x256xf32>
    %c0_15 = arith.constant 0 : index
    %c0_16 = arith.constant 0 : index
    %26 = vector.load %arg10[%c0_15, %c0_16] : memref<16x1xf32, #tpu.memory_space<vmem>>, vector<16x1xf32>
    %27 = vector.broadcast %26 : vector<16x1xf32> to vector<16x256xf32>
    %28 = arith.addf %25, %27 : vector<16x256xf32>
    %cst_17 = arith.constant 0.000000e+00 : f32
    %29 = vector.broadcast %cst_17 : f32 to vector<16x256xf32>
    %30 = arith.maximumf %28, %29 : vector<16x256xf32>
    %31 = arith.addf %6, %30 : vector<16x256xf32>
    %c0_18 = arith.constant 0 : index
    %c0_19 = arith.constant 0 : index
    %c0_20 = arith.constant 0 : index
    %32 = vector.load %arg2[%c0_18, %c0_19, %c0_20] : memref<1x8x256xf32, #tpu.memory_space<vmem>>, vector<1x8x256xf32>
    %33 = vector.shape_cast %32 : vector<1x8x256xf32> to vector<8x256xf32>
    %c0_21 = arith.constant 0 : index
    %c0_22 = arith.constant 0 : index
    %c0_23 = arith.constant 0 : index
    %34 = vector.load %arg3[%c0_21, %c0_22, %c0_23] : memref<1x8x256xf32, #tpu.memory_space<vmem>>, vector<1x8x256xf32>
    %35 = vector.shape_cast %34 : vector<1x8x256xf32> to vector<8x256xf32>
    %36 = tpu.concatenate %33, %35 in 0 : vector<8x256xf32>, vector<8x256xf32> -> vector<16x256xf32>
    %c0_24 = arith.constant 0 : index
    %c0_25 = arith.constant 0 : index
    %37 = vector.load %arg11[%c0_24, %c0_25] : memref<16x16xf32, #tpu.memory_space<vmem>>, vector<16x16xf32>
    %cst_26 = arith.constant dense<0.000000e+00> : vector<16x256xf32>
    %38 = tpu.matmul %37, %36, %cst_26 {dimension_numbers = #tpu.dot_dimension_numbers<[1], [0], [0], [1], [0, 0, 1, 1], [], []>, precision = #tpu.contract_precision<fp32>} : vector<16x16xf32>, vector<16x256xf32>, vector<16x256xf32> -> vector<16x256xf32>
    %c0_27 = arith.constant 0 : index
    %c0_28 = arith.constant 0 : index
    %39 = vector.load %arg12[%c0_27, %c0_28] : memref<16x16xf32, #tpu.memory_space<vmem>>, vector<16x16xf32>
    %cst_29 = arith.constant dense<0.000000e+00> : vector<16x256xf32>
    %40 = tpu.matmul %39, %31, %cst_29 {dimension_numbers = #tpu.dot_dimension_numbers<[1], [0], [0], [1], [0, 0, 1, 1], [], []>, precision = #tpu.contract_precision<fp32>} : vector<16x16xf32>, vector<16x256xf32>, vector<16x256xf32> -> vector<16x256xf32>
    %41 = arith.addf %38, %40 : vector<16x256xf32>
    %c0_30 = arith.constant 0 : index
    %c0_31 = arith.constant 0 : index
    %42 = vector.load %arg13[%c0_30, %c0_31] : memref<16x1xf32, #tpu.memory_space<vmem>>, vector<16x1xf32>
    %43 = vector.broadcast %42 : vector<16x1xf32> to vector<16x256xf32>
    %44 = arith.addf %41, %43 : vector<16x256xf32>
    %45 = vector.extract_strided_slice %31 {offsets = [0, 0], sizes = [8, 256], strides = [1, 1]} : vector<16x256xf32> to vector<8x256xf32>
    %c0_32 = arith.constant 0 : index
    %c0_33 = arith.constant 0 : index
    %c0_34 = arith.constant 0 : index
    %46 = vector.load %arg14[%c0_32, %c0_33, %c0_34] : memref<1x8x256xf32, #tpu.memory_space<vmem>>, vector<1x8x256xf32>
    %47 = vector.shape_cast %46 : vector<1x8x256xf32> to vector<8x256xf32>
    %48 = vector.shape_cast %45 : vector<8x256xf32> to vector<1x8x256xf32>
    tpu.vector_store %arg14[%c0_32, %c0_33, %c0_34], %48 {strides = array<i32>} : memref<1x8x256xf32, #tpu.memory_space<vmem>>, vector<1x8x256xf32>,
    %49 = vector.extract_strided_slice %31 {offsets = [8, 0], sizes = [8, 256], strides = [1, 1]} : vector<16x256xf32> to vector<8x256xf32>
    %c0_35 = arith.constant 0 : index
    %c0_36 = arith.constant 0 : index
    %c0_37 = arith.constant 0 : index
    %50 = vector.load %arg15[%c0_35, %c0_36, %c0_37] : memref<1x8x256xf32, #tpu.memory_space<vmem>>, vector<1x8x256xf32>
    %51 = vector.shape_cast %50 : vector<1x8x256xf32> to vector<8x256xf32>
    %52 = vector.shape_cast %49 : vector<8x256xf32> to vector<1x8x256xf32>
    tpu.vector_store %arg15[%c0_35, %c0_36, %c0_37], %52 {strides = array<i32>} : memref<1x8x256xf32, #tpu.memory_space<vmem>>, vector<1x8x256xf32>,
    %53 = vector.extract_strided_slice %44 {offsets = [0, 0], sizes = [8, 256], strides = [1, 1]} : vector<16x256xf32> to vector<8x256xf32>
    %c0_38 = arith.constant 0 : index
    %c0_39 = arith.constant 0 : index
    %c0_40 = arith.constant 0 : index
    %54 = vector.load %arg16[%c0_38, %c0_39, %c0_40] : memref<1x8x256xf32, #tpu.memory_space<vmem>>, vector<1x8x256xf32>
    %55 = vector.shape_cast %54 : vector<1x8x256xf32> to vector<8x256xf32>
    %56 = vector.shape_cast %53 : vector<8x256xf32> to vector<1x8x256xf32>
    tpu.vector_store %arg16[%c0_38, %c0_39, %c0_40], %56 {strides = array<i32>} : memref<1x8x256xf32, #tpu.memory_space<vmem>>, vector<1x8x256xf32>,
    %57 = vector.extract_strided_slice %44 {offsets = [8, 0], sizes = [8, 256], strides = [1, 1]} : vector<16x256xf32> to vector<8x256xf32>
    %c0_41 = arith.constant 0 : index
    %c0_42 = arith.constant 0 : index
    %c0_43 = arith.constant 0 : index
    %58 = vector.load %arg17[%c0_41, %c0_42, %c0_43] : memref<1x8x256xf32, #tpu.memory_space<vmem>>, vector<1x8x256xf32>
    %59 = vector.shape_cast %58 : vector<1x8x256xf32> to vector<8x256xf32>
    %60 = vector.shape_cast %57 : vector<8x256xf32> to vector<1x8x256xf32>
    tpu.vector_store %arg17[%c0_41, %c0_42, %c0_43], %60 {strides = array<i32>} : memref<1x8x256xf32, #tpu.memory_space<vmem>>, vector<1x8x256xf32>,
    return
  }
  func.func @transform_0(%arg0: i32) -> (i32, i32, i32) {
    %c0_i32 = arith.constant 0 : i32
    %c0_i32_0 = arith.constant 0 : i32
    %c0_i32_1 = arith.constant 0 : i32
    return %arg0, %c0_i32, %c0_i32_0 : i32, i32, i32
  }
  func.func @transform_1(%arg0: i32) -> (i32, i32, i32) {
    %c0_i32 = arith.constant 0 : i32
    %c0_i32_0 = arith.constant 0 : i32
    %c0_i32_1 = arith.constant 0 : i32
    return %arg0, %c0_i32, %c0_i32_0 : i32, i32, i32
  }
  func.func @transform_2(%arg0: i32) -> (i32, i32, i32) {
    %c0_i32 = arith.constant 0 : i32
    %c0_i32_0 = arith.constant 0 : i32
    %c0_i32_1 = arith.constant 0 : i32
    return %arg0, %c0_i32, %c0_i32_0 : i32, i32, i32
  }
  func.func @transform_3(%arg0: i32) -> (i32, i32) {
    %c0_i32 = arith.constant 0 : i32
    %c0_i32_0 = arith.constant 0 : i32
    %c0_i32_1 = arith.constant 0 : i32
    return %c0_i32, %c0_i32_0 : i32, i32
  }
  func.func @transform_4(%arg0: i32) -> (i32, i32) {
    %c0_i32 = arith.constant 0 : i32
    %c0_i32_0 = arith.constant 0 : i32
    %c0_i32_1 = arith.constant 0 : i32
    return %c0_i32, %c0_i32_0 : i32, i32
  }
  func.func @transform_5(%arg0: i32) -> (i32, i32) {
    %c0_i32 = arith.constant 0 : i32
    %c0_i32_0 = arith.constant 0 : i32
    %c0_i32_1 = arith.constant 0 : i32
    return %c0_i32, %c0_i32_0 : i32, i32
  }
  func.func @transform_6(%arg0: i32) -> (i32, i32) {
    %c0_i32 = arith.constant 0 : i32
    %c0_i32_0 = arith.constant 0 : i32
    %c0_i32_1 = arith.constant 0 : i32
    return %c0_i32, %c0_i32_0 : i32, i32
  }
  func.func @transform_7(%arg0: i32) -> (i32, i32) {
    %c0_i32 = arith.constant 0 : i32
    %c0_i32_0 = arith.constant 0 : i32
    %c0_i32_1 = arith.constant 0 : i32
    return %c0_i32, %c0_i32_0 : i32, i32
  }
  func.func @transform_8(%arg0: i32) -> (i32, i32) {
    %c0_i32 = arith.constant 0 : i32
    %c0_i32_0 = arith.constant 0 : i32
    %c0_i32_1 = arith.constant 0 : i32
    return %c0_i32, %c0_i32_0 : i32, i32
  }
  func.func @transform_9(%arg0: i32) -> (i32, i32) {
    %c0_i32 = arith.constant 0 : i32
    %c0_i32_0 = arith.constant 0 : i32
    %c0_i32_1 = arith.constant 0 : i32
    return %c0_i32, %c0_i32_0 : i32, i32
  }
  func.func @transform_10(%arg0: i32) -> (i32, i32) {
    %c0_i32 = arith.constant 0 : i32
    %c0_i32_0 = arith.constant 0 : i32
    %c0_i32_1 = arith.constant 0 : i32
    return %c0_i32, %c0_i32_0 : i32, i32
  }
  func.func @transform_11(%arg0: i32) -> (i32, i32) {
    %c0_i32 = arith.constant 0 : i32
    %c0_i32_0 = arith.constant 0 : i32
    %c0_i32_1 = arith.constant 0 : i32
    return %c0_i32, %c0_i32_0 : i32, i32
  }
  func.func @transform_12(%arg0: i32) -> (i32, i32) {
    %c0_i32 = arith.constant 0 : i32
    %c0_i32_0 = arith.constant 0 : i32
    %c0_i32_1 = arith.constant 0 : i32
    return %c0_i32, %c0_i32_0 : i32, i32
  }
  func.func @transform_13(%arg0: i32) -> (i32, i32, i32) {
    %c0_i32 = arith.constant 0 : i32
    %c0_i32_0 = arith.constant 0 : i32
    %c0_i32_1 = arith.constant 0 : i32
    return %arg0, %c0_i32, %c0_i32_0 : i32, i32, i32
  }
  func.func @transform_14(%arg0: i32) -> (i32, i32, i32) {
    %c0_i32 = arith.constant 0 : i32
    %c0_i32_0 = arith.constant 0 : i32
    %c0_i32_1 = arith.constant 0 : i32
    return %arg0, %c0_i32, %c0_i32_0 : i32, i32, i32
  }
  func.func @transform_15(%arg0: i32) -> (i32, i32, i32) {
    %c0_i32 = arith.constant 0 : i32
    %c0_i32_0 = arith.constant 0 : i32
    %c0_i32_1 = arith.constant 0 : i32
    return %arg0, %c0_i32, %c0_i32_0 : i32, i32, i32
  }
  func.func @transform_16(%arg0: i32) -> (i32, i32, i32) {
    %c0_i32 = arith.constant 0 : i32
    %c0_i32_0 = arith.constant 0 : i32
    %c0_i32_1 = arith.constant 0 : i32
    return %arg0, %c0_i32, %c0_i32_0 : i32, i32, i32
  }
}

</mosaic_0001>

<llo_original>
// kernel: tpu_custom_call.1
$region0: #{tpu_custom_call.1}
  #allocation0 [shape = 'u32[]', space=smem, size = 0x4, offset = 0x4, fixed_abs, tag = 'smem constant byte address 0x4 - core index']
  #allocation1 [shape = 'u32[72,128]{1,0:T(1,128)}', space=vmem, size = 0x9000, scoped, tag = 'internal scratch']
  %s0 = inlined_call_operand.hbm [shape: f32[2,32,256], index: 0, kind: input, shape index: {}]
  %s1 = inlined_call_operand.vmem [shape: f32[2,8,256], index: 1, kind: input, shape index: {}]
  %s2 = inlined_call_operand.vmem [shape: f32[2,8,256], index: 2, kind: input, shape index: {}]
  %s3 = inlined_call_operand.hbm [shape: f32[144,256], index: 3, kind: input, shape index: {}]
  %s4 = inlined_call_operand.vmem [shape: f32[16,32], index: 4, kind: input, shape index: {}]
  %s5 = inlined_call_operand.vmem [shape: f32[16,1], index: 5, kind: input, shape index: {}]
  %s6 = inlined_call_operand.hbm [shape: f32[16,144], index: 6, kind: input, shape index: {}]
  %s7 = inlined_call_operand.vmem [shape: f32[16,1], index: 7, kind: input, shape index: {}]
  %s8 = inlined_call_operand.vmem [shape: f32[16,1], index: 8, kind: input, shape index: {}]
  %s9 = inlined_call_operand.vmem [shape: f32[16,1], index: 9, kind: input, shape index: {}]
  %s10 = inlined_call_operand.hbm [shape: f32[16,16], index: 10, kind: input, shape index: {}]
  %s11 = inlined_call_operand.hbm [shape: f32[16,16], index: 11, kind: input, shape index: {}]
  %s12 = inlined_call_operand.vmem [shape: f32[16,1], index: 12, kind: input, shape index: {}]
  %s13 = inlined_call_operand.hbm [shape: f32[2,8,256], index: 13, kind: output, shape index: {0}]
  %s14 = inlined_call_operand.hbm [shape: f32[2,8,256], index: 14, kind: output, shape index: {1}]
  %s15 = inlined_call_operand.hbm [shape: f32[2,8,256], index: 15, kind: output, shape index: {2}]
  %s16 = inlined_call_operand.hbm [shape: f32[2,8,256], index: 16, kind: output, shape index: {3}]
  %17 = xla_tuple %s13, %s14, %s15, %s16
  %s18 = sld [smem:[#allocation0]]
  $region129: #{tpu_custom_call.1} parent=0
    _
  %s20 = ssub.s32 1, %s18
  %s21 = scalar_select 0, %s20, %s18
  $region1: #{tpu_custom_call.1} parent=0
    #allocation2 [shape = 'u8[65536]{0}', space=vmem, size = 0x10000, scoped, tag = 'input window, operand 0']
    #allocation3 [shape = 's32[2]{0}', space=sflag, size = 0x8, scoped, tag = 'scoped memory for tpu_custom_call.1']
    #allocation4 [shape = 's32[2]{0}', space=sflag, size = 0x8, scoped, tag = 'scoped memory for tpu_custom_call.1']
    #allocation5 [shape = 'u8[147456]{0}', space=vmem, size = 0x24000, scoped, tag = 'input window, operand 3, single buffered']
    #allocation6 [shape = 's32[1]{0}', space=sflag, size = 0x4, scoped, tag = 'scoped memory for tpu_custom_call.1']
    #allocation7 [shape = 'u8[16384]{0}', space=vmem, size = 0x4000, scoped, tag = 'input window, operand 6, single buffered']
    #allocation8 [shape = 'u8[8192]{0}', space=vmem, size = 0x2000, scoped, tag = 'input window, operand 10, single buffered']
    #allocation9 [shape = 's32[1]{0}', space=sflag, size = 0x4, scoped, tag = 'scoped memory for tpu_custom_call.1']
    #allocation10 [shape = 'u8[8192]{0}', space=vmem, size = 0x2000, scoped, tag = 'input window, operand 11, single buffered']
    #allocation11 [shape = 'u8[16384]{0}', space=vmem, size = 0x4000, scoped, tag = 'output window, operand 0']
    #allocation12 [shape = 'u8[16384]{0}', space=vmem, size = 0x4000, scoped, tag = 'output window, operand 1']
    #allocation13 [shape = 's32[2]{0}', space=sflag, size = 0x8, scoped, tag = 'scoped memory for tpu_custom_call.1']
    #allocation14 [shape = 'u8[16384]{0}', space=vmem, size = 0x4000, scoped, tag = 'output window, operand 2']
    #allocation15 [shape = 'u8[16384]{0}', space=vmem, size = 0x4000, scoped, tag = 'output window, operand 3']
    #allocation16 [shape = 's32[2]{0}', space=sflag, size = 0x8, scoped, tag = 'scoped memory for tpu_custom_call.1']
    %22 = vsyncpa [#allocation3], 0
    %s23 = scalar_lea.sflag [#allocation3], 1
    %24 = vsyncpa %s23, 0
    %25 = vsyncpa [#allocation6], 0
    %26 = vsyncpa [#allocation9], 0
    %27 = vsyncpa [#allocation4], 0
    %s28 = scalar_lea.sflag [#allocation4], 1
    %29 = vsyncpa %s28, 0
    %30 = vsyncpa [#allocation13], 0
    %s31 = scalar_lea.sflag [#allocation13], 1
    %32 = vsyncpa %s31, 0
    %33 = vsyncpa [#allocation16], 0
    %s34 = scalar_lea.sflag [#allocation16], 1
    %35 = vsyncpa %s34, 0
    loop: start=0, step=1, limit=4
    $region2: #{tpu_custom_call.1} parent=1 // loop_pre_header
      _
    $region3: #{tpu_custom_call.1} parent=1 // loop_header
      %s37 = sphi 0, %s41
      %p38 = scmp.ge.s32.totalorder %s37, 4
      %s47 = sphi 0, %s49
      %s50 = sphi 0, %s47
      %s51 = sphi 0, %s50
      %s67 = sphi 0, %s51
      %s73 = sphi 0, %s75
      %s76 = sphi 0, %s73
      %s77 = sphi 0, %s76
      %s93 = sphi 0, %s77
      %s99 = sphi 0, %s101
      %s102 = sphi 0, %s99
      %s103 = sphi 0, %s102
      %s119 = sphi 0, %s103
      %s123 = sphi 0, %s123
      %s125 = sphi 0, %s123
      %s126 = sphi 0, %s125
      %s140 = sphi 0, %s126
      %s144 = sphi 0, %s144
      %s146 = sphi 0, %s144
      %s147 = sphi 0, %s146
      %s161 = sphi 0, %s147
      %s165 = sphi 0, %s165
      %s167 = sphi 0, %s165
      %s168 = sphi 0, %s167
      %s182 = sphi 0, %s168
      %s186 = sphi 0, %s186
      %s188 = sphi 0, %s186
      %s189 = sphi 0, %s188
      %s203 = sphi 0, %s189
      %s207 = sphi 0, %s207
      %s209 = sphi 0, %s207
      %s210 = sphi 0, %s209
      %s224 = sphi 0, %s210
      %s228 = sphi 0, %s228
      %s230 = sphi 0, %s228
      %s231 = sphi 0, %s230
      %s245 = sphi 0, %s231
      %s249 = sphi 0, %s249
      %s251 = sphi 0, %s249
      %s252 = sphi 0, %s251
      %s266 = sphi 0, %s252
      %s270 = sphi 0, %s270
      %s272 = sphi 0, %s270
      %s273 = sphi 0, %s272
      %s287 = sphi 0, %s273
      %s291 = sphi 0, %s291
      %s293 = sphi 0, %s291
      %s294 = sphi 0, %s293
      %s308 = sphi 0, %s294
      %s312 = sphi 0, %s312
      %s314 = sphi 0, %s312
      %s315 = sphi 0, %s314
      %s329 = sphi 0, %s315
      %s335 = sphi 0, %s337
      %s338 = sphi 0, %s335
      %s339 = sphi 0, %s338
      %s355 = sphi 0, %s339
      %s361 = sphi 0, %s363
      %s364 = sphi 0, %s361
      %s365 = sphi 0, %s364
      %s381 = sphi 0, %s365
      %s387 = sphi 0, %s389
      %s390 = sphi 0, %s387
      %s391 = sphi 0, %s390
      %s407 = sphi 0, %s391
      %s413 = sphi 0, %s415
      %s416 = sphi 0, %s413
      %s417 = sphi 0, %s416
      %s433 = sphi 0, %s417
    $region4: #{tpu_custom_call.1} parent=1 // loop_header_branch
      %40 = sbr.rel (%p38) target = $region8
    $region5: #{tpu_custom_call.1} parent=1 // loop_body
      %s42 = ssub.s32 %s37, 1
      %s43 = ssub.s32 %s37, 2
      %s44 = sadd.s32 %s37, 1
      %s45 = ssub.s32 %s37, %s44
      %p46 = scmp.eq.s32.totalorder %s45, 0
      %s48 = sadd.s32 %s47, 1
      %s49 = scalar_select %p46, %s47, %s48
      %p52 = pneg %p46
      %p53 = scmp.eq.s32.totalorder %s37, 1
      %p54 = por %p52, %p53
      %p55 = scmp.ne.s32.totalorder %s47, %s50
      %p56 = scmp.eq.s32.totalorder %s37, 0
      %p57 = por %p55, %p56
      %p58 = scmp.ne.s32.totalorder %s47, %s50
      %p59 = scmp.eq.s32.totalorder %s42, 1
      %p60 = por %p58, %p59
      %p61 = scmp.ne.s32.totalorder %s50, %s51
      %p62 = scmp.eq.s32.totalorder %s42, 0
      %p63 = por %p61, %p62
      %p64 = scmp.ne.s32.totalorder %s50, %s51
      %p65 = scmp.eq.s32.totalorder %s43, 1
      %p66 = por %p64, %p65
      %p68 = scmp.ne.s32.totalorder %s51, %s67
      %p69 = scmp.eq.s32.totalorder %s43, 0
      %p70 = por %p68, %p69
      %s71 = ssub.s32 %s37, %s44
      %p72 = scmp.eq.s32.totalorder %s71, 0
      %s74 = sadd.s32 %s73, 1
      %s75 = scalar_select %p72, %s73, %s74
      %p78 = pneg %p72
      %p79 = scmp.eq.s32.totalorder %s37, 1
      %p80 = por %p78, %p79
      %p81 = scmp.ne.s32.totalorder %s73, %s76
      %p82 = scmp.eq.s32.totalorder %s37, 0
      %p83 = por %p81, %p82
      %p84 = scmp.ne.s32.totalorder %s73, %s76
      %p85 = scmp.eq.s32.totalorder %s42, 1
      %p86 = por %p84, %p85
      %p87 = scmp.ne.s32.totalorder %s76, %s77
      %p88 = scmp.eq.s32.totalorder %s42, 0
      %p89 = por %p87, %p88
      %p90 = scmp.ne.s32.totalorder %s76, %s77
      %p91 = scmp.eq.s32.totalorder %s43, 1
      %p92 = por %p90, %p91
      %p94 = scmp.ne.s32.totalorder %s77, %s93
      %p95 = scmp.eq.s32.totalorder %s43, 0
      %p96 = por %p94, %p95
      %s97 = ssub.s32 %s37, %s44
      %p98 = scmp.eq.s32.totalorder %s97, 0
      %s100 = sadd.s32 %s99, 1
      %s101 = scalar_select %p98, %s99, %s100
      %p104 = pneg %p98
      %p105 = scmp.eq.s32.totalorder %s37, 1
      %p106 = por %p104, %p105
      %p107 = scmp.ne.s32.totalorder %s99, %s102
      %p108 = scmp.eq.s32.totalorder %s37, 0
      %p109 = por %p107, %p108
      %p110 = scmp.ne.s32.totalorder %s99, %s102
      %p111 = scmp.eq.s32.totalorder %s42, 1
      %p112 = por %p110, %p111
      %p113 = scmp.ne.s32.totalorder %s102, %s103
      %p114 = scmp.eq.s32.totalorder %s42, 0
      %p115 = por %p113, %p114
      %p116 = scmp.ne.s32.totalorder %s102, %s103
      %p117 = scmp.eq.s32.totalorder %s43, 1
      %p118 = por %p116, %p117
      %p120 = scmp.ne.s32.totalorder %s103, %s119
      %p121 = scmp.eq.s32.totalorder %s43, 0
      %p122 = por %p120, %p121
      %s124 = sadd.s32 %s123, 1
      %p127 = scmp.eq.s32.totalorder %s37, 1
      %p128 = scmp.ne.s32.totalorder %s123, %s125
      %p129 = scmp.eq.s32.totalorder %s37, 0
      %p130 = por %p128, %p129
      %p131 = scmp.ne.s32.totalorder %s123, %s125
      %p132 = scmp.eq.s32.totalorder %s42, 1
      %p133 = por %p131, %p132
      %p134 = scmp.ne.s32.totalorder %s125, %s126
      %p135 = scmp.eq.s32.totalorder %s42, 0
      %p136 = por %p134, %p135
      %p137 = scmp.ne.s32.totalorder %s125, %s126
      %p138 = scmp.eq.s32.totalorder %s43, 1
      %p139 = por %p137, %p138
      %p141 = scmp.ne.s32.totalorder %s126, %s140
      %p142 = scmp.eq.s32.totalorder %s43, 0
      %p143 = por %p141, %p142
      %s145 = sadd.s32 %s144, 1
      %p148 = scmp.eq.s32.totalorder %s37, 1
      %p149 = scmp.ne.s32.totalorder %s144, %s146
      %p150 = scmp.eq.s32.totalorder %s37, 0
      %p151 = por %p149, %p150
      %p152 = scmp.ne.s32.totalorder %s144, %s146
      %p153 = scmp.eq.s32.totalorder %s42, 1
      %p154 = por %p152, %p153
      %p155 = scmp.ne.s32.totalorder %s146, %s147
      %p156 = scmp.eq.s32.totalorder %s42, 0
      %p157 = por %p155, %p156
      %p158 = scmp.ne.s32.totalorder %s146, %s147
      %p159 = scmp.eq.s32.totalorder %s43, 1
      %p160 = por %p158, %p159
      %p162 = scmp.ne.s32.totalorder %s147, %s161
      %p163 = scmp.eq.s32.totalorder %s43, 0
      %p164 = por %p162, %p163
      %s166 = sadd.s32 %s165, 1
      %p169 = scmp.eq.s32.totalorder %s37, 1
      %p170 = scmp.ne.s32.totalorder %s165, %s167
      %p171 = scmp.eq.s32.totalorder %s37, 0
      %p172 = por %p170, %p171
      %p173 = scmp.ne.s32.totalorder %s165, %s167
      %p174 = scmp.eq.s32.totalorder %s42, 1
      %p175 = por %p173, %p174
      %p176 = scmp.ne.s32.totalorder %s167, %s168
      %p177 = scmp.eq.s32.totalorder %s42, 0
      %p178 = por %p176, %p177
      %p179 = scmp.ne.s32.totalorder %s167, %s168
      %p180 = scmp.eq.s32.totalorder %s43, 1
      %p181 = por %p179, %p180
      %p183 = scmp.ne.s32.totalorder %s168, %s182
      %p184 = scmp.eq.s32.totalorder %s43, 0
      %p185 = por %p183, %p184
      %s187 = sadd.s32 %s186, 1
      %p190 = scmp.eq.s32.totalorder %s37, 1
      %p191 = scmp.ne.s32.totalorder %s186, %s188
      %p192 = scmp.eq.s32.totalorder %s37, 0
      %p193 = por %p191, %p192
      %p194 = scmp.ne.s32.totalorder %s186, %s188
      %p195 = scmp.eq.s32.totalorder %s42, 1
      %p196 = por %p194, %p195
      %p197 = scmp.ne.s32.totalorder %s188, %s189
      %p198 = scmp.eq.s32.totalorder %s42, 0
      %p199 = por %p197, %p198
      %p200 = scmp.ne.s32.totalorder %s188, %s189
      %p201 = scmp.eq.s32.totalorder %s43, 1
      %p202 = por %p200, %p201
      %p204 = scmp.ne.s32.totalorder %s189, %s203
      %p205 = scmp.eq.s32.totalorder %s43, 0
      %p206 = por %p204, %p205
      %s208 = sadd.s32 %s207, 1
      %p211 = scmp.eq.s32.totalorder %s37, 1
      %p212 = scmp.ne.s32.totalorder %s207, %s209
      %p213 = scmp.eq.s32.totalorder %s37, 0
      %p214 = por %p212, %p213
      %p215 = scmp.ne.s32.totalorder %s207, %s209
      %p216 = scmp.eq.s32.totalorder %s42, 1
      %p217 = por %p215, %p216
      %p218 = scmp.ne.s32.totalorder %s209, %s210
      %p219 = scmp.eq.s32.totalorder %s42, 0
      %p220 = por %p218, %p219
      %p221 = scmp.ne.s32.totalorder %s209, %s210
      %p222 = scmp.eq.s32.totalorder %s43, 1
      %p223 = por %p221, %p222
      %p225 = scmp.ne.s32.totalorder %s210, %s224
      %p226 = scmp.eq.s32.totalorder %s43, 0
      %p227 = por %p225, %p226
      %s229 = sadd.s32 %s228, 1
      %p232 = scmp.eq.s32.totalorder %s37, 1
      %p233 = scmp.ne.s32.totalorder %s228, %s230
      %p234 = scmp.eq.s32.totalorder %s37, 0
      %p235 = por %p233, %p234
      %p236 = scmp.ne.s32.totalorder %s228, %s230
      %p237 = scmp.eq.s32.totalorder %s42, 1
      %p238 = por %p236, %p237
      %p239 = scmp.ne.s32.totalorder %s230, %s231
      %p240 = scmp.eq.s32.totalorder %s42, 0
      %p241 = por %p239, %p240
      %p242 = scmp.ne.s32.totalorder %s230, %s231
      %p243 = scmp.eq.s32.totalorder %s43, 1
      %p244 = por %p242, %p243
      %p246 = scmp.ne.s32.totalorder %s231, %s245
      %p247 = scmp.eq.s32.totalorder %s43, 0
      %p248 = por %p246, %p247
      %s250 = sadd.s32 %s249, 1
      %p253 = scmp.eq.s32.totalorder %s37, 1
      %p254 = scmp.ne.s32.totalorder %s249, %s251
      %p255 = scmp.eq.s32.totalorder %s37, 0
      %p256 = por %p254, %p255
      %p257 = scmp.ne.s32.totalorder %s249, %s251
      %p258 = scmp.eq.s32.totalorder %s42, 1
      %p259 = por %p257, %p258
      %p260 = scmp.ne.s32.totalorder %s251, %s252
      %p261 = scmp.eq.s32.totalorder %s42, 0
      %p262 = por %p260, %p261
      %p263 = scmp.ne.s32.totalorder %s251, %s252
      %p264 = scmp.eq.s32.totalorder %s43, 1
      %p265 = por %p263, %p264
      %p267 = scmp.ne.s32.totalorder %s252, %s266
      %p268 = scmp.eq.s32.totalorder %s43, 0
      %p269 = por %p267, %p268
      %s271 = sadd.s32 %s270, 1
      %p274 = scmp.eq.s32.totalorder %s37, 1
      %p275 = scmp.ne.s32.totalorder %s270, %s272
      %p276 = scmp.eq.s32.totalorder %s37, 0
      %p277 = por %p275, %p276
      %p278 = scmp.ne.s32.totalorder %s270, %s272
      %p279 = scmp.eq.s32.totalorder %s42, 1
      %p280 = por %p278, %p279
      %p281 = scmp.ne.s32.totalorder %s272, %s273
      %p282 = scmp.eq.s32.totalorder %s42, 0
      %p283 = por %p281, %p282
      %p284 = scmp.ne.s32.totalorder %s272, %s273
      %p285 = scmp.eq.s32.totalorder %s43, 1
      %p286 = por %p284, %p285
      %p288 = scmp.ne.s32.totalorder %s273, %s287
      %p289 = scmp.eq.s32.totalorder %s43, 0
      %p290 = por %p288, %p289
      %s292 = sadd.s32 %s291, 1
      %p295 = scmp.eq.s32.totalorder %s37, 1
      %p296 = scmp.ne.s32.totalorder %s291, %s293
      %p297 = scmp.eq.s32.totalorder %s37, 0
      %p298 = por %p296, %p297
      %p299 = scmp.ne.s32.totalorder %s291, %s293
      %p300 = scmp.eq.s32.totalorder %s42, 1
      %p301 = por %p299, %p300
      %p302 = scmp.ne.s32.totalorder %s293, %s294
      %p303 = scmp.eq.s32.totalorder %s42, 0
      %p304 = por %p302, %p303
      %p305 = scmp.ne.s32.totalorder %s293, %s294
      %p306 = scmp.eq.s32.totalorder %s43, 1
      %p307 = por %p305, %p306
      %p309 = scmp.ne.s32.totalorder %s294, %s308
      %p310 = scmp.eq.s32.totalorder %s43, 0
      %p311 = por %p309, %p310
      %s313 = sadd.s32 %s312, 1
      %p316 = scmp.eq.s32.totalorder %s37, 1
      %p317 = scmp.ne.s32.totalorder %s312, %s314
      %p318 = scmp.eq.s32.totalorder %s37, 0
      %p319 = por %p317, %p318
      %p320 = scmp.ne.s32.totalorder %s312, %s314
      %p321 = scmp.eq.s32.totalorder %s42, 1
      %p322 = por %p320, %p321
      %p323 = scmp.ne.s32.totalorder %s314, %s315
      %p324 = scmp.eq.s32.totalorder %s42, 0
      %p325 = por %p323, %p324
      %p326 = scmp.ne.s32.totalorder %s314, %s315
      %p327 = scmp.eq.s32.totalorder %s43, 1
      %p328 = por %p326, %p327
      %p330 = scmp.ne.s32.totalorder %s315, %s329
      %p331 = scmp.eq.s32.totalorder %s43, 0
      %p332 = por %p330, %p331
      %s333 = ssub.s32 %s37, %s44
      %p334 = scmp.eq.s32.totalorder %s333, 0
      %s336 = sadd.s32 %s335, 1
      %s337 = scalar_select %p334, %s335, %s336
      %p340 = pneg %p334
      %p341 = scmp.eq.s32.totalorder %s37, 1
      %p342 = por %p340, %p341
      %p343 = scmp.ne.s32.totalorder %s335, %s338
      %p344 = scmp.eq.s32.totalorder %s37, 0
      %p345 = por %p343, %p344
      %p346 = scmp.ne.s32.totalorder %s335, %s338
      %p347 = scmp.eq.s32.totalorder %s42, 1
      %p348 = por %p346, %p347
      %p349 = scmp.ne.s32.totalorder %s338, %s339
      %p350 = scmp.eq.s32.totalorder %s42, 0
      %p351 = por %p349, %p350
      %p352 = scmp.ne.s32.totalorder %s338, %s339
      %p353 = scmp.eq.s32.totalorder %s43, 1
      %p354 = por %p352, %p353
      %p356 = scmp.ne.s32.totalorder %s339, %s355
      %p357 = scmp.eq.s32.totalorder %s43, 0
      %p358 = por %p356, %p357
      %s359 = ssub.s32 %s37, %s44
      %p360 = scmp.eq.s32.totalorder %s359, 0
      %s362 = sadd.s32 %s361, 1
      %s363 = scalar_select %p360, %s361, %s362
      %p366 = pneg %p360
      %p367 = scmp.eq.s32.totalorder %s37, 1
      %p368 = por %p366, %p367
      %p369 = scmp.ne.s32.totalorder %s361, %s364
      %p370 = scmp.eq.s32.totalorder %s37, 0
      %p371 = por %p369, %p370
      %p372 = scmp.ne.s32.totalorder %s361, %s364
      %p373 = scmp.eq.s32.totalorder %s42, 1
      %p374 = por %p372, %p373
      %p375 = scmp.ne.s32.totalorder %s364, %s365
      %p376 = scmp.eq.s32.totalorder %s42, 0
      %p377 = por %p375, %p376
      %p378 = scmp.ne.s32.totalorder %s364, %s365
      %p379 = scmp.eq.s32.totalorder %s43, 1
      %p380 = por %p378, %p379
      %p382 = scmp.ne.s32.totalorder %s365, %s381
      %p383 = scmp.eq.s32.totalorder %s43, 0
      %p384 = por %p382, %p383
      %s385 = ssub.s32 %s37, %s44
      %p386 = scmp.eq.s32.totalorder %s385, 0
      %s388 = sadd.s32 %s387, 1
      %s389 = scalar_select %p386, %s387, %s388
      %p392 = pneg %p386
      %p393 = scmp.eq.s32.totalorder %s37, 1
      %p394 = por %p392, %p393
      %p395 = scmp.ne.s32.totalorder %s387, %s390
      %p396 = scmp.eq.s32.totalorder %s37, 0
      %p397 = por %p395, %p396
      %p398 = scmp.ne.s32.totalorder %s387, %s390
      %p399 = scmp.eq.s32.totalorder %s42, 1
      %p400 = por %p398, %p399
      %p401 = scmp.ne.s32.totalorder %s390, %s391
      %p402 = scmp.eq.s32.totalorder %s42, 0
      %p403 = por %p401, %p402
      %p404 = scmp.ne.s32.totalorder %s390, %s391
      %p405 = scmp.eq.s32.totalorder %s43, 1
      %p406 = por %p404, %p405
      %p408 = scmp.ne.s32.totalorder %s391, %s407
      %p409 = scmp.eq.s32.totalorder %s43, 0
      %p410 = por %p408, %p409
      %s411 = ssub.s32 %s37, %s44
      %p412 = scmp.eq.s32.totalorder %s411, 0
      %s414 = sadd.s32 %s413, 1
      %s415 = scalar_select %p412, %s413, %s414
      %p418 = pneg %p412
      %p419 = scmp.eq.s32.totalorder %s37, 1
      %p420 = por %p418, %p419
      %p421 = scmp.ne.s32.totalorder %s413, %s416
      %p422 = scmp.eq.s32.totalorder %s37, 0
      %p423 = por %p421, %p422
      %p424 = scmp.ne.s32.totalorder %s413, %s416
      %p425 = scmp.eq.s32.totalorder %s42, 1
      %p426 = por %p424, %p425
      %p427 = scmp.ne.s32.totalorder %s416, %s417
      %p428 = scmp.eq.s32.totalorder %s42, 0
      %p429 = por %p427, %p428
      %p430 = scmp.ne.s32.totalorder %s416, %s417
      %p431 = scmp.eq.s32.totalorder %s43, 1
      %p432 = por %p430, %p431
      %p434 = scmp.ne.s32.totalorder %s417, %s433
      %p435 = scmp.eq.s32.totalorder %s43, 0
      %p436 = por %p434, %p435
      %p437 = scmp.le.s32.totalorder 1, %s37
      %p438 = scmp.lt.s32.totalorder %s37, 3
      %p439 = pnand %p437, %p438
      %p440 = pneg %p439
      // Predicated region
      $region9: #{tpu_custom_call.1} parent=5 // pred_check
        _
      $region10: #{tpu_custom_call.1} parent=5 // pred_check_branch
        %442 = sbr.rel (%p439) target = $region12
      $region11: #{tpu_custom_call.1} parent=5 // pred_region
        %s443 = ssub.s32 %s37, 1
        // Predicated region
        $region13: #{tpu_custom_call.1} parent=11 // pred_check
          %p444 = pneg %p136
        $region14: #{tpu_custom_call.1} parent=11 // pred_check_branch
          %446 = sbr.rel (%p444) target = $region16
        $region15: #{tpu_custom_call.1} parent=11 // pred_region
          %448 = vsyncadd [#allocation6], 0
          %s449 = sshll.u32 %s3, 4
          %s450 = int_to_ptr.hbm [resolvable:$true] %s449
          %s451 = sshll.u32 [#allocation5], 4
          %s452 = int_to_ptr.vmem [resolvable:$true] %s451
          %457 = dma.hbm_to_vmem [thread:$0]  %s450, 4608, %s452, [#allocation6], 256, 256, 16
        $region16: #{tpu_custom_call.1} parent=11 // pred_fallthru
          _
        // Predicated region
        $region17: #{tpu_custom_call.1} parent=11 // pred_check
          %p458 = pneg %p157
        $region18: #{tpu_custom_call.1} parent=11 // pred_check_branch
          %460 = sbr.rel (%p458) target = $region20
        $region19: #{tpu_custom_call.1} parent=11 // pred_region
          _
        $region20: #{tpu_custom_call.1} parent=11 // pred_fallthru
          _
        // Predicated region
        $region21: #{tpu_custom_call.1} parent=11 // pred_check
          %p461 = pneg %p178
        $region22: #{tpu_custom_call.1} parent=11 // pred_check_branch
          %463 = sbr.rel (%p461) target = $region24
        $region23: #{tpu_custom_call.1} parent=11 // pred_region
          _
        $region24: #{tpu_custom_call.1} parent=11 // pred_fallthru
          _
        // Predicated region
        $region25: #{tpu_custom_call.1} parent=11 // pred_check
          %p464 = pneg %p199
        $region26: #{tpu_custom_call.1} parent=11 // pred_check_branch
          %466 = sbr.rel (%p464) target = $region28
        $region27: #{tpu_custom_call.1} parent=11 // pred_region
          %468 = vsyncadd [#allocation6], 0
          %s469 = sshll.u32 %s6, 4
          %s470 = int_to_ptr.hbm [resolvable:$true] %s469
          %s471 = sshll.u32 [#allocation7], 4
          %s472 = int_to_ptr.vmem [resolvable:$true] %s471
          %477 = dma.hbm_to_vmem [thread:$0]  %s470, 512, %s472, [#allocation6], 256, 256, 16
        $region28: #{tpu_custom_call.1} parent=11 // pred_fallthru
          _
        // Predicated region
        $region29: #{tpu_custom_call.1} parent=11 // pred_check
          %p478 = pneg %p220
        $region30: #{tpu_custom_call.1} parent=11 // pred_check_branch
          %480 = sbr.rel (%p478) target = $region32
        $region31: #{tpu_custom_call.1} parent=11 // pred_region
          _
        $region32: #{tpu_custom_call.1} parent=11 // pred_fallthru
          _
        // Predicated region
        $region33: #{tpu_custom_call.1} parent=11 // pred_check
          %p481 = pneg %p241
        $region34: #{tpu_custom_call.1} parent=11 // pred_check_branch
          %483 = sbr.rel (%p481) target = $region36
        $region35: #{tpu_custom_call.1} parent=11 // pred_region
          _
        $region36: #{tpu_custom_call.1} parent=11 // pred_fallthru
          _
        // Predicated region
        $region37: #{tpu_custom_call.1} parent=11 // pred_check
          %p484 = pneg %p262
        $region38: #{tpu_custom_call.1} parent=11 // pred_check_branch
          %486 = sbr.rel (%p484) target = $region40
        $region39: #{tpu_custom_call.1} parent=11 // pred_region
          _
        $region40: #{tpu_custom_call.1} parent=11 // pred_fallthru
          _
        // Predicated region
        $region41: #{tpu_custom_call.1} parent=11 // pred_check
          %p487 = pneg %p283
        $region42: #{tpu_custom_call.1} parent=11 // pred_check_branch
          %489 = sbr.rel (%p487) target = $region44
        $region43: #{tpu_custom_call.1} parent=11 // pred_region
          %491 = vsyncadd [#allocation9], 0
          %s492 = sshll.u32 %s10, 4
          %s493 = int_to_ptr.hbm [resolvable:$true] %s492
          %s494 = sshll.u32 [#allocation8], 4
          %s495 = int_to_ptr.vmem [resolvable:$true] %s494
          %500 = dma.hbm_to_vmem [thread:$0]  %s493, 256, %s495, [#allocation9], 128, 128, 8
        $region44: #{tpu_custom_call.1} parent=11 // pred_fallthru
          _
        // Predicated region
        $region45: #{tpu_custom_call.1} parent=11 // pred_check
          %p501 = pneg %p304
        $region46: #{tpu_custom_call.1} parent=11 // pred_check_branch
          %503 = sbr.rel (%p501) target = $region48
        $region47: #{tpu_custom_call.1} parent=11 // pred_region
          %505 = vsyncadd [#allocation9], 0
          %s506 = sshll.u32 %s11, 4
          %s507 = int_to_ptr.hbm [resolvable:$true] %s506
          %s508 = sshll.u32 [#allocation10], 4
          %s509 = int_to_ptr.vmem [resolvable:$true] %s508
          %514 = dma.hbm_to_vmem [thread:$0]  %s507, 256, %s509, [#allocation9], 128, 128, 8
        $region48: #{tpu_custom_call.1} parent=11 // pred_fallthru
          _
        // Predicated region
        $region49: #{tpu_custom_call.1} parent=11 // pred_check
          %p515 = pneg %p325
        $region50: #{tpu_custom_call.1} parent=11 // pred_check_branch
          %517 = sbr.rel (%p515) target = $region52
        $region51: #{tpu_custom_call.1} parent=11 // pred_region
          _
        $region52: #{tpu_custom_call.1} parent=11 // pred_fallthru
          _
      $region12: #{tpu_custom_call.1} parent=5 // pred_fallthru
        _
      %p518 = scmp.lt.s32.totalorder %s37, 2
      // Predicated region
      $region53: #{tpu_custom_call.1} parent=5 // pred_check
        %p519 = pneg %p518
      $region54: #{tpu_custom_call.1} parent=5 // pred_check_branch
        %521 = sbr.rel (%p519) target = $region56
      $region55: #{tpu_custom_call.1} parent=5 // pred_region
        // Predicated region
        $region57: #{tpu_custom_call.1} parent=55 // pred_check
          %p522 = pneg %p57
        $region58: #{tpu_custom_call.1} parent=55 // pred_check_branch
          %524 = sbr.rel (%p522) target = $region60
        $region59: #{tpu_custom_call.1} parent=55 // pred_region
          %s525 = sand.u32 %s47, 1
          %s526 = scalar_lea.sflag [#allocation3], %s525
          %s527 = sand.u32 %s47, 1
          %s528 = smul.addr %s527, 64
          %s529 = scalar_lea.vmem [#allocation2], %s528
          %531 = vsyncadd %s526, 0
          %s532 = smul.addr %s37, 8
          %s533 = smul.addr %s532, 8
          %s534 = scalar_lea.hbm %s0, %s533
          %s535 = sshll.u32 %s534, 4
          %s536 = int_to_ptr.hbm [resolvable:$true] %s535
          %s537 = sshll.u32 %s529, 4
          %s538 = int_to_ptr.vmem [resolvable:$true] %s537
          %543 = dma.hbm_to_vmem [thread:$0]  %s536, 1024, %s538, %s526, 256, 256, 16
        $region60: #{tpu_custom_call.1} parent=55 // pred_fallthru
          _
        // Predicated region
        $region61: #{tpu_custom_call.1} parent=55 // pred_check
          %p544 = pneg %p83
        $region62: #{tpu_custom_call.1} parent=55 // pred_check_branch
          %546 = sbr.rel (%p544) target = $region64
        $region63: #{tpu_custom_call.1} parent=55 // pred_region
          %p547 = scmp.lt.s32.totalorder %s37, 1
          %s548 = scalar_select %p547, %s37, 1
          %s549 = smul.addr %s548, 2
          %s550 = smul.addr %s549, 8
          %s551 = scalar_lea.vmem %s1, %s550
        $region64: #{tpu_custom_call.1} parent=55 // pred_fallthru
          _
        // Predicated region
        $region65: #{tpu_custom_call.1} parent=55 // pred_check
          %p552 = pneg %p109
        $region66: #{tpu_custom_call.1} parent=55 // pred_check_branch
          %554 = sbr.rel (%p552) target = $region68
        $region67: #{tpu_custom_call.1} parent=55 // pred_region
          %p555 = scmp.lt.s32.totalorder %s37, 1
          %s556 = scalar_select %p555, %s37, 1
          %s557 = smul.addr %s556, 2
          %s558 = smul.addr %s557, 8
          %s559 = scalar_lea.vmem %s2, %s558
        $region68: #{tpu_custom_call.1} parent=55 // pred_fallthru
          _
      $region56: #{tpu_custom_call.1} parent=5 // pred_fallthru
        _
      %p560 = scmp.le.s32.totalorder 1, %s37
      %p561 = scmp.lt.s32.totalorder %s37, 3
      %p562 = pnand %p560, %p561
      %p563 = pneg %p562
      // Predicated region
      $region69: #{tpu_custom_call.1} parent=5 // pred_check
        _
      $region70: #{tpu_custom_call.1} parent=5 // pred_check_branch
        %565 = sbr.rel (%p562) target = $region72
      $region71: #{tpu_custom_call.1} parent=5 // pred_region
        %s566 = ssub.s32 %s37, 1
        %s567 = sand.u32 %s50, 1
        %s568 = scalar_lea.sflag [#allocation3], %s567
        %s569 = sand.u32 %s50, 1
        %s570 = smul.addr %s569, 64
        %s571 = scalar_lea.vmem [#allocation2], %s570
        // Predicated region
        $region73: #{tpu_custom_call.1} parent=71 // pred_check
          %p572 = pneg %p63
        $region74: #{tpu_custom_call.1} parent=71 // pred_check_branch
          %574 = sbr.rel (%p572) target = $region76
        $region75: #{tpu_custom_call.1} parent=71 // pred_region
          %576 = dma.done %s568, 1024
        $region76: #{tpu_custom_call.1} parent=71 // pred_fallthru
          _
        // Predicated region
        $region77: #{tpu_custom_call.1} parent=71 // pred_check
          %p577 = pneg %p136
        $region78: #{tpu_custom_call.1} parent=71 // pred_check_branch
          %579 = sbr.rel (%p577) target = $region80
        $region79: #{tpu_custom_call.1} parent=71 // pred_region
          %581 = dma.done [#allocation6], 4608
        $region80: #{tpu_custom_call.1} parent=71 // pred_fallthru
          _
        // Predicated region
        $region81: #{tpu_custom_call.1} parent=71 // pred_check
          %p582 = pneg %p199
        $region82: #{tpu_custom_call.1} parent=71 // pred_check_branch
          %584 = sbr.rel (%p582) target = $region84
        $region83: #{tpu_custom_call.1} parent=71 // pred_region
          %586 = dma.done [#allocation6], 512
        $region84: #{tpu_custom_call.1} parent=71 // pred_fallthru
          _
        // Predicated region
        $region85: #{tpu_custom_call.1} parent=71 // pred_check
          %p587 = pneg %p283
        $region86: #{tpu_custom_call.1} parent=71 // pred_check_branch
          %589 = sbr.rel (%p587) target = $region88
        $region87: #{tpu_custom_call.1} parent=71 // pred_region
          %591 = dma.done [#allocation9], 256
        $region88: #{tpu_custom_call.1} parent=71 // pred_fallthru
          _
        // Predicated region
        $region89: #{tpu_custom_call.1} parent=71 // pred_check
          %p592 = pneg %p304
        $region90: #{tpu_custom_call.1} parent=71 // pred_check_branch
          %594 = sbr.rel (%p592) target = $region92
        $region91: #{tpu_custom_call.1} parent=71 // pred_region
          %596 = dma.done [#allocation9], 256
        $region92: #{tpu_custom_call.1} parent=71 // pred_fallthru
          _
        %s597 = sand.u32 %s50, 1
        %s598 = scalar_lea.sflag [#allocation3], %s597
        %s599 = sand.u32 %s50, 1
        %s600 = smul.addr %s599, 64
        %s601 = scalar_lea.vmem [#allocation2], %s600
        %p602 = pneg %p63
        %p603 = pneg %p60
        %p604 = scmp.lt.s32.totalorder %s42, 1
        %s605 = scalar_select %p604, %s42, 1
        %s606 = smul.addr %s605, 2
        %s607 = smul.addr %s606, 8
        %s608 = scalar_lea.vmem %s1, %s607
        %p609 = pneg %p89
        %p610 = pneg %p86
        %p611 = scmp.lt.s32.totalorder %s42, 1
        %s612 = scalar_select %p611, %s42, 1
        %s613 = smul.addr %s612, 2
        %s614 = smul.addr %s613, 8
        %s615 = scalar_lea.vmem %s2, %s614
        %p616 = pneg %p115
        %p617 = pneg %p112
        %p618 = pneg %p136
        %p619 = pneg %p133
        %p620 = pneg %p157
        %p621 = pneg %p154
        %p622 = pneg %p178
        %p623 = pneg %p175
        %p624 = pneg %p199
        %p625 = pneg %p196
        %p626 = pneg %p220
        %p627 = pneg %p217
        %p628 = pneg %p241
        %p629 = pneg %p238
        %p630 = pneg %p262
        %p631 = pneg %p259
        %p632 = pneg %p283
        %p633 = pneg %p280
        %p634 = pneg %p304
        %p635 = pneg %p301
        %p636 = pneg %p325
        %p637 = pneg %p322
        %p638 = pneg %p351
        %p639 = pneg %p348
        %s640 = sand.u32 %s338, 1
        %s641 = scalar_lea.sflag [#allocation4], %s640
        %s642 = sand.u32 %s338, 1
        %s643 = smul.addr %s642, 16
        %s644 = scalar_lea.vmem [#allocation11], %s643
        %p645 = pneg %p377
        %p646 = pneg %p374
        %s647 = sand.u32 %s42, 1
        %s648 = scalar_lea.sflag [#allocation13], %s647
        %s649 = sand.u32 %s364, 1
        %s650 = smul.addr %s649, 16
        %s651 = scalar_lea.vmem [#allocation12], %s650
        %p652 = pneg %p403
        %p653 = pneg %p400
        %s654 = sand.u32 %s42, 1
        %s655 = scalar_lea.sflag [#allocation13], %s654
        %s656 = sand.u32 %s390, 1
        %s657 = smul.addr %s656, 16
        %s658 = scalar_lea.vmem [#allocation14], %s657
        %p659 = pneg %p429
        %p660 = pneg %p426
        %s661 = sand.u32 %s416, 1
        %s662 = scalar_lea.sflag [#allocation16], %s661
        %s663 = sand.u32 %s416, 1
        %s664 = smul.addr %s663, 16
        %s665 = scalar_lea.vmem [#allocation15], %s664
        %p666 = scmp.lt.s32.totalorder %s42, 1
        %s667 = scalar_select %p666, %s42, 1
        %s668 = smul.addr %s667, 2
        %s669 = smul.addr %s668, 8
        %s670 = scalar_lea.vmem %s1, %s669
        %p671 = scmp.lt.s32.totalorder %s42, 1
        %s672 = scalar_select %p671, %s42, 1
        %s673 = smul.addr %s672, 2
        %s674 = smul.addr %s673, 8
        %s675 = scalar_lea.vmem %s2, %s674
        %v676 = vld [vmem:[%s571] sm:$0xff]
        %v677 = vld [vmem:[%s571 + $0x8] sm:$0xff]
        %v678 = vld [vmem:[%s571 + $0x10] sm:$0xff]
        %v679 = vld [vmem:[%s571 + $0x18] sm:$0xff]
        %v680 = vld [vmem:[%s571 + $0x20] sm:$0xff]
        %v681 = vld [vmem:[%s571 + $0x28] sm:$0xff]
        %v682 = vld [vmem:[%s571 + $0x30] sm:$0xff]
        %v683 = vld [vmem:[%s571 + $0x38] sm:$0xff]
        %v684 = vld [vmem:[%s4] sm:$0xff]
        %v685 = vld [vmem:[%s4 + $0x8] sm:$0xff]
        %v686 = vld [vmem:[%s5] sm:$0xff]
        %v687 = vld [vmem:[%s5 + $0x8] sm:$0xff]
        %689 = vset.pattern.permute.xlu0 0
        %690 = vperm.xlu0 %689, %v686
        %v691 = vpop.permute.xlu0 %690
        %694 = vset.pattern.permute.xlu0 0
        %695 = vperm.xlu0 %694, %v687
        %v696 = vpop.permute.xlu0 %695
        %vm698 = vcmask 261120
        %v700 = vsel %vm698, %v684, 0
        %v703 = vsel %vm698, %v685, 0
        %705 = vmatpush.msra.mxu0 0.0
        %706 = vmatpush.msra.mxu0 0.0
        %707 = vmatpush.msra.mxu0 0.0
        %708 = vmatpush.msra.mxu0 0.0
        %709 = vmatpush.msra.mxu0 0.0
        %710 = vmatpush.msra.mxu0 0.0
        %711 = vmatpush.msra.mxu0 0.0
        %712 = vmatpush.msra.mxu0 0.0
        %713 = vmatpush.msra.mxu0 0.0
        %714 = vmatpush.msra.mxu0 0.0
        %715 = vmatpush.msra.mxu0 0.0
        %716 = vmatpush.msra.mxu0 0.0
        %v717 = vand.u32 %v682, 4294901760
        %718 = vmatpush.msra.mxu0 %v717
        %v719 = vand.u32 %v680, 4294901760
        %720 = vmatpush.msra.mxu0 %v719
        %v721 = vand.u32 %v678, 4294901760
        %722 = vmatpush.msra.mxu0 %v721
        %v723 = vand.u32 %v676, 4294901760
        %724 = vmatpush.msra.mxu0 %v723
        %v725 = vand.u32 %v700, 4294901760
        %v726 = vsub.f32 %v700, %v725
        %v727 = vand.u32 %v726, 4294901760
        %v728 = vsub.f32 %v726, %v727
        %v729 = vand.u32 %v728, 4294901760
        %730 = vmatmul.f32.gmra.mxu0 %v729
        %v731 = vpop.f32.mrf.mxu0
        %v732 = vadd.f32 %v691, %v731
        %v733 = vand.u32 %v703, 4294901760
        %v734 = vsub.f32 %v703, %v733
        %v735 = vand.u32 %v734, 4294901760
        %v736 = vsub.f32 %v734, %v735
        %v737 = vand.u32 %v736, 4294901760
        %738 = vmatmul.f32.gmra.mxu0 %v737
        %v739 = vpop.f32.mrf.mxu0
        %v740 = vadd.f32 %v696, %v739
        %741 = vdwg.mxu0
        %742 = vmatpush.msra.mxu0 0.0
        %743 = vmatpush.msra.mxu0 0.0
        %744 = vmatpush.msra.mxu0 0.0
        %745 = vmatpush.msra.mxu0 0.0
        %746 = vmatpush.msra.mxu0 0.0
        %747 = vmatpush.msra.mxu0 0.0
        %748 = vmatpush.msra.mxu0 0.0
        %749 = vmatpush.msra.mxu0 0.0
        %750 = vmatpush.msra.mxu0 0.0
        %751 = vmatpush.msra.mxu0 0.0
        %752 = vmatpush.msra.mxu0 0.0
        %753 = vmatpush.msra.mxu0 0.0
        %v754 = vand.u32 %v682, 4294901760
        %v755 = vsub.f32 %v682, %v754
        %v756 = vand.u32 %v755, 4294901760
        %v757 = vsub.f32 %v755, %v756
        %v758 = vand.u32 %v757, 4294901760
        %759 = vmatpush.msra.mxu0 %v758
        %v760 = vand.u32 %v680, 4294901760
        %v761 = vsub.f32 %v680, %v760
        %v762 = vand.u32 %v761, 4294901760
        %v763 = vsub.f32 %v761, %v762
        %v764 = vand.u32 %v763, 4294901760
        %765 = vmatpush.msra.mxu0 %v764
        %v766 = vand.u32 %v678, 4294901760
        %v767 = vsub.f32 %v678, %v766
        %v768 = vand.u32 %v767, 4294901760
        %v769 = vsub.f32 %v767, %v768
        %v770 = vand.u32 %v769, 4294901760
        %771 = vmatpush.msra.mxu0 %v770
        %v772 = vand.u32 %v676, 4294901760
        %v773 = vsub.f32 %v676, %v772
        %v774 = vand.u32 %v773, 4294901760
        %v775 = vsub.f32 %v773, %v774
        %v776 = vand.u32 %v775, 4294901760
        %777 = vmatpush.msra.mxu0 %v776
        %v778 = vand.u32 %v700, 4294901760
        %779 = vmatmul.f32.gmra.mxu0 %v778
        %v780 = vpop.f32.mrf.mxu0
        %v781 = vadd.f32 %v732, %v780
        %v782 = vand.u32 %v703, 4294901760
        %783 = vmatmul.f32.gmra.mxu0 %v782
        %v784 = vpop.f32.mrf.mxu0
        %v785 = vadd.f32 %v740, %v784
        %786 = vdwg.mxu0
        %787 = vmatpush.msra.mxu0 0.0
        %788 = vmatpush.msra.mxu0 0.0
        %789 = vmatpush.msra.mxu0 0.0
        %790 = vmatpush.msra.mxu0 0.0
        %791 = vmatpush.msra.mxu0 0.0
        %792 = vmatpush.msra.mxu0 0.0
        %793 = vmatpush.msra.mxu0 0.0
        %794 = vmatpush.msra.mxu0 0.0
        %795 = vmatpush.msra.mxu0 0.0
        %796 = vmatpush.msra.mxu0 0.0
        %797 = vmatpush.msra.mxu0 0.0
        %798 = vmatpush.msra.mxu0 0.0
        %v799 = vand.u32 %v682, 4294901760
        %v800 = vsub.f32 %v682, %v799
        %801 = vmatpush.msra.mxu0 %v800
        %v802 = vand.u32 %v680, 4294901760
        %v803 = vsub.f32 %v680, %v802
        %804 = vmatpush.msra.mxu0 %v803
        %v805 = vand.u32 %v678, 4294901760
        %v806 = vsub.f32 %v678, %v805
        %807 = vmatpush.msra.mxu0 %v806
        %v808 = vand.u32 %v676, 4294901760
        %v809 = vsub.f32 %v676, %v808
        %810 = vmatpush.msra.mxu0 %v809
        %v811 = vand.u32 %v700, 4294901760
        %v812 = vsub.f32 %v700, %v811
        %813 = vmatmul.f32.gmra.mxu0 %v812
        %v814 = vpop.f32.mrf.mxu0
        %v815 = vadd.f32 %v781, %v814
        %v816 = vand.u32 %v703, 4294901760
        %v817 = vsub.f32 %v703, %v816
        %818 = vmatmul.f32.gmra.mxu0 %v817
        %v819 = vpop.f32.mrf.mxu0
        %v820 = vadd.f32 %v785, %v819
        %821 = vdwg.mxu0
        %822 = vmatpush.msra.mxu0 0.0
        %823 = vmatpush.msra.mxu0 0.0
        %824 = vmatpush.msra.mxu0 0.0
        %825 = vmatpush.msra.mxu0 0.0
        %826 = vmatpush.msra.mxu0 0.0
        %827 = vmatpush.msra.mxu0 0.0
        %828 = vmatpush.msra.mxu0 0.0
        %829 = vmatpush.msra.mxu0 0.0
        %830 = vmatpush.msra.mxu0 0.0
        %831 = vmatpush.msra.mxu0 0.0
        %832 = vmatpush.msra.mxu0 0.0
        %833 = vmatpush.msra.mxu0 0.0
        %v834 = vand.u32 %v682, 4294901760
        %835 = vmatpush.msra.mxu0 %v834
        %v836 = vand.u32 %v680, 4294901760
        %837 = vmatpush.msra.mxu0 %v836
        %v838 = vand.u32 %v678, 4294901760
        %839 = vmatpush.msra.mxu0 %v838
        %v840 = vand.u32 %v676, 4294901760
        %841 = vmatpush.msra.mxu0 %v840
        %v842 = vand.u32 %v700, 4294901760
        %v843 = vsub.f32 %v700, %v842
        %v844 = vand.u32 %v843, 4294901760
        %845 = vmatmul.f32.gmra.mxu0 %v844
        %v846 = vpop.f32.mrf.mxu0
        %v847 = vadd.f32 %v815, %v846
        %v848 = vand.u32 %v703, 4294901760
        %v849 = vsub.f32 %v703, %v848
        %v850 = vand.u32 %v849, 4294901760
        %851 = vmatmul.f32.gmra.mxu0 %v850
        %v852 = vpop.f32.mrf.mxu0
        %v853 = vadd.f32 %v820, %v852
        %854 = vdwg.mxu0
        %855 = vmatpush.msra.mxu0 0.0
        %856 = vmatpush.msra.mxu0 0.0
        %857 = vmatpush.msra.mxu0 0.0
        %858 = vmatpush.msra.mxu0 0.0
        %859 = vmatpush.msra.mxu0 0.0
        %860 = vmatpush.msra.mxu0 0.0
        %861 = vmatpush.msra.mxu0 0.0
        %862 = vmatpush.msra.mxu0 0.0
        %863 = vmatpush.msra.mxu0 0.0
        %864 = vmatpush.msra.mxu0 0.0
        %865 = vmatpush.msra.mxu0 0.0
        %866 = vmatpush.msra.mxu0 0.0
        %v867 = vand.u32 %v682, 4294901760
        %v868 = vsub.f32 %v682, %v867
        %v869 = vand.u32 %v868, 4294901760
        %870 = vmatpush.msra.mxu0 %v869
        %v871 = vand.u32 %v680, 4294901760
        %v872 = vsub.f32 %v680, %v871
        %v873 = vand.u32 %v872, 4294901760
        %874 = vmatpush.msra.mxu0 %v873
        %v875 = vand.u32 %v678, 4294901760
        %v876 = vsub.f32 %v678, %v875
        %v877 = vand.u32 %v876, 4294901760
        %878 = vmatpush.msra.mxu0 %v877
        %v879 = vand.u32 %v676, 4294901760
        %v880 = vsub.f32 %v676, %v879
        %v881 = vand.u32 %v880, 4294901760
        %882 = vmatpush.msra.mxu0 %v881
        %v883 = vand.u32 %v700, 4294901760
        %884 = vmatmul.f32.gmra.mxu0 %v883
        %v885 = vpop.f32.mrf.mxu0
        %v886 = vadd.f32 %v847, %v885
        %v887 = vand.u32 %v703, 4294901760
        %888 = vmatmul.f32.gmra.mxu0 %v887
        %v889 = vpop.f32.mrf.mxu0
        %v890 = vadd.f32 %v853, %v889
        %891 = vdwg.mxu0
        %892 = vmatpush.msra.mxu0 0.0
        %893 = vmatpush.msra.mxu0 0.0
        %894 = vmatpush.msra.mxu0 0.0
        %895 = vmatpush.msra.mxu0 0.0
        %896 = vmatpush.msra.mxu0 0.0
        %897 = vmatpush.msra.mxu0 0.0
        %898 = vmatpush.msra.mxu0 0.0
        %899 = vmatpush.msra.mxu0 0.0
        %900 = vmatpush.msra.mxu0 0.0
        %901 = vmatpush.msra.mxu0 0.0
        %902 = vmatpush.msra.mxu0 0.0
        %903 = vmatpush.msra.mxu0 0.0
        %v904 = vand.u32 %v682, 4294901760
        %905 = vmatpush.msra.mxu0 %v904
        %v906 = vand.u32 %v680, 4294901760
        %907 = vmatpush.msra.mxu0 %v906
        %v908 = vand.u32 %v678, 4294901760
        %909 = vmatpush.msra.mxu0 %v908
        %v910 = vand.u32 %v676, 4294901760
        %911 = vmatpush.msra.mxu0 %v910
        %v912 = vand.u32 %v700, 4294901760
        %913 = vmatmul.f32.gmra.mxu0 %v912
        %v914 = vpop.f32.mrf.mxu0
        %v915 = vadd.f32 %v886, %v914
        %v916 = vand.u32 %v703, 4294901760
        %917 = vmatmul.f32.gmra.mxu0 %v916
        %v918 = vpop.f32.mrf.mxu0
        %v919 = vadd.f32 %v890, %v918
        %920 = vdwg.mxu0
        %921 = vmatpush.msra.mxu0 0.0
        %922 = vmatpush.msra.mxu0 0.0
        %923 = vmatpush.msra.mxu0 0.0
        %924 = vmatpush.msra.mxu0 0.0
        %925 = vmatpush.msra.mxu0 0.0
        %926 = vmatpush.msra.mxu0 0.0
        %927 = vmatpush.msra.mxu0 0.0
        %928 = vmatpush.msra.mxu0 0.0
        %929 = vmatpush.msra.mxu0 0.0
        %930 = vmatpush.msra.mxu0 0.0
        %931 = vmatpush.msra.mxu0 0.0
        %932 = vmatpush.msra.mxu0 0.0
        %v933 = vand.u32 %v683, 4294901760
        %934 = vmatpush.msra.mxu0 %v933
        %v935 = vand.u32 %v681, 4294901760
        %936 = vmatpush.msra.mxu0 %v935
        %v937 = vand.u32 %v679, 4294901760
        %938 = vmatpush.msra.mxu0 %v937
        %v939 = vand.u32 %v677, 4294901760
        %940 = vmatpush.msra.mxu0 %v939
        %v941 = vand.u32 %v700, 4294901760
        %v942 = vsub.f32 %v700, %v941
        %v943 = vand.u32 %v942, 4294901760
        %v944 = vsub.f32 %v942, %v943
        %v945 = vand.u32 %v944, 4294901760
        %946 = vmatmul.f32.gmra.mxu0 %v945
        %v947 = vpop.f32.mrf.mxu0
        %v948 = vadd.f32 %v691, %v947
        %v949 = vand.u32 %v703, 4294901760
        %v950 = vsub.f32 %v703, %v949
        %v951 = vand.u32 %v950, 4294901760
        %v952 = vsub.f32 %v950, %v951
        %v953 = vand.u32 %v952, 4294901760
        %954 = vmatmul.f32.gmra.mxu0 %v953
        %v955 = vpop.f32.mrf.mxu0
        %v956 = vadd.f32 %v696, %v955
        %957 = vdwg.mxu0
        %958 = vmatpush.msra.mxu0 0.0
        %959 = vmatpush.msra.mxu0 0.0
        %960 = vmatpush.msra.mxu0 0.0
        %961 = vmatpush.msra.mxu0 0.0
        %962 = vmatpush.msra.mxu0 0.0
        %963 = vmatpush.msra.mxu0 0.0
        %964 = vmatpush.msra.mxu0 0.0
        %965 = vmatpush.msra.mxu0 0.0
        %966 = vmatpush.msra.mxu0 0.0
        %967 = vmatpush.msra.mxu0 0.0
        %968 = vmatpush.msra.mxu0 0.0
        %969 = vmatpush.msra.mxu0 0.0
        %v970 = vand.u32 %v683, 4294901760
        %v971 = vsub.f32 %v683, %v970
        %v972 = vand.u32 %v971, 4294901760
        %v973 = vsub.f32 %v971, %v972
        %v974 = vand.u32 %v973, 4294901760
        %975 = vmatpush.msra.mxu0 %v974
        %v976 = vand.u32 %v681, 4294901760
        %v977 = vsub.f32 %v681, %v976
        %v978 = vand.u32 %v977, 4294901760
        %v979 = vsub.f32 %v977, %v978
        %v980 = vand.u32 %v979, 4294901760
        %981 = vmatpush.msra.mxu0 %v980
        %v982 = vand.u32 %v679, 4294901760
        %v983 = vsub.f32 %v679, %v982
        %v984 = vand.u32 %v983, 4294901760
        %v985 = vsub.f32 %v983, %v984
        %v986 = vand.u32 %v985, 4294901760
        %987 = vmatpush.msra.mxu0 %v986
        %v988 = vand.u32 %v677, 4294901760
        %v989 = vsub.f32 %v677, %v988
        %v990 = vand.u32 %v989, 4294901760
        %v991 = vsub.f32 %v989, %v990
        %v992 = vand.u32 %v991, 4294901760
        %993 = vmatpush.msra.mxu0 %v992
        %v994 = vand.u32 %v700, 4294901760
        %995 = vmatmul.f32.gmra.mxu0 %v994
        %v996 = vpop.f32.mrf.mxu0
        %v997 = vadd.f32 %v948, %v996
        %v998 = vand.u32 %v703, 4294901760
        %999 = vmatmul.f32.gmra.mxu0 %v998
        %v1000 = vpop.f32.mrf.mxu0
        %v1001 = vadd.f32 %v956, %v1000
        %1002 = vdwg.mxu0
        %1003 = vmatpush.msra.mxu0 0.0
        %1004 = vmatpush.msra.mxu0 0.0
        %1005 = vmatpush.msra.mxu0 0.0
        %1006 = vmatpush.msra.mxu0 0.0
        %1007 = vmatpush.msra.mxu0 0.0
        %1008 = vmatpush.msra.mxu0 0.0
        %1009 = vmatpush.msra.mxu0 0.0
        %1010 = vmatpush.msra.mxu0 0.0
        %1011 = vmatpush.msra.mxu0 0.0
        %1012 = vmatpush.msra.mxu0 0.0
        %1013 = vmatpush.msra.mxu0 0.0
        %1014 = vmatpush.msra.mxu0 0.0
        %v1015 = vand.u32 %v683, 4294901760
        %v1016 = vsub.f32 %v683, %v1015
        %1017 = vmatpush.msra.mxu0 %v1016
        %v1018 = vand.u32 %v681, 4294901760
        %v1019 = vsub.f32 %v681, %v1018
        %1020 = vmatpush.msra.mxu0 %v1019
        %v1021 = vand.u32 %v679, 4294901760
        %v1022 = vsub.f32 %v679, %v1021
        %1023 = vmatpush.msra.mxu0 %v1022
        %v1024 = vand.u32 %v677, 4294901760
        %v1025 = vsub.f32 %v677, %v1024
        %1026 = vmatpush.msra.mxu0 %v1025
        %v1027 = vand.u32 %v700, 4294901760
        %v1028 = vsub.f32 %v700, %v1027
        %1029 = vmatmul.f32.gmra.mxu0 %v1028
        %v1030 = vpop.f32.mrf.mxu0
        %v1031 = vadd.f32 %v997, %v1030
        %v1032 = vand.u32 %v703, 4294901760
        %v1033 = vsub.f32 %v703, %v1032
        %1034 = vmatmul.f32.gmra.mxu0 %v1033
        %v1035 = vpop.f32.mrf.mxu0
        %v1036 = vadd.f32 %v1001, %v1035
        %1037 = vdwg.mxu0
        %1038 = vmatpush.msra.mxu0 0.0
        %1039 = vmatpush.msra.mxu0 0.0
        %1040 = vmatpush.msra.mxu0 0.0
        %1041 = vmatpush.msra.mxu0 0.0
        %1042 = vmatpush.msra.mxu0 0.0
        %1043 = vmatpush.msra.mxu0 0.0
        %1044 = vmatpush.msra.mxu0 0.0
        %1045 = vmatpush.msra.mxu0 0.0
        %1046 = vmatpush.msra.mxu0 0.0
        %1047 = vmatpush.msra.mxu0 0.0
        %1048 = vmatpush.msra.mxu0 0.0
        %1049 = vmatpush.msra.mxu0 0.0
        %v1050 = vand.u32 %v683, 4294901760
        %1051 = vmatpush.msra.mxu0 %v1050
        %v1052 = vand.u32 %v681, 4294901760
        %1053 = vmatpush.msra.mxu0 %v1052
        %v1054 = vand.u32 %v679, 4294901760
        %1055 = vmatpush.msra.mxu0 %v1054
        %v1056 = vand.u32 %v677, 4294901760
        %1057 = vmatpush.msra.mxu0 %v1056
        %v1058 = vand.u32 %v700, 4294901760
        %v1059 = vsub.f32 %v700, %v1058
        %v1060 = vand.u32 %v1059, 4294901760
        %1061 = vmatmul.f32.gmra.mxu0 %v1060
        %v1062 = vpop.f32.mrf.mxu0
        %v1063 = vadd.f32 %v1031, %v1062
        %v1064 = vand.u32 %v703, 4294901760
        %v1065 = vsub.f32 %v703, %v1064
        %v1066 = vand.u32 %v1065, 4294901760
        %1067 = vmatmul.f32.gmra.mxu0 %v1066
        %v1068 = vpop.f32.mrf.mxu0
        %v1069 = vadd.f32 %v1036, %v1068
        %1070 = vdwg.mxu0
        %1071 = vmatpush.msra.mxu0 0.0
        %1072 = vmatpush.msra.mxu0 0.0
        %1073 = vmatpush.msra.mxu0 0.0
        %1074 = vmatpush.msra.mxu0 0.0
        %1075 = vmatpush.msra.mxu0 0.0
        %1076 = vmatpush.msra.mxu0 0.0
        %1077 = vmatpush.msra.mxu0 0.0
        %1078 = vmatpush.msra.mxu0 0.0
        %1079 = vmatpush.msra.mxu0 0.0
        %1080 = vmatpush.msra.mxu0 0.0
        %1081 = vmatpush.msra.mxu0 0.0
        %1082 = vmatpush.msra.mxu0 0.0
        %v1083 = vand.u32 %v683, 4294901760
        %v1084 = vsub.f32 %v683, %v1083
        %v1085 = vand.u32 %v1084, 4294901760
        %1086 = vmatpush.msra.mxu0 %v1085
        %v1087 = vand.u32 %v681, 4294901760
        %v1088 = vsub.f32 %v681, %v1087
        %v1089 = vand.u32 %v1088, 4294901760
        %1090 = vmatpush.msra.mxu0 %v1089
        %v1091 = vand.u32 %v679, 4294901760
        %v1092 = vsub.f32 %v679, %v1091
        %v1093 = vand.u32 %v1092, 4294901760
        %1094 = vmatpush.msra.mxu0 %v1093
        %v1095 = vand.u32 %v677, 4294901760
        %v1096 = vsub.f32 %v677, %v1095
        %v1097 = vand.u32 %v1096, 4294901760
        %1098 = vmatpush.msra.mxu0 %v1097
        %v1099 = vand.u32 %v700, 4294901760
        %1100 = vmatmul.f32.gmra.mxu0 %v1099
        %v1101 = vpop.f32.mrf.mxu0
        %v1102 = vadd.f32 %v1063, %v1101
        %v1103 = vand.u32 %v703, 4294901760
        %1104 = vmatmul.f32.gmra.mxu0 %v1103
        %v1105 = vpop.f32.mrf.mxu0
        %v1106 = vadd.f32 %v1069, %v1105
        %1107 = vdwg.mxu0
        %1108 = vmatpush.msra.mxu0 0.0
        %1109 = vmatpush.msra.mxu0 0.0
        %1110 = vmatpush.msra.mxu0 0.0
        %1111 = vmatpush.msra.mxu0 0.0
        %1112 = vmatpush.msra.mxu0 0.0
        %1113 = vmatpush.msra.mxu0 0.0
        %1114 = vmatpush.msra.mxu0 0.0
        %1115 = vmatpush.msra.mxu0 0.0
        %1116 = vmatpush.msra.mxu0 0.0
        %1117 = vmatpush.msra.mxu0 0.0
        %1118 = vmatpush.msra.mxu0 0.0
        %1119 = vmatpush.msra.mxu0 0.0
        %v1120 = vand.u32 %v683, 4294901760
        %1121 = vmatpush.msra.mxu0 %v1120
        %v1122 = vand.u32 %v681, 4294901760
        %1123 = vmatpush.msra.mxu0 %v1122
        %v1124 = vand.u32 %v679, 4294901760
        %1125 = vmatpush.msra.mxu0 %v1124
        %v1126 = vand.u32 %v677, 4294901760
        %1127 = vmatpush.msra.mxu0 %v1126
        %v1128 = vand.u32 %v700, 4294901760
        %1129 = vmatmul.f32.gmra.mxu0 %v1128
        %v1130 = vpop.f32.mrf.mxu0
        %v1131 = vadd.f32 %v1102, %v1130
        %v1132 = vand.u32 %v703, 4294901760
        %1133 = vmatmul.f32.gmra.mxu0 %v1132
        %v1134 = vpop.f32.mrf.mxu0
        %v1135 = vadd.f32 %v1106, %v1134
        %1136 = vdwg.mxu0
        %1137 = vrot.lane.b32.xlu0 %v915, 17
        %v1138 = vpop.permute.xlu0 %1137
        %1139 = vrot.lane.b32.xlu0 %v919, 17
        %v1140 = vpop.permute.xlu0 %1139
        %1141 = vrot.lane.b32.xlu0 %v1131, 17
        %v1142 = vpop.permute.xlu0 %1141
        %1143 = vrot.lane.b32.xlu0 %v1135, 17
        %v1144 = vpop.permute.xlu0 %1143
        %v1145 = vlaneseq
        %v1146 = vand.u32 %v1145, 127
        %vm1147 = vcmp.lt.s32.totalorder %v1146, 17
        %v1148 = vsel %vm1147, %v1138, %v1142
        %v1149 = vsel %vm1147, %v1140, %v1144
        %v1150 = vsel %vm1147, %v1142, %v1138
        %v1151 = vsel %vm1147, %v1144, %v1140
        %1152 = vrot.lane.b32.xlu0 %v915, 16
        %v1153 = vpop.permute.xlu0 %1152
        %1154 = vrot.lane.b32.xlu0 %v919, 16
        %v1155 = vpop.permute.xlu0 %1154
        %1156 = vrot.lane.b32.xlu0 %v1131, 16
        %v1157 = vpop.permute.xlu0 %1156
        %1158 = vrot.lane.b32.xlu0 %v1135, 16
        %v1159 = vpop.permute.xlu0 %1158
        %vm1160 = vcmp.lt.s32.totalorder %v1146, 16
        %v1161 = vsel %vm1160, %v1153, %v1157
        %v1162 = vsel %vm1160, %v1155, %v1159
        %v1163 = vsel %vm1160, %v1157, %v1153
        %v1164 = vsel %vm1160, %v1159, %v1155
        %1165 = vrot.lane.b32.xlu0 %v915, 15
        %v1166 = vpop.permute.xlu0 %1165
        %1167 = vrot.lane.b32.xlu0 %v919, 15
        %v1168 = vpop.permute.xlu0 %1167
        %1169 = vrot.lane.b32.xlu0 %v1131, 15
        %v1170 = vpop.permute.xlu0 %1169
        %1171 = vrot.lane.b32.xlu0 %v1135, 15
        %v1172 = vpop.permute.xlu0 %1171
        %vm1173 = vcmp.lt.s32.totalorder %v1146, 15
        %v1174 = vsel %vm1173, %v1166, %v1170
        %v1175 = vsel %vm1173, %v1168, %v1172
        %v1176 = vsel %vm1173, %v1170, %v1166
        %v1177 = vsel %vm1173, %v1172, %v1168
        %1178 = vrot.lane.b32.xlu0 %v915, 1
        %v1179 = vpop.permute.xlu0 %1178
        %1180 = vrot.lane.b32.xlu0 %v919, 1
        %v1181 = vpop.permute.xlu0 %1180
        %1182 = vrot.lane.b32.xlu0 %v1131, 1
        %v1183 = vpop.permute.xlu0 %1182
        %1184 = vrot.lane.b32.xlu0 %v1135, 1
        %v1185 = vpop.permute.xlu0 %1184
        %vm1186 = vcmp.lt.s32.totalorder %v1146, 1
        %v1187 = vsel %vm1186, %v1179, %v1183
        %v1188 = vsel %vm1186, %v1181, %v1185
        %v1189 = vsel %vm1186, %v1183, %v1179
        %v1190 = vsel %vm1186, %v1185, %v1181
        %1191 = vrot.lane.b32.xlu0 %v915, 127
        %v1192 = vpop.permute.xlu0 %1191
        %1193 = vrot.lane.b32.xlu0 %v919, 127
        %v1194 = vpop.permute.xlu0 %1193
        %1195 = vrot.lane.b32.xlu0 %v1131, 127
        %v1196 = vpop.permute.xlu0 %1195
        %1197 = vrot.lane.b32.xlu0 %v1135, 127
        %v1198 = vpop.permute.xlu0 %1197
        %vm1199 = vcmp.lt.s32.totalorder %v1146, 127
        %v1200 = vsel %vm1199, %v1192, %v1196
        %v1201 = vsel %vm1199, %v1194, %v1198
        %v1202 = vsel %vm1199, %v1196, %v1192
        %v1203 = vsel %vm1199, %v1198, %v1194
        %1204 = vrot.lane.b32.xlu0 %v915, 113
        %v1205 = vpop.permute.xlu0 %1204
        %1206 = vrot.lane.b32.xlu0 %v919, 113
        %v1207 = vpop.permute.xlu0 %1206
        %1208 = vrot.lane.b32.xlu0 %v1131, 113
        %v1209 = vpop.permute.xlu0 %1208
        %1210 = vrot.lane.b32.xlu0 %v1135, 113
        %v1211 = vpop.permute.xlu0 %1210
        %vm1212 = vcmp.lt.s32.totalorder %v1146, 113
        %v1213 = vsel %vm1212, %v1205, %v1209
        %v1214 = vsel %vm1212, %v1207, %v1211
        %v1215 = vsel %vm1212, %v1209, %v1205
        %v1216 = vsel %vm1212, %v1211, %v1207
        %1217 = vrot.lane.b32.xlu0 %v915, 112
        %v1218 = vpop.permute.xlu0 %1217
        %1219 = vrot.lane.b32.xlu0 %v919, 112
        %v1220 = vpop.permute.xlu0 %1219
        %1221 = vrot.lane.b32.xlu0 %v1131, 112
        %v1222 = vpop.permute.xlu0 %1221
        %1223 = vrot.lane.b32.xlu0 %v1135, 112
        %v1224 = vpop.permute.xlu0 %1223
        %vm1225 = vcmp.lt.s32.totalorder %v1146, 112
        %v1226 = vsel %vm1225, %v1218, %v1222
        %v1227 = vsel %vm1225, %v1220, %v1224
        %v1228 = vsel %vm1225, %v1222, %v1218
        %v1229 = vsel %vm1225, %v1224, %v1220
        %1230 = vrot.lane.b32.xlu0 %v915, 111
        %v1231 = vpop.permute.xlu0 %1230
        %1232 = vrot.lane.b32.xlu0 %v919, 111
        %v1233 = vpop.permute.xlu0 %1232
        %1234 = vrot.lane.b32.xlu0 %v1131, 111
        %v1235 = vpop.permute.xlu0 %1234
        %1236 = vrot.lane.b32.xlu0 %v1135, 111
        %v1237 = vpop.permute.xlu0 %1236
        %vm1238 = vcmp.lt.s32.totalorder %v1146, 111
        %v1239 = vsel %vm1238, %v1231, %v1235
        %v1240 = vsel %vm1238, %v1233, %v1237
        %v1241 = vsel %vm1238, %v1235, %v1231
        %v1242 = vsel %vm1238, %v1237, %v1233
        %v1243 = vld [vmem:[#allocation5] sm:$0xff]
        %v1244 = vld [vmem:[#allocation5 + $0x8] sm:$0xff]
        %v1245 = vld [vmem:[#allocation5 + $0x10] sm:$0xff]
        %v1246 = vld [vmem:[#allocation5 + $0x18] sm:$0xff]
        %v1247 = vld [vmem:[#allocation5 + $0x20] sm:$0xff]
        %v1248 = vld [vmem:[#allocation5 + $0x28] sm:$0xff]
        %v1249 = vld [vmem:[#allocation5 + $0x30] sm:$0xff]
        %v1250 = vld [vmem:[#allocation5 + $0x38] sm:$0xff]
        %v1251 = vld [vmem:[#allocation5 + $0x40] sm:$0xff]
        %v1252 = vld [vmem:[#allocation5 + $0x48] sm:$0xff]
        %v1253 = vld [vmem:[#allocation5 + $0x50] sm:$0xff]
        %v1254 = vld [vmem:[#allocation5 + $0x58] sm:$0xff]
        %v1255 = vld [vmem:[#allocation5 + $0x60] sm:$0xff]
        %v1256 = vld [vmem:[#allocation5 + $0x68] sm:$0xff]
        %v1257 = vld [vmem:[#allocation5 + $0x70] sm:$0xff]
        %v1258 = vld [vmem:[#allocation5 + $0x78] sm:$0xff]
        %v1259 = vld [vmem:[#allocation5 + $0x80] sm:$0xff]
        %v1260 = vld [vmem:[#allocation5 + $0x88] sm:$0xff]
        %v1261 = vld [vmem:[#allocation5 + $0x90] sm:$0xff]
        %v1262 = vld [vmem:[#allocation5 + $0x98] sm:$0xff]
        %v1263 = vld [vmem:[#allocation5 + $0xa0] sm:$0xff]
        %v1264 = vld [vmem:[#allocation5 + $0xa8] sm:$0xff]
        %v1265 = vld [vmem:[#allocation5 + $0xb0] sm:$0xff]
        %v1266 = vld [vmem:[#allocation5 + $0xb8] sm:$0xff]
        %v1267 = vld [vmem:[#allocation5 + $0xc0] sm:$0xff]
        %v1268 = vld [vmem:[#allocation5 + $0xc8] sm:$0xff]
        %v1269 = vld [vmem:[#allocation5 + $0xd0] sm:$0xff]
        %v1270 = vld [vmem:[#allocation5 + $0xd8] sm:$0xff]
        %v1271 = vld [vmem:[#allocation5 + $0xe0] sm:$0xff]
        %v1272 = vld [vmem:[#allocation5 + $0xe8] sm:$0xff]
        %v1273 = vld [vmem:[#allocation5 + $0xf0] sm:$0xff]
        %v1274 = vld [vmem:[#allocation5 + $0xf8] sm:$0xff]
        %v1275 = vld [vmem:[#allocation5 + $0x100] sm:$0xff]
        %v1276 = vld [vmem:[#allocation5 + $0x108] sm:$0xff]
        %v1277 = vld [vmem:[#allocation5 + $0x110] sm:$0xff]
        %v1278 = vld [vmem:[#allocation5 + $0x118] sm:$0xff]
        %v1279 = vmul.f32 %v1150, %v1243
        %v1280 = vmul.f32 %v1148, %v1244
        %v1281 = vmul.f32 %v1151, %v1245
        %v1282 = vmul.f32 %v1149, %v1246
        %v1283 = vmul.f32 %v1163, %v1247
        %v1284 = vmul.f32 %v1161, %v1248
        %v1285 = vmul.f32 %v1164, %v1249
        %v1286 = vmul.f32 %v1162, %v1250
        %v1287 = vmul.f32 %v1176, %v1251
        %v1288 = vmul.f32 %v1174, %v1252
        %v1289 = vmul.f32 %v1177, %v1253
        %v1290 = vmul.f32 %v1175, %v1254
        %v1291 = vmul.f32 %v1189, %v1255
        %v1292 = vmul.f32 %v1187, %v1256
        %v1293 = vmul.f32 %v1190, %v1257
        %v1294 = vmul.f32 %v1188, %v1258
        %v1295 = vmul.f32 %v915, %v1259
        %v1296 = vmul.f32 %v1131, %v1260
        %v1297 = vmul.f32 %v919, %v1261
        %v1298 = vmul.f32 %v1135, %v1262
        %v1299 = vmul.f32 %v1200, %v1263
        %v1300 = vmul.f32 %v1202, %v1264
        %v1301 = vmul.f32 %v1201, %v1265
        %v1302 = vmul.f32 %v1203, %v1266
        %v1303 = vmul.f32 %v1213, %v1267
        %v1304 = vmul.f32 %v1215, %v1268
        %v1305 = vmul.f32 %v1214, %v1269
        %v1306 = vmul.f32 %v1216, %v1270
        %v1307 = vmul.f32 %v1226, %v1271
        %v1308 = vmul.f32 %v1228, %v1272
        %v1309 = vmul.f32 %v1227, %v1273
        %v1310 = vmul.f32 %v1229, %v1274
        %v1311 = vmul.f32 %v1239, %v1275
        %v1312 = vmul.f32 %v1241, %v1276
        %v1313 = vmul.f32 %v1240, %v1277
        %v1314 = vmul.f32 %v1242, %v1278
        %v1315 = vld [vmem:[#allocation7] sm:$0xff]
        %v1316 = vld [vmem:[#allocation7 + $0x8] sm:$0xff]
        %v1317 = vld [vmem:[#allocation7 + $0x10] sm:$0xff]
        %v1318 = vld [vmem:[#allocation7 + $0x18] sm:$0xff]
        %v1319 = vld [vmem:[%s7] sm:$0xff]
        %v1320 = vld [vmem:[%s7 + $0x8] sm:$0xff]
        %1322 = vset.pattern.permute.xlu0 0
        %1323 = vperm.xlu0 %1322, %v1319
        %v1324 = vpop.permute.xlu0 %1323
        %1327 = vset.pattern.permute.xlu0 0
        %1328 = vperm.xlu0 %1327, %v1320
        %v1329 = vpop.permute.xlu0 %1328
        %vm1331 = vcmask 130048
        %v1333 = vsel %vm1331, %v1316, 0
        %v1336 = vsel %vm1331, %v1318, 0
        %v1338 = vand.u32 %v1309, 4294901760
        %1339 = vmatpush.msra.mxu0 %v1338
        %v1340 = vand.u32 %v1307, 4294901760
        %1341 = vmatpush.msra.mxu0 %v1340
        %v1342 = vand.u32 %v1305, 4294901760
        %1343 = vmatpush.msra.mxu0 %v1342
        %v1344 = vand.u32 %v1303, 4294901760
        %1345 = vmatpush.msra.mxu0 %v1344
        %v1346 = vand.u32 %v1301, 4294901760
        %1347 = vmatpush.msra.mxu0 %v1346
        %v1348 = vand.u32 %v1299, 4294901760
        %1349 = vmatpush.msra.mxu0 %v1348
        %v1350 = vand.u32 %v1297, 4294901760
        %1351 = vmatpush.msra.mxu0 %v1350
        %v1352 = vand.u32 %v1295, 4294901760
        %1353 = vmatpush.msra.mxu0 %v1352
        %v1354 = vand.u32 %v1293, 4294901760
        %1355 = vmatpush.msra.mxu0 %v1354
        %v1356 = vand.u32 %v1291, 4294901760
        %1357 = vmatpush.msra.mxu0 %v1356
        %v1358 = vand.u32 %v1289, 4294901760
        %1359 = vmatpush.msra.mxu0 %v1358
        %v1360 = vand.u32 %v1287, 4294901760
        %1361 = vmatpush.msra.mxu0 %v1360
        %v1362 = vand.u32 %v1285, 4294901760
        %1363 = vmatpush.msra.mxu0 %v1362
        %v1364 = vand.u32 %v1283, 4294901760
        %1365 = vmatpush.msra.mxu0 %v1364
        %v1366 = vand.u32 %v1281, 4294901760
        %1367 = vmatpush.msra.mxu0 %v1366
        %v1368 = vand.u32 %v1279, 4294901760
        %1369 = vmatpush.msra.mxu0 %v1368
        %v1370 = vand.u32 %v1315, 4294901760
        %v1371 = vsub.f32 %v1315, %v1370
        %v1372 = vand.u32 %v1371, 4294901760
        %v1373 = vsub.f32 %v1371, %v1372
        %v1374 = vand.u32 %v1373, 4294901760
        %1375 = vmatmul.f32.gmra.mxu0 %v1374
        %v1376 = vpop.f32.mrf.mxu0
        %v1377 = vadd.f32 %v1324, %v1376
        %v1378 = vand.u32 %v1317, 4294901760
        %v1379 = vsub.f32 %v1317, %v1378
        %v1380 = vand.u32 %v1379, 4294901760
        %v1381 = vsub.f32 %v1379, %v1380
        %v1382 = vand.u32 %v1381, 4294901760
        %1383 = vmatmul.f32.gmra.mxu0 %v1382
        %v1384 = vpop.f32.mrf.mxu0
        %v1385 = vadd.f32 %v1329, %v1384
        %1386 = vdwg.mxu0
        %v1387 = vand.u32 %v1309, 4294901760
        %v1388 = vsub.f32 %v1309, %v1387
        %v1389 = vand.u32 %v1388, 4294901760
        %v1390 = vsub.f32 %v1388, %v1389
        %v1391 = vand.u32 %v1390, 4294901760
        %1392 = vmatpush.msra.mxu0 %v1391
        %v1393 = vand.u32 %v1307, 4294901760
        %v1394 = vsub.f32 %v1307, %v1393
        %v1395 = vand.u32 %v1394, 4294901760
        %v1396 = vsub.f32 %v1394, %v1395
        %v1397 = vand.u32 %v1396, 4294901760
        %1398 = vmatpush.msra.mxu0 %v1397
        %v1399 = vand.u32 %v1305, 4294901760
        %v1400 = vsub.f32 %v1305, %v1399
        %v1401 = vand.u32 %v1400, 4294901760
        %v1402 = vsub.f32 %v1400, %v1401
        %v1403 = vand.u32 %v1402, 4294901760
        %1404 = vmatpush.msra.mxu0 %v1403
        %v1405 = vand.u32 %v1303, 4294901760
        %v1406 = vsub.f32 %v1303, %v1405
        %v1407 = vand.u32 %v1406, 4294901760
        %v1408 = vsub.f32 %v1406, %v1407
        %v1409 = vand.u32 %v1408, 4294901760
        %1410 = vmatpush.msra.mxu0 %v1409
        %v1411 = vand.u32 %v1301, 4294901760
        %v1412 = vsub.f32 %v1301, %v1411
        %v1413 = vand.u32 %v1412, 4294901760
        %v1414 = vsub.f32 %v1412, %v1413
        %v1415 = vand.u32 %v1414, 4294901760
        %1416 = vmatpush.msra.mxu0 %v1415
        %v1417 = vand.u32 %v1299, 4294901760
        %v1418 = vsub.f32 %v1299, %v1417
        %v1419 = vand.u32 %v1418, 4294901760
        %v1420 = vsub.f32 %v1418, %v1419
        %v1421 = vand.u32 %v1420, 4294901760
        %1422 = vmatpush.msra.mxu0 %v1421
        %v1423 = vand.u32 %v1297, 4294901760
        %v1424 = vsub.f32 %v1297, %v1423
        %v1425 = vand.u32 %v1424, 4294901760
        %v1426 = vsub.f32 %v1424, %v1425
        %v1427 = vand.u32 %v1426, 4294901760
        %1428 = vmatpush.msra.mxu0 %v1427
        %v1429 = vand.u32 %v1295, 4294901760
        %v1430 = vsub.f32 %v1295, %v1429
        %v1431 = vand.u32 %v1430, 4294901760
        %v1432 = vsub.f32 %v1430, %v1431
        %v1433 = vand.u32 %v1432, 4294901760
        %1434 = vmatpush.msra.mxu0 %v1433
        %v1435 = vand.u32 %v1293, 4294901760
        %v1436 = vsub.f32 %v1293, %v1435
        %v1437 = vand.u32 %v1436, 4294901760
        %v1438 = vsub.f32 %v1436, %v1437
        %v1439 = vand.u32 %v1438, 4294901760
        %1440 = vmatpush.msra.mxu0 %v1439
        %v1441 = vand.u32 %v1291, 4294901760
        %v1442 = vsub.f32 %v1291, %v1441
        %v1443 = vand.u32 %v1442, 4294901760
        %v1444 = vsub.f32 %v1442, %v1443
        %v1445 = vand.u32 %v1444, 4294901760
        %1446 = vmatpush.msra.mxu0 %v1445
        %v1447 = vand.u32 %v1289, 4294901760
        %v1448 = vsub.f32 %v1289, %v1447
        %v1449 = vand.u32 %v1448, 4294901760
        %v1450 = vsub.f32 %v1448, %v1449
        %v1451 = vand.u32 %v1450, 4294901760
        %1452 = vmatpush.msra.mxu0 %v1451
        %v1453 = vand.u32 %v1287, 4294901760
        %v1454 = vsub.f32 %v1287, %v1453
        %v1455 = vand.u32 %v1454, 4294901760
        %v1456 = vsub.f32 %v1454, %v1455
        %v1457 = vand.u32 %v1456, 4294901760
        %1458 = vmatpush.msra.mxu0 %v1457
        %v1459 = vand.u32 %v1285, 4294901760
        %v1460 = vsub.f32 %v1285, %v1459
        %v1461 = vand.u32 %v1460, 4294901760
        %v1462 = vsub.f32 %v1460, %v1461
        %v1463 = vand.u32 %v1462, 4294901760
        %1464 = vmatpush.msra.mxu0 %v1463
        %v1465 = vand.u32 %v1283, 4294901760
        %v1466 = vsub.f32 %v1283, %v1465
        %v1467 = vand.u32 %v1466, 4294901760
        %v1468 = vsub.f32 %v1466, %v1467
        %v1469 = vand.u32 %v1468, 4294901760
        %1470 = vmatpush.msra.mxu0 %v1469
        %v1471 = vand.u32 %v1281, 4294901760
        %v1472 = vsub.f32 %v1281, %v1471
        %v1473 = vand.u32 %v1472, 4294901760
        %v1474 = vsub.f32 %v1472, %v1473
        %v1475 = vand.u32 %v1474, 4294901760
        %1476 = vmatpush.msra.mxu0 %v1475
        %v1477 = vand.u32 %v1279, 4294901760
        %v1478 = vsub.f32 %v1279, %v1477
        %v1479 = vand.u32 %v1478, 4294901760
        %v1480 = vsub.f32 %v1478, %v1479
        %v1481 = vand.u32 %v1480, 4294901760
        %1482 = vmatpush.msra.mxu0 %v1481
        %v1483 = vand.u32 %v1315, 4294901760
        %1484 = vmatmul.f32.gmra.mxu0 %v1483
        %v1485 = vpop.f32.mrf.mxu0
        %v1486 = vadd.f32 %v1377, %v1485
        %v1487 = vand.u32 %v1317, 4294901760
        %1488 = vmatmul.f32.gmra.mxu0 %v1487
        %v1489 = vpop.f32.mrf.mxu0
        %v1490 = vadd.f32 %v1385, %v1489
        %1491 = vdwg.mxu0
        %v1492 = vand.u32 %v1309, 4294901760
        %v1493 = vsub.f32 %v1309, %v1492
        %1494 = vmatpush.msra.mxu0 %v1493
        %v1495 = vand.u32 %v1307, 4294901760
        %v1496 = vsub.f32 %v1307, %v1495
        %1497 = vmatpush.msra.mxu0 %v1496
        %v1498 = vand.u32 %v1305, 4294901760
        %v1499 = vsub.f32 %v1305, %v1498
        %1500 = vmatpush.msra.mxu0 %v1499
        %v1501 = vand.u32 %v1303, 4294901760
        %v1502 = vsub.f32 %v1303, %v1501
        %1503 = vmatpush.msra.mxu0 %v1502
        %v1504 = vand.u32 %v1301, 4294901760
        %v1505 = vsub.f32 %v1301, %v1504
        %1506 = vmatpush.msra.mxu0 %v1505
        %v1507 = vand.u32 %v1299, 4294901760
        %v1508 = vsub.f32 %v1299, %v1507
        %1509 = vmatpush.msra.mxu0 %v1508
        %v1510 = vand.u32 %v1297, 4294901760
        %v1511 = vsub.f32 %v1297, %v1510
        %1512 = vmatpush.msra.mxu0 %v1511
        %v1513 = vand.u32 %v1295, 4294901760
        %v1514 = vsub.f32 %v1295, %v1513
        %1515 = vmatpush.msra.mxu0 %v1514
        %v1516 = vand.u32 %v1293, 4294901760
        %v1517 = vsub.f32 %v1293, %v1516
        %1518 = vmatpush.msra.mxu0 %v1517
        %v1519 = vand.u32 %v1291, 4294901760
        %v1520 = vsub.f32 %v1291, %v1519
        %1521 = vmatpush.msra.mxu0 %v1520
        %v1522 = vand.u32 %v1289, 4294901760
        %v1523 = vsub.f32 %v1289, %v1522
        %1524 = vmatpush.msra.mxu0 %v1523
        %v1525 = vand.u32 %v1287, 4294901760
        %v1526 = vsub.f32 %v1287, %v1525
        %1527 = vmatpush.msra.mxu0 %v1526
        %v1528 = vand.u32 %v1285, 4294901760
        %v1529 = vsub.f32 %v1285, %v1528
        %1530 = vmatpush.msra.mxu0 %v1529
        %v1531 = vand.u32 %v1283, 4294901760
        %v1532 = vsub.f32 %v1283, %v1531
        %1533 = vmatpush.msra.mxu0 %v1532
        %v1534 = vand.u32 %v1281, 4294901760
        %v1535 = vsub.f32 %v1281, %v1534
        %1536 = vmatpush.msra.mxu0 %v1535
        %v1537 = vand.u32 %v1279, 4294901760
        %v1538 = vsub.f32 %v1279, %v1537
        %1539 = vmatpush.msra.mxu0 %v1538
        %v1540 = vand.u32 %v1315, 4294901760
        %v1541 = vsub.f32 %v1315, %v1540
        %1542 = vmatmul.f32.gmra.mxu0 %v1541
        %v1543 = vpop.f32.mrf.mxu0
        %v1544 = vadd.f32 %v1486, %v1543
        %v1545 = vand.u32 %v1317, 4294901760
        %v1546 = vsub.f32 %v1317, %v1545
        %1547 = vmatmul.f32.gmra.mxu0 %v1546
        %v1548 = vpop.f32.mrf.mxu0
        %v1549 = vadd.f32 %v1490, %v1548
        %1550 = vdwg.mxu0
        %v1551 = vand.u32 %v1309, 4294901760
        %1552 = vmatpush.msra.mxu0 %v1551
        %v1553 = vand.u32 %v1307, 4294901760
        %1554 = vmatpush.msra.mxu0 %v1553
        %v1555 = vand.u32 %v1305, 4294901760
        %1556 = vmatpush.msra.mxu0 %v1555
        %v1557 = vand.u32 %v1303, 4294901760
        %1558 = vmatpush.msra.mxu0 %v1557
        %v1559 = vand.u32 %v1301, 4294901760
        %1560 = vmatpush.msra.mxu0 %v1559
        %v1561 = vand.u32 %v1299, 4294901760
        %1562 = vmatpush.msra.mxu0 %v1561
        %v1563 = vand.u32 %v1297, 4294901760
        %1564 = vmatpush.msra.mxu0 %v1563
        %v1565 = vand.u32 %v1295, 4294901760
        %1566 = vmatpush.msra.mxu0 %v1565
        %v1567 = vand.u32 %v1293, 4294901760
        %1568 = vmatpush.msra.mxu0 %v1567
        %v1569 = vand.u32 %v1291, 4294901760
        %1570 = vmatpush.msra.mxu0 %v1569
        %v1571 = vand.u32 %v1289, 4294901760
        %1572 = vmatpush.msra.mxu0 %v1571
        %v1573 = vand.u32 %v1287, 4294901760
        %1574 = vmatpush.msra.mxu0 %v1573
        %v1575 = vand.u32 %v1285, 4294901760
        %1576 = vmatpush.msra.mxu0 %v1575
        %v1577 = vand.u32 %v1283, 4294901760
        %1578 = vmatpush.msra.mxu0 %v1577
        %v1579 = vand.u32 %v1281, 4294901760
        %1580 = vmatpush.msra.mxu0 %v1579
        %v1581 = vand.u32 %v1279, 4294901760
        %1582 = vmatpush.msra.mxu0 %v1581
        %v1583 = vand.u32 %v1315, 4294901760
        %v1584 = vsub.f32 %v1315, %v1583
        %v1585 = vand.u32 %v1584, 4294901760
        %1586 = vmatmul.f32.gmra.mxu0 %v1585
        %v1587 = vpop.f32.mrf.mxu0
        %v1588 = vadd.f32 %v1544, %v1587
        %v1589 = vand.u32 %v1317, 4294901760
        %v1590 = vsub.f32 %v1317, %v1589
        %v1591 = vand.u32 %v1590, 4294901760
        %1592 = vmatmul.f32.gmra.mxu0 %v1591
        %v1593 = vpop.f32.mrf.mxu0
        %v1594 = vadd.f32 %v1549, %v1593
        %1595 = vdwg.mxu0
        %v1596 = vand.u32 %v1309, 4294901760
        %v1597 = vsub.f32 %v1309, %v1596
        %v1598 = vand.u32 %v1597, 4294901760
        %1599 = vmatpush.msra.mxu0 %v1598
        %v1600 = vand.u32 %v1307, 4294901760
        %v1601 = vsub.f32 %v1307, %v1600
        %v1602 = vand.u32 %v1601, 4294901760
        %1603 = vmatpush.msra.mxu0 %v1602
        %v1604 = vand.u32 %v1305, 4294901760
        %v1605 = vsub.f32 %v1305, %v1604
        %v1606 = vand.u32 %v1605, 4294901760
        %1607 = vmatpush.msra.mxu0 %v1606
        %v1608 = vand.u32 %v1303, 4294901760
        %v1609 = vsub.f32 %v1303, %v1608
        %v1610 = vand.u32 %v1609, 4294901760
        %1611 = vmatpush.msra.mxu0 %v1610
        %v1612 = vand.u32 %v1301, 4294901760
        %v1613 = vsub.f32 %v1301, %v1612
        %v1614 = vand.u32 %v1613, 4294901760
        %1615 = vmatpush.msra.mxu0 %v1614
        %v1616 = vand.u32 %v1299, 4294901760
        %v1617 = vsub.f32 %v1299, %v1616
        %v1618 = vand.u32 %v1617, 4294901760
        %1619 = vmatpush.msra.mxu0 %v1618
        %v1620 = vand.u32 %v1297, 4294901760
        %v1621 = vsub.f32 %v1297, %v1620
        %v1622 = vand.u32 %v1621, 4294901760
        %1623 = vmatpush.msra.mxu0 %v1622
        %v1624 = vand.u32 %v1295, 4294901760
        %v1625 = vsub.f32 %v1295, %v1624
        %v1626 = vand.u32 %v1625, 4294901760
        %1627 = vmatpush.msra.mxu0 %v1626
        %v1628 = vand.u32 %v1293, 4294901760
        %v1629 = vsub.f32 %v1293, %v1628
        %v1630 = vand.u32 %v1629, 4294901760
        %1631 = vmatpush.msra.mxu0 %v1630
        %v1632 = vand.u32 %v1291, 4294901760
        %v1633 = vsub.f32 %v1291, %v1632
        %v1634 = vand.u32 %v1633, 4294901760
        %1635 = vmatpush.msra.mxu0 %v1634
        %v1636 = vand.u32 %v1289, 4294901760
        %v1637 = vsub.f32 %v1289, %v1636
        %v1638 = vand.u32 %v1637, 4294901760
        %1639 = vmatpush.msra.mxu0 %v1638
        %v1640 = vand.u32 %v1287, 4294901760
        %v1641 = vsub.f32 %v1287, %v1640
        %v1642 = vand.u32 %v1641, 4294901760
        %1643 = vmatpush.msra.mxu0 %v1642
        %v1644 = vand.u32 %v1285, 4294901760
        %v1645 = vsub.f32 %v1285, %v1644
        %v1646 = vand.u32 %v1645, 4294901760
        %1647 = vmatpush.msra.mxu0 %v1646
        %v1648 = vand.u32 %v1283, 4294901760
        %v1649 = vsub.f32 %v1283, %v1648
        %v1650 = vand.u32 %v1649, 4294901760
        %1651 = vmatpush.msra.mxu0 %v1650
        %v1652 = vand.u32 %v1281, 4294901760
        %v1653 = vsub.f32 %v1281, %v1652
        %v1654 = vand.u32 %v1653, 4294901760
        %1655 = vmatpush.msra.mxu0 %v1654
        %v1656 = vand.u32 %v1279, 4294901760
        %v1657 = vsub.f32 %v1279, %v1656
        %v1658 = vand.u32 %v1657, 4294901760
        %1659 = vmatpush.msra.mxu0 %v1658
        %v1660 = vand.u32 %v1315, 4294901760
        %1661 = vmatmul.f32.gmra.mxu0 %v1660
        %v1662 = vpop.f32.mrf.mxu0
        %v1663 = vadd.f32 %v1588, %v1662
        %v1664 = vand.u32 %v1317, 4294901760
        %1665 = vmatmul.f32.gmra.mxu0 %v1664
        %v1666 = vpop.f32.mrf.mxu0
        %v1667 = vadd.f32 %v1594, %v1666
        %1668 = vdwg.mxu0
        %v1669 = vand.u32 %v1309, 4294901760
        %1670 = vmatpush.msra.mxu0 %v1669
        %v1671 = vand.u32 %v1307, 4294901760
        %1672 = vmatpush.msra.mxu0 %v1671
        %v1673 = vand.u32 %v1305, 4294901760
        %1674 = vmatpush.msra.mxu0 %v1673
        %v1675 = vand.u32 %v1303, 4294901760
        %1676 = vmatpush.msra.mxu0 %v1675
        %v1677 = vand.u32 %v1301, 4294901760
        %1678 = vmatpush.msra.mxu0 %v1677
        %v1679 = vand.u32 %v1299, 4294901760
        %1680 = vmatpush.msra.mxu0 %v1679
        %v1681 = vand.u32 %v1297, 4294901760
        %1682 = vmatpush.msra.mxu0 %v1681
        %v1683 = vand.u32 %v1295, 4294901760
        %1684 = vmatpush.msra.mxu0 %v1683
        %v1685 = vand.u32 %v1293, 4294901760
        %1686 = vmatpush.msra.mxu0 %v1685
        %v1687 = vand.u32 %v1291, 4294901760
        %1688 = vmatpush.msra.mxu0 %v1687
        %v1689 = vand.u32 %v1289, 4294901760
        %1690 = vmatpush.msra.mxu0 %v1689
        %v1691 = vand.u32 %v1287, 4294901760
        %1692 = vmatpush.msra.mxu0 %v1691
        %v1693 = vand.u32 %v1285, 4294901760
        %1694 = vmatpush.msra.mxu0 %v1693
        %v1695 = vand.u32 %v1283, 4294901760
        %1696 = vmatpush.msra.mxu0 %v1695
        %v1697 = vand.u32 %v1281, 4294901760
        %1698 = vmatpush.msra.mxu0 %v1697
        %v1699 = vand.u32 %v1279, 4294901760
        %1700 = vmatpush.msra.mxu0 %v1699
        %v1701 = vand.u32 %v1315, 4294901760
        %1702 = vmatmul.f32.gmra.mxu0 %v1701
        %v1703 = vpop.f32.mrf.mxu0
        %v1704 = vadd.f32 %v1663, %v1703
        %v1705 = vand.u32 %v1317, 4294901760
        %1706 = vmatmul.f32.gmra.mxu0 %v1705
        %v1707 = vpop.f32.mrf.mxu0
        %v1708 = vadd.f32 %v1667, %v1707
        %1709 = vdwg.mxu0
        %1710 = vmatpush.msra.mxu0 0.0
        %1711 = vmatpush.msra.mxu0 0.0
        %1712 = vmatpush.msra.mxu0 0.0
        %1713 = vmatpush.msra.mxu0 0.0
        %1714 = vmatpush.msra.mxu0 0.0
        %1715 = vmatpush.msra.mxu0 0.0
        %1716 = vmatpush.msra.mxu0 0.0
        %1717 = vmatpush.msra.mxu0 0.0
        %1718 = vmatpush.msra.mxu0 0.0
        %1719 = vmatpush.msra.mxu0 0.0
        %1720 = vmatpush.msra.mxu0 0.0
        %1721 = vmatpush.msra.mxu0 0.0
        %1722 = vmatpush.msra.mxu0 0.0
        %1723 = vmatpush.msra.mxu0 0.0
        %v1724 = vand.u32 %v1313, 4294901760
        %1725 = vmatpush.msra.mxu0 %v1724
        %v1726 = vand.u32 %v1311, 4294901760
        %1727 = vmatpush.msra.mxu0 %v1726
        %v1728 = vand.u32 %v1333, 4294901760
        %v1729 = vsub.f32 %v1333, %v1728
        %v1730 = vand.u32 %v1729, 4294901760
        %v1731 = vsub.f32 %v1729, %v1730
        %v1732 = vand.u32 %v1731, 4294901760
        %1733 = vmatmul.f32.gmra.mxu0 %v1732
        %v1734 = vpop.f32.mrf.mxu0
        %v1735 = vadd.f32 %v1704, %v1734
        %v1736 = vand.u32 %v1336, 4294901760
        %v1737 = vsub.f32 %v1336, %v1736
        %v1738 = vand.u32 %v1737, 4294901760
        %v1739 = vsub.f32 %v1737, %v1738
        %v1740 = vand.u32 %v1739, 4294901760
        %1741 = vmatmul.f32.gmra.mxu0 %v1740
        %v1742 = vpop.f32.mrf.mxu0
        %v1743 = vadd.f32 %v1708, %v1742
        %1744 = vdwg.mxu0
        %1745 = vmatpush.msra.mxu0 0.0
        %1746 = vmatpush.msra.mxu0 0.0
        %1747 = vmatpush.msra.mxu0 0.0
        %1748 = vmatpush.msra.mxu0 0.0
        %1749 = vmatpush.msra.mxu0 0.0
        %1750 = vmatpush.msra.mxu0 0.0
        %1751 = vmatpush.msra.mxu0 0.0
        %1752 = vmatpush.msra.mxu0 0.0
        %1753 = vmatpush.msra.mxu0 0.0
        %1754 = vmatpush.msra.mxu0 0.0
        %1755 = vmatpush.msra.mxu0 0.0
        %1756 = vmatpush.msra.mxu0 0.0
        %1757 = vmatpush.msra.mxu0 0.0
        %1758 = vmatpush.msra.mxu0 0.0
        %v1759 = vand.u32 %v1313, 4294901760
        %v1760 = vsub.f32 %v1313, %v1759
        %v1761 = vand.u32 %v1760, 4294901760
        %v1762 = vsub.f32 %v1760, %v1761
        %v1763 = vand.u32 %v1762, 4294901760
        %1764 = vmatpush.msra.mxu0 %v1763
        %v1765 = vand.u32 %v1311, 4294901760
        %v1766 = vsub.f32 %v1311, %v1765
        %v1767 = vand.u32 %v1766, 4294901760
        %v1768 = vsub.f32 %v1766, %v1767
        %v1769 = vand.u32 %v1768, 4294901760
        %1770 = vmatpush.msra.mxu0 %v1769
        %v1771 = vand.u32 %v1333, 4294901760
        %1772 = vmatmul.f32.gmra.mxu0 %v1771
        %v1773 = vpop.f32.mrf.mxu0
        %v1774 = vadd.f32 %v1735, %v1773
        %v1775 = vand.u32 %v1336, 4294901760
        %1776 = vmatmul.f32.gmra.mxu0 %v1775
        %v1777 = vpop.f32.mrf.mxu0
        %v1778 = vadd.f32 %v1743, %v1777
        %1779 = vdwg.mxu0
        %1780 = vmatpush.msra.mxu0 0.0
        %1781 = vmatpush.msra.mxu0 0.0
        %1782 = vmatpush.msra.mxu0 0.0
        %1783 = vmatpush.msra.mxu0 0.0
        %1784 = vmatpush.msra.mxu0 0.0
        %1785 = vmatpush.msra.mxu0 0.0
        %1786 = vmatpush.msra.mxu0 0.0
        %1787 = vmatpush.msra.mxu0 0.0
        %1788 = vmatpush.msra.mxu0 0.0
        %1789 = vmatpush.msra.mxu0 0.0
        %1790 = vmatpush.msra.mxu0 0.0
        %1791 = vmatpush.msra.mxu0 0.0
        %1792 = vmatpush.msra.mxu0 0.0
        %1793 = vmatpush.msra.mxu0 0.0
        %v1794 = vand.u32 %v1313, 4294901760
        %v1795 = vsub.f32 %v1313, %v1794
        %1796 = vmatpush.msra.mxu0 %v1795
        %v1797 = vand.u32 %v1311, 4294901760
        %v1798 = vsub.f32 %v1311, %v1797
        %1799 = vmatpush.msra.mxu0 %v1798
        %v1800 = vand.u32 %v1333, 4294901760
        %v1801 = vsub.f32 %v1333, %v1800
        %1802 = vmatmul.f32.gmra.mxu0 %v1801
        %v1803 = vpop.f32.mrf.mxu0
        %v1804 = vadd.f32 %v1774, %v1803
        %v1805 = vand.u32 %v1336, 4294901760
        %v1806 = vsub.f32 %v1336, %v1805
        %1807 = vmatmul.f32.gmra.mxu0 %v1806
        %v1808 = vpop.f32.mrf.mxu0
        %v1809 = vadd.f32 %v1778, %v1808
        %1810 = vdwg.mxu0
        %1811 = vmatpush.msra.mxu0 0.0
        %1812 = vmatpush.msra.mxu0 0.0
        %1813 = vmatpush.msra.mxu0 0.0
        %1814 = vmatpush.msra.mxu0 0.0
        %1815 = vmatpush.msra.mxu0 0.0
        %1816 = vmatpush.msra.mxu0 0.0
        %1817 = vmatpush.msra.mxu0 0.0
        %1818 = vmatpush.msra.mxu0 0.0
        %1819 = vmatpush.msra.mxu0 0.0
        %1820 = vmatpush.msra.mxu0 0.0
        %1821 = vmatpush.msra.mxu0 0.0
        %1822 = vmatpush.msra.mxu0 0.0
        %1823 = vmatpush.msra.mxu0 0.0
        %1824 = vmatpush.msra.mxu0 0.0
        %v1825 = vand.u32 %v1313, 4294901760
        %1826 = vmatpush.msra.mxu0 %v1825
        %v1827 = vand.u32 %v1311, 4294901760
        %1828 = vmatpush.msra.mxu0 %v1827
        %v1829 = vand.u32 %v1333, 4294901760
        %v1830 = vsub.f32 %v1333, %v1829
        %v1831 = vand.u32 %v1830, 4294901760
        %1832 = vmatmul.f32.gmra.mxu0 %v1831
        %v1833 = vpop.f32.mrf.mxu0
        %v1834 = vadd.f32 %v1804, %v1833
        %v1835 = vand.u32 %v1336, 4294901760
        %v1836 = vsub.f32 %v1336, %v1835
        %v1837 = vand.u32 %v1836, 4294901760
        %1838 = vmatmul.f32.gmra.mxu0 %v1837
        %v1839 = vpop.f32.mrf.mxu0
        %v1840 = vadd.f32 %v1809, %v1839
        %1841 = vdwg.mxu0
        %1842 = vmatpush.msra.mxu0 0.0
        %1843 = vmatpush.msra.mxu0 0.0
        %1844 = vmatpush.msra.mxu0 0.0
        %1845 = vmatpush.msra.mxu0 0.0
        %1846 = vmatpush.msra.mxu0 0.0
        %1847 = vmatpush.msra.mxu0 0.0
        %1848 = vmatpush.msra.mxu0 0.0
        %1849 = vmatpush.msra.mxu0 0.0
        %1850 = vmatpush.msra.mxu0 0.0
        %1851 = vmatpush.msra.mxu0 0.0
        %1852 = vmatpush.msra.mxu0 0.0
        %1853 = vmatpush.msra.mxu0 0.0
        %1854 = vmatpush.msra.mxu0 0.0
        %1855 = vmatpush.msra.mxu0 0.0
        %v1856 = vand.u32 %v1313, 4294901760
        %v1857 = vsub.f32 %v1313, %v1856
        %v1858 = vand.u32 %v1857, 4294901760
        %1859 = vmatpush.msra.mxu0 %v1858
        %v1860 = vand.u32 %v1311, 4294901760
        %v1861 = vsub.f32 %v1311, %v1860
        %v1862 = vand.u32 %v1861, 4294901760
        %1863 = vmatpush.msra.mxu0 %v1862
        %v1864 = vand.u32 %v1333, 4294901760
        %1865 = vmatmul.f32.gmra.mxu0 %v1864
        %v1866 = vpop.f32.mrf.mxu0
        %v1867 = vadd.f32 %v1834, %v1866
        %v1868 = vand.u32 %v1336, 4294901760
        %1869 = vmatmul.f32.gmra.mxu0 %v1868
        %v1870 = vpop.f32.mrf.mxu0
        %v1871 = vadd.f32 %v1840, %v1870
        %1872 = vdwg.mxu0
        %1873 = vmatpush.msra.mxu0 0.0
        %1874 = vmatpush.msra.mxu0 0.0
        %1875 = vmatpush.msra.mxu0 0.0
        %1876 = vmatpush.msra.mxu0 0.0
        %1877 = vmatpush.msra.mxu0 0.0
        %1878 = vmatpush.msra.mxu0 0.0
        %1879 = vmatpush.msra.mxu0 0.0
        %1880 = vmatpush.msra.mxu0 0.0
        %1881 = vmatpush.msra.mxu0 0.0
        %1882 = vmatpush.msra.mxu0 0.0
        %1883 = vmatpush.msra.mxu0 0.0
        %1884 = vmatpush.msra.mxu0 0.0
        %1885 = vmatpush.msra.mxu0 0.0
        %1886 = vmatpush.msra.mxu0 0.0
        %v1887 = vand.u32 %v1313, 4294901760
        %1888 = vmatpush.msra.mxu0 %v1887
        %v1889 = vand.u32 %v1311, 4294901760
        %1890 = vmatpush.msra.mxu0 %v1889
        %v1891 = vand.u32 %v1333, 4294901760
        %1892 = vmatmul.f32.gmra.mxu0 %v1891
        %v1893 = vpop.f32.mrf.mxu0
        %v1894 = vadd.f32 %v1867, %v1893
        %v1895 = vand.u32 %v1336, 4294901760
        %1896 = vmatmul.f32.gmra.mxu0 %v1895
        %v1897 = vpop.f32.mrf.mxu0
        %v1898 = vadd.f32 %v1871, %v1897
        %1899 = vdwg.mxu0
        %v1900 = vand.u32 %v1310, 4294901760
        %1901 = vmatpush.msra.mxu0 %v1900
        %v1902 = vand.u32 %v1308, 4294901760
        %1903 = vmatpush.msra.mxu0 %v1902
        %v1904 = vand.u32 %v1306, 4294901760
        %1905 = vmatpush.msra.mxu0 %v1904
        %v1906 = vand.u32 %v1304, 4294901760
        %1907 = vmatpush.msra.mxu0 %v1906
        %v1908 = vand.u32 %v1302, 4294901760
        %1909 = vmatpush.msra.mxu0 %v1908
        %v1910 = vand.u32 %v1300, 4294901760
        %1911 = vmatpush.msra.mxu0 %v1910
        %v1912 = vand.u32 %v1298, 4294901760
        %1913 = vmatpush.msra.mxu0 %v1912
        %v1914 = vand.u32 %v1296, 4294901760
        %1915 = vmatpush.msra.mxu0 %v1914
        %v1916 = vand.u32 %v1294, 4294901760
        %1917 = vmatpush.msra.mxu0 %v1916
        %v1918 = vand.u32 %v1292, 4294901760
        %1919 = vmatpush.msra.mxu0 %v1918
        %v1920 = vand.u32 %v1290, 4294901760
        %1921 = vmatpush.msra.mxu0 %v1920
        %v1922 = vand.u32 %v1288, 4294901760
        %1923 = vmatpush.msra.mxu0 %v1922
        %v1924 = vand.u32 %v1286, 4294901760
        %1925 = vmatpush.msra.mxu0 %v1924
        %v1926 = vand.u32 %v1284, 4294901760
        %1927 = vmatpush.msra.mxu0 %v1926
        %v1928 = vand.u32 %v1282, 4294901760
        %1929 = vmatpush.msra.mxu0 %v1928
        %v1930 = vand.u32 %v1280, 4294901760
        %1931 = vmatpush.msra.mxu0 %v1930
        %v1932 = vand.u32 %v1315, 4294901760
        %v1933 = vsub.f32 %v1315, %v1932
        %v1934 = vand.u32 %v1933, 4294901760
        %v1935 = vsub.f32 %v1933, %v1934
        %v1936 = vand.u32 %v1935, 4294901760
        %1937 = vmatmul.f32.gmra.mxu0 %v1936
        %v1938 = vpop.f32.mrf.mxu0
        %v1939 = vadd.f32 %v1324, %v1938
        %v1940 = vand.u32 %v1317, 4294901760
        %v1941 = vsub.f32 %v1317, %v1940
        %v1942 = vand.u32 %v1941, 4294901760
        %v1943 = vsub.f32 %v1941, %v1942
        %v1944 = vand.u32 %v1943, 4294901760
        %1945 = vmatmul.f32.gmra.mxu0 %v1944
        %v1946 = vpop.f32.mrf.mxu0
        %v1947 = vadd.f32 %v1329, %v1946
        %1948 = vdwg.mxu0
        %v1949 = vand.u32 %v1310, 4294901760
        %v1950 = vsub.f32 %v1310, %v1949
        %v1951 = vand.u32 %v1950, 4294901760
        %v1952 = vsub.f32 %v1950, %v1951
        %v1953 = vand.u32 %v1952, 4294901760
        %1954 = vmatpush.msra.mxu0 %v1953
        %v1955 = vand.u32 %v1308, 4294901760
        %v1956 = vsub.f32 %v1308, %v1955
        %v1957 = vand.u32 %v1956, 4294901760
        %v1958 = vsub.f32 %v1956, %v1957
        %v1959 = vand.u32 %v1958, 4294901760
        %1960 = vmatpush.msra.mxu0 %v1959
        %v1961 = vand.u32 %v1306, 4294901760
        %v1962 = vsub.f32 %v1306, %v1961
        %v1963 = vand.u32 %v1962, 4294901760
        %v1964 = vsub.f32 %v1962, %v1963
        %v1965 = vand.u32 %v1964, 4294901760
        %1966 = vmatpush.msra.mxu0 %v1965
        %v1967 = vand.u32 %v1304, 4294901760
        %v1968 = vsub.f32 %v1304, %v1967
        %v1969 = vand.u32 %v1968, 4294901760
        %v1970 = vsub.f32 %v1968, %v1969
        %v1971 = vand.u32 %v1970, 4294901760
        %1972 = vmatpush.msra.mxu0 %v1971
        %v1973 = vand.u32 %v1302, 4294901760
        %v1974 = vsub.f32 %v1302, %v1973
        %v1975 = vand.u32 %v1974, 4294901760
        %v1976 = vsub.f32 %v1974, %v1975
        %v1977 = vand.u32 %v1976, 4294901760
        %1978 = vmatpush.msra.mxu0 %v1977
        %v1979 = vand.u32 %v1300, 4294901760
        %v1980 = vsub.f32 %v1300, %v1979
        %v1981 = vand.u32 %v1980, 4294901760
        %v1982 = vsub.f32 %v1980, %v1981
        %v1983 = vand.u32 %v1982, 4294901760
        %1984 = vmatpush.msra.mxu0 %v1983
        %v1985 = vand.u32 %v1298, 4294901760
        %v1986 = vsub.f32 %v1298, %v1985
        %v1987 = vand.u32 %v1986, 4294901760
        %v1988 = vsub.f32 %v1986, %v1987
        %v1989 = vand.u32 %v1988, 4294901760
        %1990 = vmatpush.msra.mxu0 %v1989
        %v1991 = vand.u32 %v1296, 4294901760
        %v1992 = vsub.f32 %v1296, %v1991
        %v1993 = vand.u32 %v1992, 4294901760
        %v1994 = vsub.f32 %v1992, %v1993
        %v1995 = vand.u32 %v1994, 4294901760
        %1996 = vmatpush.msra.mxu0 %v1995
        %v1997 = vand.u32 %v1294, 4294901760
        %v1998 = vsub.f32 %v1294, %v1997
        %v1999 = vand.u32 %v1998, 4294901760
        %v2000 = vsub.f32 %v1998, %v1999
        %v2001 = vand.u32 %v2000, 4294901760
        %2002 = vmatpush.msra.mxu0 %v2001
        %v2003 = vand.u32 %v1292, 4294901760
        %v2004 = vsub.f32 %v1292, %v2003
        %v2005 = vand.u32 %v2004, 4294901760
        %v2006 = vsub.f32 %v2004, %v2005
        %v2007 = vand.u32 %v2006, 4294901760
        %2008 = vmatpush.msra.mxu0 %v2007
        %v2009 = vand.u32 %v1290, 4294901760
        %v2010 = vsub.f32 %v1290, %v2009
        %v2011 = vand.u32 %v2010, 4294901760
        %v2012 = vsub.f32 %v2010, %v2011
        %v2013 = vand.u32 %v2012, 4294901760
        %2014 = vmatpush.msra.mxu0 %v2013
        %v2015 = vand.u32 %v1288, 4294901760
        %v2016 = vsub.f32 %v1288, %v2015
        %v2017 = vand.u32 %v2016, 4294901760
        %v2018 = vsub.f32 %v2016, %v2017
        %v2019 = vand.u32 %v2018, 4294901760
        %2020 = vmatpush.msra.mxu0 %v2019
        %v2021 = vand.u32 %v1286, 4294901760
        %v2022 = vsub.f32 %v1286, %v2021
        %v2023 = vand.u32 %v2022, 4294901760
        %v2024 = vsub.f32 %v2022, %v2023
        %v2025 = vand.u32 %v2024, 4294901760
        %2026 = vmatpush.msra.mxu0 %v2025
        %v2027 = vand.u32 %v1284, 4294901760
        %v2028 = vsub.f32 %v1284, %v2027
        %v2029 = vand.u32 %v2028, 4294901760
        %v2030 = vsub.f32 %v2028, %v2029
        %v2031 = vand.u32 %v2030, 4294901760
        %2032 = vmatpush.msra.mxu0 %v2031
        %v2033 = vand.u32 %v1282, 4294901760
        %v2034 = vsub.f32 %v1282, %v2033
        %v2035 = vand.u32 %v2034, 4294901760
        %v2036 = vsub.f32 %v2034, %v2035
        %v2037 = vand.u32 %v2036, 4294901760
        %2038 = vmatpush.msra.mxu0 %v2037
        %v2039 = vand.u32 %v1280, 4294901760
        %v2040 = vsub.f32 %v1280, %v2039
        %v2041 = vand.u32 %v2040, 4294901760
        %v2042 = vsub.f32 %v2040, %v2041
        %v2043 = vand.u32 %v2042, 4294901760
        %2044 = vmatpush.msra.mxu0 %v2043
        %v2045 = vand.u32 %v1315, 4294901760
        %2046 = vmatmul.f32.gmra.mxu0 %v2045
        %v2047 = vpop.f32.mrf.mxu0
        %v2048 = vadd.f32 %v1939, %v2047
        %v2049 = vand.u32 %v1317, 4294901760
        %2050 = vmatmul.f32.gmra.mxu0 %v2049
        %v2051 = vpop.f32.mrf.mxu0
        %v2052 = vadd.f32 %v1947, %v2051
        %2053 = vdwg.mxu0
        %v2054 = vand.u32 %v1310, 4294901760
        %v2055 = vsub.f32 %v1310, %v2054
        %2056 = vmatpush.msra.mxu0 %v2055
        %v2057 = vand.u32 %v1308, 4294901760
        %v2058 = vsub.f32 %v1308, %v2057
        %2059 = vmatpush.msra.mxu0 %v2058
        %v2060 = vand.u32 %v1306, 4294901760
        %v2061 = vsub.f32 %v1306, %v2060
        %2062 = vmatpush.msra.mxu0 %v2061
        %v2063 = vand.u32 %v1304, 4294901760
        %v2064 = vsub.f32 %v1304, %v2063
        %2065 = vmatpush.msra.mxu0 %v2064
        %v2066 = vand.u32 %v1302, 4294901760
        %v2067 = vsub.f32 %v1302, %v2066
        %2068 = vmatpush.msra.mxu0 %v2067
        %v2069 = vand.u32 %v1300, 4294901760
        %v2070 = vsub.f32 %v1300, %v2069
        %2071 = vmatpush.msra.mxu0 %v2070
        %v2072 = vand.u32 %v1298, 4294901760
        %v2073 = vsub.f32 %v1298, %v2072
        %2074 = vmatpush.msra.mxu0 %v2073
        %v2075 = vand.u32 %v1296, 4294901760
        %v2076 = vsub.f32 %v1296, %v2075
        %2077 = vmatpush.msra.mxu0 %v2076
        %v2078 = vand.u32 %v1294, 4294901760
        %v2079 = vsub.f32 %v1294, %v2078
        %2080 = vmatpush.msra.mxu0 %v2079
        %v2081 = vand.u32 %v1292, 4294901760
        %v2082 = vsub.f32 %v1292, %v2081
        %2083 = vmatpush.msra.mxu0 %v2082
        %v2084 = vand.u32 %v1290, 4294901760
        %v2085 = vsub.f32 %v1290, %v2084
        %2086 = vmatpush.msra.mxu0 %v2085
        %v2087 = vand.u32 %v1288, 4294901760
        %v2088 = vsub.f32 %v1288, %v2087
        %2089 = vmatpush.msra.mxu0 %v2088
        %v2090 = vand.u32 %v1286, 4294901760
        %v2091 = vsub.f32 %v1286, %v2090
        %2092 = vmatpush.msra.mxu0 %v2091
        %v2093 = vand.u32 %v1284, 4294901760
        %v2094 = vsub.f32 %v1284, %v2093
        %2095 = vmatpush.msra.mxu0 %v2094
        %v2096 = vand.u32 %v1282, 4294901760
        %v2097 = vsub.f32 %v1282, %v2096
        %2098 = vmatpush.msra.mxu0 %v2097
        %v2099 = vand.u32 %v1280, 4294901760
        %v2100 = vsub.f32 %v1280, %v2099
        %2101 = vmatpush.msra.mxu0 %v2100
        %v2102 = vand.u32 %v1315, 4294901760
        %v2103 = vsub.f32 %v1315, %v2102
        %2104 = vmatmul.f32.gmra.mxu0 %v2103
        %v2105 = vpop.f32.mrf.mxu0
        %v2106 = vadd.f32 %v2048, %v2105
        %v2107 = vand.u32 %v1317, 4294901760
        %v2108 = vsub.f32 %v1317, %v2107
        %2109 = vmatmul.f32.gmra.mxu0 %v2108
        %v2110 = vpop.f32.mrf.mxu0
        %v2111 = vadd.f32 %v2052, %v2110
        %2112 = vdwg.mxu0
        %v2113 = vand.u32 %v1310, 4294901760
        %2114 = vmatpush.msra.mxu0 %v2113
        %v2115 = vand.u32 %v1308, 4294901760
        %2116 = vmatpush.msra.mxu0 %v2115
        %v2117 = vand.u32 %v1306, 4294901760
        %2118 = vmatpush.msra.mxu0 %v2117
        %v2119 = vand.u32 %v1304, 4294901760
        %2120 = vmatpush.msra.mxu0 %v2119
        %v2121 = vand.u32 %v1302, 4294901760
        %2122 = vmatpush.msra.mxu0 %v2121
        %v2123 = vand.u32 %v1300, 4294901760
        %2124 = vmatpush.msra.mxu0 %v2123
        %v2125 = vand.u32 %v1298, 4294901760
        %2126 = vmatpush.msra.mxu0 %v2125
        %v2127 = vand.u32 %v1296, 4294901760
        %2128 = vmatpush.msra.mxu0 %v2127
        %v2129 = vand.u32 %v1294, 4294901760
        %2130 = vmatpush.msra.mxu0 %v2129
        %v2131 = vand.u32 %v1292, 4294901760
        %2132 = vmatpush.msra.mxu0 %v2131
        %v2133 = vand.u32 %v1290, 4294901760
        %2134 = vmatpush.msra.mxu0 %v2133
        %v2135 = vand.u32 %v1288, 4294901760
        %2136 = vmatpush.msra.mxu0 %v2135
        %v2137 = vand.u32 %v1286, 4294901760
        %2138 = vmatpush.msra.mxu0 %v2137
        %v2139 = vand.u32 %v1284, 4294901760
        %2140 = vmatpush.msra.mxu0 %v2139
        %v2141 = vand.u32 %v1282, 4294901760
        %2142 = vmatpush.msra.mxu0 %v2141
        %v2143 = vand.u32 %v1280, 4294901760
        %2144 = vmatpush.msra.mxu0 %v2143
        %v2145 = vand.u32 %v1315, 4294901760
        %v2146 = vsub.f32 %v1315, %v2145
        %v2147 = vand.u32 %v2146, 4294901760
        %2148 = vmatmul.f32.gmra.mxu0 %v2147
        %v2149 = vpop.f32.mrf.mxu0
        %v2150 = vadd.f32 %v2106, %v2149
        %v2151 = vand.u32 %v1317, 4294901760
        %v2152 = vsub.f32 %v1317, %v2151
        %v2153 = vand.u32 %v2152, 4294901760
        %2154 = vmatmul.f32.gmra.mxu0 %v2153
        %v2155 = vpop.f32.mrf.mxu0
        %v2156 = vadd.f32 %v2111, %v2155
        %2157 = vdwg.mxu0
        %v2158 = vand.u32 %v1310, 4294901760
        %v2159 = vsub.f32 %v1310, %v2158
        %v2160 = vand.u32 %v2159, 4294901760
        %2161 = vmatpush.msra.mxu0 %v2160
        %v2162 = vand.u32 %v1308, 4294901760
        %v2163 = vsub.f32 %v1308, %v2162
        %v2164 = vand.u32 %v2163, 4294901760
        %2165 = vmatpush.msra.mxu0 %v2164
        %v2166 = vand.u32 %v1306, 4294901760
        %v2167 = vsub.f32 %v1306, %v2166
        %v2168 = vand.u32 %v2167, 4294901760
        %2169 = vmatpush.msra.mxu0 %v2168
        %v2170 = vand.u32 %v1304, 4294901760
        %v2171 = vsub.f32 %v1304, %v2170
        %v2172 = vand.u32 %v2171, 4294901760
        %2173 = vmatpush.msra.mxu0 %v2172
        %v2174 = vand.u32 %v1302, 4294901760
        %v2175 = vsub.f32 %v1302, %v2174
        %v2176 = vand.u32 %v2175, 4294901760
        %2177 = vmatpush.msra.mxu0 %v2176
        %v2178 = vand.u32 %v1300, 4294901760
        %v2179 = vsub.f32 %v1300, %v2178
        %v2180 = vand.u32 %v2179, 4294901760
        %2181 = vmatpush.msra.mxu0 %v2180
        %v2182 = vand.u32 %v1298, 4294901760
        %v2183 = vsub.f32 %v1298, %v2182
        %v2184 = vand.u32 %v2183, 4294901760
        %2185 = vmatpush.msra.mxu0 %v2184
        %v2186 = vand.u32 %v1296, 4294901760
        %v2187 = vsub.f32 %v1296, %v2186
        %v2188 = vand.u32 %v2187, 4294901760
        %2189 = vmatpush.msra.mxu0 %v2188
        %v2190 = vand.u32 %v1294, 4294901760
        %v2191 = vsub.f32 %v1294, %v2190
        %v2192 = vand.u32 %v2191, 4294901760
        %2193 = vmatpush.msra.mxu0 %v2192
        %v2194 = vand.u32 %v1292, 4294901760
        %v2195 = vsub.f32 %v1292, %v2194
        %v2196 = vand.u32 %v2195, 4294901760
        %2197 = vmatpush.msra.mxu0 %v2196
        %v2198 = vand.u32 %v1290, 4294901760
        %v2199 = vsub.f32 %v1290, %v2198
        %v2200 = vand.u32 %v2199, 4294901760
        %2201 = vmatpush.msra.mxu0 %v2200
        %v2202 = vand.u32 %v1288, 4294901760
        %v2203 = vsub.f32 %v1288, %v2202
        %v2204 = vand.u32 %v2203, 4294901760
        %2205 = vmatpush.msra.mxu0 %v2204
        %v2206 = vand.u32 %v1286, 4294901760
        %v2207 = vsub.f32 %v1286, %v2206
        %v2208 = vand.u32 %v2207, 4294901760
        %2209 = vmatpush.msra.mxu0 %v2208
        %v2210 = vand.u32 %v1284, 4294901760
        %v2211 = vsub.f32 %v1284, %v2210
        %v2212 = vand.u32 %v2211, 4294901760
        %2213 = vmatpush.msra.mxu0 %v2212
        %v2214 = vand.u32 %v1282, 4294901760
        %v2215 = vsub.f32 %v1282, %v2214
        %v2216 = vand.u32 %v2215, 4294901760
        %2217 = vmatpush.msra.mxu0 %v2216
        %v2218 = vand.u32 %v1280, 4294901760
        %v2219 = vsub.f32 %v1280, %v2218
        %v2220 = vand.u32 %v2219, 4294901760
        %2221 = vmatpush.msra.mxu0 %v2220
        %v2222 = vand.u32 %v1315, 4294901760
        %2223 = vmatmul.f32.gmra.mxu0 %v2222
        %v2224 = vpop.f32.mrf.mxu0
        %v2225 = vadd.f32 %v2150, %v2224
        %v2226 = vand.u32 %v1317, 4294901760
        %2227 = vmatmul.f32.gmra.mxu0 %v2226
        %v2228 = vpop.f32.mrf.mxu0
        %v2229 = vadd.f32 %v2156, %v2228
        %2230 = vdwg.mxu0
        %v2231 = vand.u32 %v1310, 4294901760
        %2232 = vmatpush.msra.mxu0 %v2231
        %v2233 = vand.u32 %v1308, 4294901760
        %2234 = vmatpush.msra.mxu0 %v2233
        %v2235 = vand.u32 %v1306, 4294901760
        %2236 = vmatpush.msra.mxu0 %v2235
        %v2237 = vand.u32 %v1304, 4294901760
        %2238 = vmatpush.msra.mxu0 %v2237
        %v2239 = vand.u32 %v1302, 4294901760
        %2240 = vmatpush.msra.mxu0 %v2239
        %v2241 = vand.u32 %v1300, 4294901760
        %2242 = vmatpush.msra.mxu0 %v2241
        %v2243 = vand.u32 %v1298, 4294901760
        %2244 = vmatpush.msra.mxu0 %v2243
        %v2245 = vand.u32 %v1296, 4294901760
        %2246 = vmatpush.msra.mxu0 %v2245
        %v2247 = vand.u32 %v1294, 4294901760
        %2248 = vmatpush.msra.mxu0 %v2247
        %v2249 = vand.u32 %v1292, 4294901760
        %2250 = vmatpush.msra.mxu0 %v2249
        %v2251 = vand.u32 %v1290, 4294901760
        %2252 = vmatpush.msra.mxu0 %v2251
        %v2253 = vand.u32 %v1288, 4294901760
        %2254 = vmatpush.msra.mxu0 %v2253
        %v2255 = vand.u32 %v1286, 4294901760
        %2256 = vmatpush.msra.mxu0 %v2255
        %v2257 = vand.u32 %v1284, 4294901760
        %2258 = vmatpush.msra.mxu0 %v2257
        %v2259 = vand.u32 %v1282, 4294901760
        %2260 = vmatpush.msra.mxu0 %v2259
        %v2261 = vand.u32 %v1280, 4294901760
        %2262 = vmatpush.msra.mxu0 %v2261
        %v2263 = vand.u32 %v1315, 4294901760
        %2264 = vmatmul.f32.gmra.mxu0 %v2263
        %v2265 = vpop.f32.mrf.mxu0
        %v2266 = vadd.f32 %v2225, %v2265
        %v2267 = vand.u32 %v1317, 4294901760
        %2268 = vmatmul.f32.gmra.mxu0 %v2267
        %v2269 = vpop.f32.mrf.mxu0
        %v2270 = vadd.f32 %v2229, %v2269
        %2271 = vdwg.mxu0
        %2272 = vmatpush.msra.mxu0 0.0
        %2273 = vmatpush.msra.mxu0 0.0
        %2274 = vmatpush.msra.mxu0 0.0
        %2275 = vmatpush.msra.mxu0 0.0
        %2276 = vmatpush.msra.mxu0 0.0
        %2277 = vmatpush.msra.mxu0 0.0
        %2278 = vmatpush.msra.mxu0 0.0
        %2279 = vmatpush.msra.mxu0 0.0
        %2280 = vmatpush.msra.mxu0 0.0
        %2281 = vmatpush.msra.mxu0 0.0
        %2282 = vmatpush.msra.mxu0 0.0
        %2283 = vmatpush.msra.mxu0 0.0
        %2284 = vmatpush.msra.mxu0 0.0
        %2285 = vmatpush.msra.mxu0 0.0
        %v2286 = vand.u32 %v1314, 4294901760
        %2287 = vmatpush.msra.mxu0 %v2286
        %v2288 = vand.u32 %v1312, 4294901760
        %2289 = vmatpush.msra.mxu0 %v2288
        %v2290 = vand.u32 %v1333, 4294901760
        %v2291 = vsub.f32 %v1333, %v2290
        %v2292 = vand.u32 %v2291, 4294901760
        %v2293 = vsub.f32 %v2291, %v2292
        %v2294 = vand.u32 %v2293, 4294901760
        %2295 = vmatmul.f32.gmra.mxu0 %v2294
        %v2296 = vpop.f32.mrf.mxu0
        %v2297 = vadd.f32 %v2266, %v2296
        %v2298 = vand.u32 %v1336, 4294901760
        %v2299 = vsub.f32 %v1336, %v2298
        %v2300 = vand.u32 %v2299, 4294901760
        %v2301 = vsub.f32 %v2299, %v2300
        %v2302 = vand.u32 %v2301, 4294901760
        %2303 = vmatmul.f32.gmra.mxu0 %v2302
        %v2304 = vpop.f32.mrf.mxu0
        %v2305 = vadd.f32 %v2270, %v2304
        %2306 = vdwg.mxu0
        %2307 = vmatpush.msra.mxu0 0.0
        %2308 = vmatpush.msra.mxu0 0.0
        %2309 = vmatpush.msra.mxu0 0.0
        %2310 = vmatpush.msra.mxu0 0.0
        %2311 = vmatpush.msra.mxu0 0.0
        %2312 = vmatpush.msra.mxu0 0.0
        %2313 = vmatpush.msra.mxu0 0.0
        %2314 = vmatpush.msra.mxu0 0.0
        %2315 = vmatpush.msra.mxu0 0.0
        %2316 = vmatpush.msra.mxu0 0.0
        %2317 = vmatpush.msra.mxu0 0.0
        %2318 = vmatpush.msra.mxu0 0.0
        %2319 = vmatpush.msra.mxu0 0.0
        %2320 = vmatpush.msra.mxu0 0.0
        %v2321 = vand.u32 %v1314, 4294901760
        %v2322 = vsub.f32 %v1314, %v2321
        %v2323 = vand.u32 %v2322, 4294901760
        %v2324 = vsub.f32 %v2322, %v2323
        %v2325 = vand.u32 %v2324, 4294901760
        %2326 = vmatpush.msra.mxu0 %v2325
        %v2327 = vand.u32 %v1312, 4294901760
        %v2328 = vsub.f32 %v1312, %v2327
        %v2329 = vand.u32 %v2328, 4294901760
        %v2330 = vsub.f32 %v2328, %v2329
        %v2331 = vand.u32 %v2330, 4294901760
        %2332 = vmatpush.msra.mxu0 %v2331
        %v2333 = vand.u32 %v1333, 4294901760
        %2334 = vmatmul.f32.gmra.mxu0 %v2333
        %v2335 = vpop.f32.mrf.mxu0
        %v2336 = vadd.f32 %v2297, %v2335
        %v2337 = vand.u32 %v1336, 4294901760
        %2338 = vmatmul.f32.gmra.mxu0 %v2337
        %v2339 = vpop.f32.mrf.mxu0
        %v2340 = vadd.f32 %v2305, %v2339
        %2341 = vdwg.mxu0
        %2342 = vmatpush.msra.mxu0 0.0
        %2343 = vmatpush.msra.mxu0 0.0
        %2344 = vmatpush.msra.mxu0 0.0
        %2345 = vmatpush.msra.mxu0 0.0
        %2346 = vmatpush.msra.mxu0 0.0
        %2347 = vmatpush.msra.mxu0 0.0
        %2348 = vmatpush.msra.mxu0 0.0
        %2349 = vmatpush.msra.mxu0 0.0
        %2350 = vmatpush.msra.mxu0 0.0
        %2351 = vmatpush.msra.mxu0 0.0
        %2352 = vmatpush.msra.mxu0 0.0
        %2353 = vmatpush.msra.mxu0 0.0
        %2354 = vmatpush.msra.mxu0 0.0
        %2355 = vmatpush.msra.mxu0 0.0
        %v2356 = vand.u32 %v1314, 4294901760
        %v2357 = vsub.f32 %v1314, %v2356
        %2358 = vmatpush.msra.mxu0 %v2357
        %v2359 = vand.u32 %v1312, 4294901760
        %v2360 = vsub.f32 %v1312, %v2359
        %2361 = vmatpush.msra.mxu0 %v2360
        %v2362 = vand.u32 %v1333, 4294901760
        %v2363 = vsub.f32 %v1333, %v2362
        %2364 = vmatmul.f32.gmra.mxu0 %v2363
        %v2365 = vpop.f32.mrf.mxu0
        %v2366 = vadd.f32 %v2336, %v2365
        %v2367 = vand.u32 %v1336, 4294901760
        %v2368 = vsub.f32 %v1336, %v2367
        %2369 = vmatmul.f32.gmra.mxu0 %v2368
        %v2370 = vpop.f32.mrf.mxu0
        %v2371 = vadd.f32 %v2340, %v2370
        %2372 = vdwg.mxu0
        %2373 = vmatpush.msra.mxu0 0.0
        %2374 = vmatpush.msra.mxu0 0.0
        %2375 = vmatpush.msra.mxu0 0.0
        %2376 = vmatpush.msra.mxu0 0.0
        %2377 = vmatpush.msra.mxu0 0.0
        %2378 = vmatpush.msra.mxu0 0.0
        %2379 = vmatpush.msra.mxu0 0.0
        %2380 = vmatpush.msra.mxu0 0.0
        %2381 = vmatpush.msra.mxu0 0.0
        %2382 = vmatpush.msra.mxu0 0.0
        %2383 = vmatpush.msra.mxu0 0.0
        %2384 = vmatpush.msra.mxu0 0.0
        %2385 = vmatpush.msra.mxu0 0.0
        %2386 = vmatpush.msra.mxu0 0.0
        %v2387 = vand.u32 %v1314, 4294901760
        %2388 = vmatpush.msra.mxu0 %v2387
        %v2389 = vand.u32 %v1312, 4294901760
        %2390 = vmatpush.msra.mxu0 %v2389
        %v2391 = vand.u32 %v1333, 4294901760
        %v2392 = vsub.f32 %v1333, %v2391
        %v2393 = vand.u32 %v2392, 4294901760
        %2394 = vmatmul.f32.gmra.mxu0 %v2393
        %v2395 = vpop.f32.mrf.mxu0
        %v2396 = vadd.f32 %v2366, %v2395
        %v2397 = vand.u32 %v1336, 4294901760
        %v2398 = vsub.f32 %v1336, %v2397
        %v2399 = vand.u32 %v2398, 4294901760
        %2400 = vmatmul.f32.gmra.mxu0 %v2399
        %v2401 = vpop.f32.mrf.mxu0
        %v2402 = vadd.f32 %v2371, %v2401
        %2403 = vdwg.mxu0
        %2404 = vmatpush.msra.mxu0 0.0
        %2405 = vmatpush.msra.mxu0 0.0
        %2406 = vmatpush.msra.mxu0 0.0
        %2407 = vmatpush.msra.mxu0 0.0
        %2408 = vmatpush.msra.mxu0 0.0
        %2409 = vmatpush.msra.mxu0 0.0
        %2410 = vmatpush.msra.mxu0 0.0
        %2411 = vmatpush.msra.mxu0 0.0
        %2412 = vmatpush.msra.mxu0 0.0
        %2413 = vmatpush.msra.mxu0 0.0
        %2414 = vmatpush.msra.mxu0 0.0
        %2415 = vmatpush.msra.mxu0 0.0
        %2416 = vmatpush.msra.mxu0 0.0
        %2417 = vmatpush.msra.mxu0 0.0
        %v2418 = vand.u32 %v1314, 4294901760
        %v2419 = vsub.f32 %v1314, %v2418
        %v2420 = vand.u32 %v2419, 4294901760
        %2421 = vmatpush.msra.mxu0 %v2420
        %v2422 = vand.u32 %v1312, 4294901760
        %v2423 = vsub.f32 %v1312, %v2422
        %v2424 = vand.u32 %v2423, 4294901760
        %2425 = vmatpush.msra.mxu0 %v2424
        %v2426 = vand.u32 %v1333, 4294901760
        %2427 = vmatmul.f32.gmra.mxu0 %v2426
        %v2428 = vpop.f32.mrf.mxu0
        %v2429 = vadd.f32 %v2396, %v2428
        %v2430 = vand.u32 %v1336, 4294901760
        %2431 = vmatmul.f32.gmra.mxu0 %v2430
        %v2432 = vpop.f32.mrf.mxu0
        %v2433 = vadd.f32 %v2402, %v2432
        %2434 = vdwg.mxu0
        %2435 = vmatpush.msra.mxu0 0.0
        %2436 = vmatpush.msra.mxu0 0.0
        %2437 = vmatpush.msra.mxu0 0.0
        %2438 = vmatpush.msra.mxu0 0.0
        %2439 = vmatpush.msra.mxu0 0.0
        %2440 = vmatpush.msra.mxu0 0.0
        %2441 = vmatpush.msra.mxu0 0.0
        %2442 = vmatpush.msra.mxu0 0.0
        %2443 = vmatpush.msra.mxu0 0.0
        %2444 = vmatpush.msra.mxu0 0.0
        %2445 = vmatpush.msra.mxu0 0.0
        %2446 = vmatpush.msra.mxu0 0.0
        %2447 = vmatpush.msra.mxu0 0.0
        %2448 = vmatpush.msra.mxu0 0.0
        %v2449 = vand.u32 %v1314, 4294901760
        %2450 = vmatpush.msra.mxu0 %v2449
        %v2451 = vand.u32 %v1312, 4294901760
        %2452 = vmatpush.msra.mxu0 %v2451
        %v2453 = vand.u32 %v1333, 4294901760
        %2454 = vmatmul.f32.gmra.mxu0 %v2453
        %v2455 = vpop.f32.mrf.mxu0
        %v2456 = vadd.f32 %v2429, %v2455
        %v2457 = vand.u32 %v1336, 4294901760
        %2458 = vmatmul.f32.gmra.mxu0 %v2457
        %v2459 = vpop.f32.mrf.mxu0
        %v2460 = vadd.f32 %v2433, %v2459
        %2461 = vdwg.mxu0
        %v2462 = vld [vmem:[%s8] sm:$0xff]
        %v2463 = vld [vmem:[%s8 + $0x8] sm:$0xff]
        %2465 = vset.pattern.permute.xlu0 0
        %2466 = vperm.xlu0 %2465, %v2462
        %v2467 = vpop.permute.xlu0 %2466
        %2470 = vset.pattern.permute.xlu0 0
        %2471 = vperm.xlu0 %2470, %v2463
        %v2472 = vpop.permute.xlu0 %2471
        %v2474 = vmul.f32 %v1894, %v2467
        %v2475 = vmul.f32 %v2456, %v2467
        %v2476 = vmul.f32 %v1898, %v2472
        %v2477 = vmul.f32 %v2460, %v2472
        %v2478 = vld [vmem:[%s9] sm:$0xff]
        %v2479 = vld [vmem:[%s9 + $0x8] sm:$0xff]
        %2481 = vset.pattern.permute.xlu0 0
        %2482 = vperm.xlu0 %2481, %v2478
        %v2483 = vpop.permute.xlu0 %2482
        %2486 = vset.pattern.permute.xlu0 0
        %2487 = vperm.xlu0 %2486, %v2479
        %v2488 = vpop.permute.xlu0 %2487
        %v2490 = vadd.f32 %v2474, %v2483
        %v2491 = vadd.f32 %v2475, %v2483
        %v2492 = vadd.f32 %v2476, %v2488
        %v2493 = vadd.f32 %v2477, %v2488
        %v2494 = vmax.f32 %v2490, 0.0
        %v2495 = vmax.f32 %v2491, 0.0
        %v2496 = vmax.f32 %v2492, 0.0
        %v2497 = vmax.f32 %v2493, 0.0
        %v2498 = vadd.f32 %v915, %v2494
        %v2499 = vadd.f32 %v1131, %v2495
        %v2500 = vadd.f32 %v919, %v2496
        %v2501 = vadd.f32 %v1135, %v2497
        %v2502 = vld [vmem:[%s670] sm:$0xff]
        %v2503 = vld [vmem:[%s670 + $0x8] sm:$0xff]
        %v2504 = vld [vmem:[%s675] sm:$0xff]
        %v2505 = vld [vmem:[%s675 + $0x8] sm:$0xff]
        %v2506 = vld [vmem:[#allocation8] sm:$0xff]
        %v2507 = vld [vmem:[#allocation8 + $0x8] sm:$0xff]
        %v2508 = vld [vmem:[#allocation10] sm:$0xff]
        %v2509 = vld [vmem:[#allocation10 + $0x8] sm:$0xff]
        %v2511 = vsel %vm1331, %v2508, 0
        %v2514 = vsel %vm1331, %v2509, 0
        %2516 = vmatpush.msra.mxu0 0.0
        %2517 = vmatpush.msra.mxu0 0.0
        %2518 = vmatpush.msra.mxu0 0.0
        %2519 = vmatpush.msra.mxu0 0.0
        %2520 = vmatpush.msra.mxu0 0.0
        %2521 = vmatpush.msra.mxu0 0.0
        %2522 = vmatpush.msra.mxu0 0.0
        %2523 = vmatpush.msra.mxu0 0.0
        %2524 = vmatpush.msra.mxu0 0.0
        %2525 = vmatpush.msra.mxu0 0.0
        %2526 = vmatpush.msra.mxu0 0.0
        %2527 = vmatpush.msra.mxu0 0.0
        %2528 = vmatpush.msra.mxu0 0.0
        %2529 = vmatpush.msra.mxu0 0.0
        %v2530 = vand.u32 %v2500, 4294901760
        %2531 = vmatpush.msra.mxu0 %v2530
        %v2532 = vand.u32 %v2498, 4294901760
        %2533 = vmatpush.msra.mxu0 %v2532
        %v2534 = vand.u32 %v2511, 4294901760
        %v2535 = vsub.f32 %v2511, %v2534
        %v2536 = vand.u32 %v2535, 4294901760
        %v2537 = vsub.f32 %v2535, %v2536
        %v2538 = vand.u32 %v2537, 4294901760
        %2539 = vmatmul.f32.gmra.mxu0 %v2538
        %v2540 = vpop.f32.mrf.mxu0
        %v2541 = vadd.f32 0.0, %v2540
        %v2542 = vand.u32 %v2514, 4294901760
        %v2543 = vsub.f32 %v2514, %v2542
        %v2544 = vand.u32 %v2543, 4294901760
        %v2545 = vsub.f32 %v2543, %v2544
        %v2546 = vand.u32 %v2545, 4294901760
        %2547 = vmatmul.f32.gmra.mxu0 %v2546
        %v2548 = vpop.f32.mrf.mxu0
        %v2549 = vadd.f32 0.0, %v2548
        %2550 = vdwg.mxu0
        %2551 = vmatpush.msra.mxu0 0.0
        %2552 = vmatpush.msra.mxu0 0.0
        %2553 = vmatpush.msra.mxu0 0.0
        %2554 = vmatpush.msra.mxu0 0.0
        %2555 = vmatpush.msra.mxu0 0.0
        %2556 = vmatpush.msra.mxu0 0.0
        %2557 = vmatpush.msra.mxu0 0.0
        %2558 = vmatpush.msra.mxu0 0.0
        %2559 = vmatpush.msra.mxu0 0.0
        %2560 = vmatpush.msra.mxu0 0.0
        %2561 = vmatpush.msra.mxu0 0.0
        %2562 = vmatpush.msra.mxu0 0.0
        %2563 = vmatpush.msra.mxu0 0.0
        %2564 = vmatpush.msra.mxu0 0.0
        %v2565 = vand.u32 %v2500, 4294901760
        %v2566 = vsub.f32 %v2500, %v2565
        %v2567 = vand.u32 %v2566, 4294901760
        %v2568 = vsub.f32 %v2566, %v2567
        %v2569 = vand.u32 %v2568, 4294901760
        %2570 = vmatpush.msra.mxu0 %v2569
        %v2571 = vand.u32 %v2498, 4294901760
        %v2572 = vsub.f32 %v2498, %v2571
        %v2573 = vand.u32 %v2572, 4294901760
        %v2574 = vsub.f32 %v2572, %v2573
        %v2575 = vand.u32 %v2574, 4294901760
        %2576 = vmatpush.msra.mxu0 %v2575
        %v2577 = vand.u32 %v2511, 4294901760
        %2578 = vmatmul.f32.gmra.mxu0 %v2577
        %v2579 = vpop.f32.mrf.mxu0
        %v2580 = vadd.f32 %v2541, %v2579
        %v2581 = vand.u32 %v2514, 4294901760
        %2582 = vmatmul.f32.gmra.mxu0 %v2581
        %v2583 = vpop.f32.mrf.mxu0
        %v2584 = vadd.f32 %v2549, %v2583
        %2585 = vdwg.mxu0
        %2586 = vmatpush.msra.mxu0 0.0
        %2587 = vmatpush.msra.mxu0 0.0
        %2588 = vmatpush.msra.mxu0 0.0
        %2589 = vmatpush.msra.mxu0 0.0
        %2590 = vmatpush.msra.mxu0 0.0
        %2591 = vmatpush.msra.mxu0 0.0
        %2592 = vmatpush.msra.mxu0 0.0
        %2593 = vmatpush.msra.mxu0 0.0
        %2594 = vmatpush.msra.mxu0 0.0
        %2595 = vmatpush.msra.mxu0 0.0
        %2596 = vmatpush.msra.mxu0 0.0
        %2597 = vmatpush.msra.mxu0 0.0
        %2598 = vmatpush.msra.mxu0 0.0
        %2599 = vmatpush.msra.mxu0 0.0
        %v2600 = vand.u32 %v2500, 4294901760
        %v2601 = vsub.f32 %v2500, %v2600
        %2602 = vmatpush.msra.mxu0 %v2601
        %v2603 = vand.u32 %v2498, 4294901760
        %v2604 = vsub.f32 %v2498, %v2603
        %2605 = vmatpush.msra.mxu0 %v2604
        %v2606 = vand.u32 %v2511, 4294901760
        %v2607 = vsub.f32 %v2511, %v2606
        %2608 = vmatmul.f32.gmra.mxu0 %v2607
        %v2609 = vpop.f32.mrf.mxu0
        %v2610 = vadd.f32 %v2580, %v2609
        %v2611 = vand.u32 %v2514, 4294901760
        %v2612 = vsub.f32 %v2514, %v2611
        %2613 = vmatmul.f32.gmra.mxu0 %v2612
        %v2614 = vpop.f32.mrf.mxu0
        %v2615 = vadd.f32 %v2584, %v2614
        %2616 = vdwg.mxu0
        %2617 = vmatpush.msra.mxu0 0.0
        %2618 = vmatpush.msra.mxu0 0.0
        %2619 = vmatpush.msra.mxu0 0.0
        %2620 = vmatpush.msra.mxu0 0.0
        %2621 = vmatpush.msra.mxu0 0.0
        %2622 = vmatpush.msra.mxu0 0.0
        %2623 = vmatpush.msra.mxu0 0.0
        %2624 = vmatpush.msra.mxu0 0.0
        %2625 = vmatpush.msra.mxu0 0.0
        %2626 = vmatpush.msra.mxu0 0.0
        %2627 = vmatpush.msra.mxu0 0.0
        %2628 = vmatpush.msra.mxu0 0.0
        %2629 = vmatpush.msra.mxu0 0.0
        %2630 = vmatpush.msra.mxu0 0.0
        %v2631 = vand.u32 %v2500, 4294901760
        %2632 = vmatpush.msra.mxu0 %v2631
        %v2633 = vand.u32 %v2498, 4294901760
        %2634 = vmatpush.msra.mxu0 %v2633
        %v2635 = vand.u32 %v2511, 4294901760
        %v2636 = vsub.f32 %v2511, %v2635
        %v2637 = vand.u32 %v2636, 4294901760
        %2638 = vmatmul.f32.gmra.mxu0 %v2637
        %v2639 = vpop.f32.mrf.mxu0
        %v2640 = vadd.f32 %v2610, %v2639
        %v2641 = vand.u32 %v2514, 4294901760
        %v2642 = vsub.f32 %v2514, %v2641
        %v2643 = vand.u32 %v2642, 4294901760
        %2644 = vmatmul.f32.gmra.mxu0 %v2643
        %v2645 = vpop.f32.mrf.mxu0
        %v2646 = vadd.f32 %v2615, %v2645
        %2647 = vdwg.mxu0
        %2648 = vmatpush.msra.mxu0 0.0
        %2649 = vmatpush.msra.mxu0 0.0
        %2650 = vmatpush.msra.mxu0 0.0
        %2651 = vmatpush.msra.mxu0 0.0
        %2652 = vmatpush.msra.mxu0 0.0
        %2653 = vmatpush.msra.mxu0 0.0
        %2654 = vmatpush.msra.mxu0 0.0
        %2655 = vmatpush.msra.mxu0 0.0
        %2656 = vmatpush.msra.mxu0 0.0
        %2657 = vmatpush.msra.mxu0 0.0
        %2658 = vmatpush.msra.mxu0 0.0
        %2659 = vmatpush.msra.mxu0 0.0
        %2660 = vmatpush.msra.mxu0 0.0
        %2661 = vmatpush.msra.mxu0 0.0
        %v2662 = vand.u32 %v2500, 4294901760
        %v2663 = vsub.f32 %v2500, %v2662
        %v2664 = vand.u32 %v2663, 4294901760
        %2665 = vmatpush.msra.mxu0 %v2664
        %v2666 = vand.u32 %v2498, 4294901760
        %v2667 = vsub.f32 %v2498, %v2666
        %v2668 = vand.u32 %v2667, 4294901760
        %2669 = vmatpush.msra.mxu0 %v2668
        %v2670 = vand.u32 %v2511, 4294901760
        %2671 = vmatmul.f32.gmra.mxu0 %v2670
        %v2672 = vpop.f32.mrf.mxu0
        %v2673 = vadd.f32 %v2640, %v2672
        %v2674 = vand.u32 %v2514, 4294901760
        %2675 = vmatmul.f32.gmra.mxu0 %v2674
        %v2676 = vpop.f32.mrf.mxu0
        %v2677 = vadd.f32 %v2646, %v2676
        %2678 = vdwg.mxu0
        %2679 = vmatpush.msra.mxu0 0.0
        %2680 = vmatpush.msra.mxu0 0.0
        %2681 = vmatpush.msra.mxu0 0.0
        %2682 = vmatpush.msra.mxu0 0.0
        %2683 = vmatpush.msra.mxu0 0.0
        %2684 = vmatpush.msra.mxu0 0.0
        %2685 = vmatpush.msra.mxu0 0.0
        %2686 = vmatpush.msra.mxu0 0.0
        %2687 = vmatpush.msra.mxu0 0.0
        %2688 = vmatpush.msra.mxu0 0.0
        %2689 = vmatpush.msra.mxu0 0.0
        %2690 = vmatpush.msra.mxu0 0.0
        %2691 = vmatpush.msra.mxu0 0.0
        %2692 = vmatpush.msra.mxu0 0.0
        %v2693 = vand.u32 %v2500, 4294901760
        %2694 = vmatpush.msra.mxu0 %v2693
        %v2695 = vand.u32 %v2498, 4294901760
        %2696 = vmatpush.msra.mxu0 %v2695
        %v2697 = vand.u32 %v2511, 4294901760
        %2698 = vmatmul.f32.gmra.mxu0 %v2697
        %v2699 = vpop.f32.mrf.mxu0
        %v2700 = vadd.f32 %v2673, %v2699
        %v2701 = vand.u32 %v2514, 4294901760
        %2702 = vmatmul.f32.gmra.mxu0 %v2701
        %v2703 = vpop.f32.mrf.mxu0
        %v2704 = vadd.f32 %v2677, %v2703
        %2705 = vdwg.mxu0
        %2706 = vmatpush.msra.mxu0 0.0
        %2707 = vmatpush.msra.mxu0 0.0
        %2708 = vmatpush.msra.mxu0 0.0
        %2709 = vmatpush.msra.mxu0 0.0
        %2710 = vmatpush.msra.mxu0 0.0
        %2711 = vmatpush.msra.mxu0 0.0
        %2712 = vmatpush.msra.mxu0 0.0
        %2713 = vmatpush.msra.mxu0 0.0
        %2714 = vmatpush.msra.mxu0 0.0
        %2715 = vmatpush.msra.mxu0 0.0
        %2716 = vmatpush.msra.mxu0 0.0
        %2717 = vmatpush.msra.mxu0 0.0
        %2718 = vmatpush.msra.mxu0 0.0
        %2719 = vmatpush.msra.mxu0 0.0
        %v2720 = vand.u32 %v2501, 4294901760
        %2721 = vmatpush.msra.mxu0 %v2720
        %v2722 = vand.u32 %v2499, 4294901760
        %2723 = vmatpush.msra.mxu0 %v2722
        %v2724 = vand.u32 %v2511, 4294901760
        %v2725 = vsub.f32 %v2511, %v2724
        %v2726 = vand.u32 %v2725, 4294901760
        %v2727 = vsub.f32 %v2725, %v2726
        %v2728 = vand.u32 %v2727, 4294901760
        %2729 = vmatmul.f32.gmra.mxu0 %v2728
        %v2730 = vpop.f32.mrf.mxu0
        %v2731 = vadd.f32 0.0, %v2730
        %v2732 = vand.u32 %v2514, 4294901760
        %v2733 = vsub.f32 %v2514, %v2732
        %v2734 = vand.u32 %v2733, 4294901760
        %v2735 = vsub.f32 %v2733, %v2734
        %v2736 = vand.u32 %v2735, 4294901760
        %2737 = vmatmul.f32.gmra.mxu0 %v2736
        %v2738 = vpop.f32.mrf.mxu0
        %v2739 = vadd.f32 0.0, %v2738
        %2740 = vdwg.mxu0
        %2741 = vmatpush.msra.mxu0 0.0
        %2742 = vmatpush.msra.mxu0 0.0
        %2743 = vmatpush.msra.mxu0 0.0
        %2744 = vmatpush.msra.mxu0 0.0
        %2745 = vmatpush.msra.mxu0 0.0
        %2746 = vmatpush.msra.mxu0 0.0
        %2747 = vmatpush.msra.mxu0 0.0
        %2748 = vmatpush.msra.mxu0 0.0
        %2749 = vmatpush.msra.mxu0 0.0
        %2750 = vmatpush.msra.mxu0 0.0
        %2751 = vmatpush.msra.mxu0 0.0
        %2752 = vmatpush.msra.mxu0 0.0
        %2753 = vmatpush.msra.mxu0 0.0
        %2754 = vmatpush.msra.mxu0 0.0
        %v2755 = vand.u32 %v2501, 4294901760
        %v2756 = vsub.f32 %v2501, %v2755
        %v2757 = vand.u32 %v2756, 4294901760
        %v2758 = vsub.f32 %v2756, %v2757
        %v2759 = vand.u32 %v2758, 4294901760
        %2760 = vmatpush.msra.mxu0 %v2759
        %v2761 = vand.u32 %v2499, 4294901760
        %v2762 = vsub.f32 %v2499, %v2761
        %v2763 = vand.u32 %v2762, 4294901760
        %v2764 = vsub.f32 %v2762, %v2763
        %v2765 = vand.u32 %v2764, 4294901760
        %2766 = vmatpush.msra.mxu0 %v2765
        %v2767 = vand.u32 %v2511, 4294901760
        %2768 = vmatmul.f32.gmra.mxu0 %v2767
        %v2769 = vpop.f32.mrf.mxu0
        %v2770 = vadd.f32 %v2731, %v2769
        %v2771 = vand.u32 %v2514, 4294901760
        %2772 = vmatmul.f32.gmra.mxu0 %v2771
        %v2773 = vpop.f32.mrf.mxu0
        %v2774 = vadd.f32 %v2739, %v2773
        %2775 = vdwg.mxu0
        %2776 = vmatpush.msra.mxu0 0.0
        %2777 = vmatpush.msra.mxu0 0.0
        %2778 = vmatpush.msra.mxu0 0.0
        %2779 = vmatpush.msra.mxu0 0.0
        %2780 = vmatpush.msra.mxu0 0.0
        %2781 = vmatpush.msra.mxu0 0.0
        %2782 = vmatpush.msra.mxu0 0.0
        %2783 = vmatpush.msra.mxu0 0.0
        %2784 = vmatpush.msra.mxu0 0.0
        %2785 = vmatpush.msra.mxu0 0.0
        %2786 = vmatpush.msra.mxu0 0.0
        %2787 = vmatpush.msra.mxu0 0.0
        %2788 = vmatpush.msra.mxu0 0.0
        %2789 = vmatpush.msra.mxu0 0.0
        %v2790 = vand.u32 %v2501, 4294901760
        %v2791 = vsub.f32 %v2501, %v2790
        %2792 = vmatpush.msra.mxu0 %v2791
        %v2793 = vand.u32 %v2499, 4294901760
        %v2794 = vsub.f32 %v2499, %v2793
        %2795 = vmatpush.msra.mxu0 %v2794
        %v2796 = vand.u32 %v2511, 4294901760
        %v2797 = vsub.f32 %v2511, %v2796
        %2798 = vmatmul.f32.gmra.mxu0 %v2797
        %v2799 = vpop.f32.mrf.mxu0
        %v2800 = vadd.f32 %v2770, %v2799
        %v2801 = vand.u32 %v2514, 4294901760
        %v2802 = vsub.f32 %v2514, %v2801
        %2803 = vmatmul.f32.gmra.mxu0 %v2802
        %v2804 = vpop.f32.mrf.mxu0
        %v2805 = vadd.f32 %v2774, %v2804
        %2806 = vdwg.mxu0
        %2807 = vmatpush.msra.mxu0 0.0
        %2808 = vmatpush.msra.mxu0 0.0
        %2809 = vmatpush.msra.mxu0 0.0
        %2810 = vmatpush.msra.mxu0 0.0
        %2811 = vmatpush.msra.mxu0 0.0
        %2812 = vmatpush.msra.mxu0 0.0
        %2813 = vmatpush.msra.mxu0 0.0
        %2814 = vmatpush.msra.mxu0 0.0
        %2815 = vmatpush.msra.mxu0 0.0
        %2816 = vmatpush.msra.mxu0 0.0
        %2817 = vmatpush.msra.mxu0 0.0
        %2818 = vmatpush.msra.mxu0 0.0
        %2819 = vmatpush.msra.mxu0 0.0
        %2820 = vmatpush.msra.mxu0 0.0
        %v2821 = vand.u32 %v2501, 4294901760
        %2822 = vmatpush.msra.mxu0 %v2821
        %v2823 = vand.u32 %v2499, 4294901760
        %2824 = vmatpush.msra.mxu0 %v2823
        %v2825 = vand.u32 %v2511, 4294901760
        %v2826 = vsub.f32 %v2511, %v2825
        %v2827 = vand.u32 %v2826, 4294901760
        %2828 = vmatmul.f32.gmra.mxu0 %v2827
        %v2829 = vpop.f32.mrf.mxu0
        %v2830 = vadd.f32 %v2800, %v2829
        %v2831 = vand.u32 %v2514, 4294901760
        %v2832 = vsub.f32 %v2514, %v2831
        %v2833 = vand.u32 %v2832, 4294901760
        %2834 = vmatmul.f32.gmra.mxu0 %v2833
        %v2835 = vpop.f32.mrf.mxu0
        %v2836 = vadd.f32 %v2805, %v2835
        %2837 = vdwg.mxu0
        %2838 = vmatpush.msra.mxu0 0.0
        %2839 = vmatpush.msra.mxu0 0.0
        %2840 = vmatpush.msra.mxu0 0.0
        %2841 = vmatpush.msra.mxu0 0.0
        %2842 = vmatpush.msra.mxu0 0.0
        %2843 = vmatpush.msra.mxu0 0.0
        %2844 = vmatpush.msra.mxu0 0.0
        %2845 = vmatpush.msra.mxu0 0.0
        %2846 = vmatpush.msra.mxu0 0.0
        %2847 = vmatpush.msra.mxu0 0.0
        %2848 = vmatpush.msra.mxu0 0.0
        %2849 = vmatpush.msra.mxu0 0.0
        %2850 = vmatpush.msra.mxu0 0.0
        %2851 = vmatpush.msra.mxu0 0.0
        %v2852 = vand.u32 %v2501, 4294901760
        %v2853 = vsub.f32 %v2501, %v2852
        %v2854 = vand.u32 %v2853, 4294901760
        %2855 = vmatpush.msra.mxu0 %v2854
        %v2856 = vand.u32 %v2499, 4294901760
        %v2857 = vsub.f32 %v2499, %v2856
        %v2858 = vand.u32 %v2857, 4294901760
        %2859 = vmatpush.msra.mxu0 %v2858
        %v2860 = vand.u32 %v2511, 4294901760
        %2861 = vmatmul.f32.gmra.mxu0 %v2860
        %v2862 = vpop.f32.mrf.mxu0
        %v2863 = vadd.f32 %v2830, %v2862
        %v2864 = vand.u32 %v2514, 4294901760
        %2865 = vmatmul.f32.gmra.mxu0 %v2864
        %v2866 = vpop.f32.mrf.mxu0
        %v2867 = vadd.f32 %v2836, %v2866
        %2868 = vdwg.mxu0
        %2869 = vmatpush.msra.mxu0 0.0
        %2870 = vmatpush.msra.mxu0 0.0
        %2871 = vmatpush.msra.mxu0 0.0
        %2872 = vmatpush.msra.mxu0 0.0
        %2873 = vmatpush.msra.mxu0 0.0
        %2874 = vmatpush.msra.mxu0 0.0
        %2875 = vmatpush.msra.mxu0 0.0
        %2876 = vmatpush.msra.mxu0 0.0
        %2877 = vmatpush.msra.mxu0 0.0
        %2878 = vmatpush.msra.mxu0 0.0
        %2879 = vmatpush.msra.mxu0 0.0
        %2880 = vmatpush.msra.mxu0 0.0
        %2881 = vmatpush.msra.mxu0 0.0
        %2882 = vmatpush.msra.mxu0 0.0
        %v2883 = vand.u32 %v2501, 4294901760
        %2884 = vmatpush.msra.mxu0 %v2883
        %v2885 = vand.u32 %v2499, 4294901760
        %2886 = vmatpush.msra.mxu0 %v2885
        %v2887 = vand.u32 %v2511, 4294901760
        %2888 = vmatmul.f32.gmra.mxu0 %v2887
        %v2889 = vpop.f32.mrf.mxu0
        %v2890 = vadd.f32 %v2863, %v2889
        %v2891 = vand.u32 %v2514, 4294901760
        %2892 = vmatmul.f32.gmra.mxu0 %v2891
        %v2893 = vpop.f32.mrf.mxu0
        %v2894 = vadd.f32 %v2867, %v2893
        %2895 = vdwg.mxu0
        %v2897 = vsel %vm1331, %v2506, 0
        %v2900 = vsel %vm1331, %v2507, 0
        %2902 = vmatpush.msra.mxu0 0.0
        %2903 = vmatpush.msra.mxu0 0.0
        %2904 = vmatpush.msra.mxu0 0.0
        %2905 = vmatpush.msra.mxu0 0.0
        %2906 = vmatpush.msra.mxu0 0.0
        %2907 = vmatpush.msra.mxu0 0.0
        %2908 = vmatpush.msra.mxu0 0.0
        %2909 = vmatpush.msra.mxu0 0.0
        %2910 = vmatpush.msra.mxu0 0.0
        %2911 = vmatpush.msra.mxu0 0.0
        %2912 = vmatpush.msra.mxu0 0.0
        %2913 = vmatpush.msra.mxu0 0.0
        %2914 = vmatpush.msra.mxu0 0.0
        %2915 = vmatpush.msra.mxu0 0.0
        %v2916 = vand.u32 %v2504, 4294901760
        %2917 = vmatpush.msra.mxu0 %v2916
        %v2918 = vand.u32 %v2502, 4294901760
        %2919 = vmatpush.msra.mxu0 %v2918
        %v2920 = vand.u32 %v2897, 4294901760
        %v2921 = vsub.f32 %v2897, %v2920
        %v2922 = vand.u32 %v2921, 4294901760
        %v2923 = vsub.f32 %v2921, %v2922
        %v2924 = vand.u32 %v2923, 4294901760
        %2925 = vmatmul.f32.gmra.mxu0 %v2924
        %v2926 = vpop.f32.mrf.mxu0
        %v2927 = vadd.f32 %v2700, %v2926
        %v2928 = vand.u32 %v2900, 4294901760
        %v2929 = vsub.f32 %v2900, %v2928
        %v2930 = vand.u32 %v2929, 4294901760
        %v2931 = vsub.f32 %v2929, %v2930
        %v2932 = vand.u32 %v2931, 4294901760
        %2933 = vmatmul.f32.gmra.mxu0 %v2932
        %v2934 = vpop.f32.mrf.mxu0
        %v2935 = vadd.f32 %v2704, %v2934
        %2936 = vdwg.mxu0
        %2937 = vmatpush.msra.mxu0 0.0
        %2938 = vmatpush.msra.mxu0 0.0
        %2939 = vmatpush.msra.mxu0 0.0
        %2940 = vmatpush.msra.mxu0 0.0
        %2941 = vmatpush.msra.mxu0 0.0
        %2942 = vmatpush.msra.mxu0 0.0
        %2943 = vmatpush.msra.mxu0 0.0
        %2944 = vmatpush.msra.mxu0 0.0
        %2945 = vmatpush.msra.mxu0 0.0
        %2946 = vmatpush.msra.mxu0 0.0
        %2947 = vmatpush.msra.mxu0 0.0
        %2948 = vmatpush.msra.mxu0 0.0
        %2949 = vmatpush.msra.mxu0 0.0
        %2950 = vmatpush.msra.mxu0 0.0
        %v2951 = vand.u32 %v2504, 4294901760
        %v2952 = vsub.f32 %v2504, %v2951
        %v2953 = vand.u32 %v2952, 4294901760
        %v2954 = vsub.f32 %v2952, %v2953
        %v2955 = vand.u32 %v2954, 4294901760
        %2956 = vmatpush.msra.mxu0 %v2955
        %v2957 = vand.u32 %v2502, 4294901760
        %v2958 = vsub.f32 %v2502, %v2957
        %v2959 = vand.u32 %v2958, 4294901760
        %v2960 = vsub.f32 %v2958, %v2959
        %v2961 = vand.u32 %v2960, 4294901760
        %2962 = vmatpush.msra.mxu0 %v2961
        %v2963 = vand.u32 %v2897, 4294901760
        %2964 = vmatmul.f32.gmra.mxu0 %v2963
        %v2965 = vpop.f32.mrf.mxu0
        %v2966 = vadd.f32 %v2927, %v2965
        %v2967 = vand.u32 %v2900, 4294901760
        %2968 = vmatmul.f32.gmra.mxu0 %v2967
        %v2969 = vpop.f32.mrf.mxu0
        %v2970 = vadd.f32 %v2935, %v2969
        %2971 = vdwg.mxu0
        %2972 = vmatpush.msra.mxu0 0.0
        %2973 = vmatpush.msra.mxu0 0.0
        %2974 = vmatpush.msra.mxu0 0.0
        %2975 = vmatpush.msra.mxu0 0.0
        %2976 = vmatpush.msra.mxu0 0.0
        %2977 = vmatpush.msra.mxu0 0.0
        %2978 = vmatpush.msra.mxu0 0.0
        %2979 = vmatpush.msra.mxu0 0.0
        %2980 = vmatpush.msra.mxu0 0.0
        %2981 = vmatpush.msra.mxu0 0.0
        %2982 = vmatpush.msra.mxu0 0.0
        %2983 = vmatpush.msra.mxu0 0.0
        %2984 = vmatpush.msra.mxu0 0.0
        %2985 = vmatpush.msra.mxu0 0.0
        %v2986 = vand.u32 %v2504, 4294901760
        %v2987 = vsub.f32 %v2504, %v2986
        %2988 = vmatpush.msra.mxu0 %v2987
        %v2989 = vand.u32 %v2502, 4294901760
        %v2990 = vsub.f32 %v2502, %v2989
        %2991 = vmatpush.msra.mxu0 %v2990
        %v2992 = vand.u32 %v2897, 4294901760
        %v2993 = vsub.f32 %v2897, %v2992
        %2994 = vmatmul.f32.gmra.mxu0 %v2993
        %v2995 = vpop.f32.mrf.mxu0
        %v2996 = vadd.f32 %v2966, %v2995
        %v2997 = vand.u32 %v2900, 4294901760
        %v2998 = vsub.f32 %v2900, %v2997
        %2999 = vmatmul.f32.gmra.mxu0 %v2998
        %v3000 = vpop.f32.mrf.mxu0
        %v3001 = vadd.f32 %v2970, %v3000
        %3002 = vdwg.mxu0
        %3003 = vmatpush.msra.mxu0 0.0
        %3004 = vmatpush.msra.mxu0 0.0
        %3005 = vmatpush.msra.mxu0 0.0
        %3006 = vmatpush.msra.mxu0 0.0
        %3007 = vmatpush.msra.mxu0 0.0
        %3008 = vmatpush.msra.mxu0 0.0
        %3009 = vmatpush.msra.mxu0 0.0
        %3010 = vmatpush.msra.mxu0 0.0
        %3011 = vmatpush.msra.mxu0 0.0
        %3012 = vmatpush.msra.mxu0 0.0
        %3013 = vmatpush.msra.mxu0 0.0
        %3014 = vmatpush.msra.mxu0 0.0
        %3015 = vmatpush.msra.mxu0 0.0
        %3016 = vmatpush.msra.mxu0 0.0
        %v3017 = vand.u32 %v2504, 4294901760
        %3018 = vmatpush.msra.mxu0 %v3017
        %v3019 = vand.u32 %v2502, 4294901760
        %3020 = vmatpush.msra.mxu0 %v3019
        %v3021 = vand.u32 %v2897, 4294901760
        %v3022 = vsub.f32 %v2897, %v3021
        %v3023 = vand.u32 %v3022, 4294901760
        %3024 = vmatmul.f32.gmra.mxu0 %v3023
        %v3025 = vpop.f32.mrf.mxu0
        %v3026 = vadd.f32 %v2996, %v3025
        %v3027 = vand.u32 %v2900, 4294901760
        %v3028 = vsub.f32 %v2900, %v3027
        %v3029 = vand.u32 %v3028, 4294901760
        %3030 = vmatmul.f32.gmra.mxu0 %v3029
        %v3031 = vpop.f32.mrf.mxu0
        %v3032 = vadd.f32 %v3001, %v3031
        %3033 = vdwg.mxu0
        %3034 = vmatpush.msra.mxu0 0.0
        %3035 = vmatpush.msra.mxu0 0.0
        %3036 = vmatpush.msra.mxu0 0.0
        %3037 = vmatpush.msra.mxu0 0.0
        %3038 = vmatpush.msra.mxu0 0.0
        %3039 = vmatpush.msra.mxu0 0.0
        %3040 = vmatpush.msra.mxu0 0.0
        %3041 = vmatpush.msra.mxu0 0.0
        %3042 = vmatpush.msra.mxu0 0.0
        %3043 = vmatpush.msra.mxu0 0.0
        %3044 = vmatpush.msra.mxu0 0.0
        %3045 = vmatpush.msra.mxu0 0.0
        %3046 = vmatpush.msra.mxu0 0.0
        %3047 = vmatpush.msra.mxu0 0.0
        %v3048 = vand.u32 %v2504, 4294901760
        %v3049 = vsub.f32 %v2504, %v3048
        %v3050 = vand.u32 %v3049, 4294901760
        %3051 = vmatpush.msra.mxu0 %v3050
        %v3052 = vand.u32 %v2502, 4294901760
        %v3053 = vsub.f32 %v2502, %v3052
        %v3054 = vand.u32 %v3053, 4294901760
        %3055 = vmatpush.msra.mxu0 %v3054
        %v3056 = vand.u32 %v2897, 4294901760
        %3057 = vmatmul.f32.gmra.mxu0 %v3056
        %v3058 = vpop.f32.mrf.mxu0
        %v3059 = vadd.f32 %v3026, %v3058
        %v3060 = vand.u32 %v2900, 4294901760
        %3061 = vmatmul.f32.gmra.mxu0 %v3060
        %v3062 = vpop.f32.mrf.mxu0
        %v3063 = vadd.f32 %v3032, %v3062
        %3064 = vdwg.mxu0
        %3065 = vmatpush.msra.mxu0 0.0
        %3066 = vmatpush.msra.mxu0 0.0
        %3067 = vmatpush.msra.mxu0 0.0
        %3068 = vmatpush.msra.mxu0 0.0
        %3069 = vmatpush.msra.mxu0 0.0
        %3070 = vmatpush.msra.mxu0 0.0
        %3071 = vmatpush.msra.mxu0 0.0
        %3072 = vmatpush.msra.mxu0 0.0
        %3073 = vmatpush.msra.mxu0 0.0
        %3074 = vmatpush.msra.mxu0 0.0
        %3075 = vmatpush.msra.mxu0 0.0
        %3076 = vmatpush.msra.mxu0 0.0
        %3077 = vmatpush.msra.mxu0 0.0
        %3078 = vmatpush.msra.mxu0 0.0
        %v3079 = vand.u32 %v2504, 4294901760
        %3080 = vmatpush.msra.mxu0 %v3079
        %v3081 = vand.u32 %v2502, 4294901760
        %3082 = vmatpush.msra.mxu0 %v3081
        %v3083 = vand.u32 %v2897, 4294901760
        %3084 = vmatmul.f32.gmra.mxu0 %v3083
        %v3085 = vpop.f32.mrf.mxu0
        %v3086 = vadd.f32 %v3059, %v3085
        %v3087 = vand.u32 %v2900, 4294901760
        %3088 = vmatmul.f32.gmra.mxu0 %v3087
        %v3089 = vpop.f32.mrf.mxu0
        %v3090 = vadd.f32 %v3063, %v3089
        %3091 = vdwg.mxu0
        %3092 = vmatpush.msra.mxu0 0.0
        %3093 = vmatpush.msra.mxu0 0.0
        %3094 = vmatpush.msra.mxu0 0.0
        %3095 = vmatpush.msra.mxu0 0.0
        %3096 = vmatpush.msra.mxu0 0.0
        %3097 = vmatpush.msra.mxu0 0.0
        %3098 = vmatpush.msra.mxu0 0.0
        %3099 = vmatpush.msra.mxu0 0.0
        %3100 = vmatpush.msra.mxu0 0.0
        %3101 = vmatpush.msra.mxu0 0.0
        %3102 = vmatpush.msra.mxu0 0.0
        %3103 = vmatpush.msra.mxu0 0.0
        %3104 = vmatpush.msra.mxu0 0.0
        %3105 = vmatpush.msra.mxu0 0.0
        %v3106 = vand.u32 %v2505, 4294901760
        %3107 = vmatpush.msra.mxu0 %v3106
        %v3108 = vand.u32 %v2503, 4294901760
        %3109 = vmatpush.msra.mxu0 %v3108
        %v3110 = vand.u32 %v2897, 4294901760
        %v3111 = vsub.f32 %v2897, %v3110
        %v3112 = vand.u32 %v3111, 4294901760
        %v3113 = vsub.f32 %v3111, %v3112
        %v3114 = vand.u32 %v3113, 4294901760
        %3115 = vmatmul.f32.gmra.mxu0 %v3114
        %v3116 = vpop.f32.mrf.mxu0
        %v3117 = vadd.f32 %v2890, %v3116
        %v3118 = vand.u32 %v2900, 4294901760
        %v3119 = vsub.f32 %v2900, %v3118
        %v3120 = vand.u32 %v3119, 4294901760
        %v3121 = vsub.f32 %v3119, %v3120
        %v3122 = vand.u32 %v3121, 4294901760
        %3123 = vmatmul.f32.gmra.mxu0 %v3122
        %v3124 = vpop.f32.mrf.mxu0
        %v3125 = vadd.f32 %v2894, %v3124
        %3126 = vdwg.mxu0
        %3127 = vmatpush.msra.mxu0 0.0
        %3128 = vmatpush.msra.mxu0 0.0
        %3129 = vmatpush.msra.mxu0 0.0
        %3130 = vmatpush.msra.mxu0 0.0
        %3131 = vmatpush.msra.mxu0 0.0
        %3132 = vmatpush.msra.mxu0 0.0
        %3133 = vmatpush.msra.mxu0 0.0
        %3134 = vmatpush.msra.mxu0 0.0
        %3135 = vmatpush.msra.mxu0 0.0
        %3136 = vmatpush.msra.mxu0 0.0
        %3137 = vmatpush.msra.mxu0 0.0
        %3138 = vmatpush.msra.mxu0 0.0
        %3139 = vmatpush.msra.mxu0 0.0
        %3140 = vmatpush.msra.mxu0 0.0
        %v3141 = vand.u32 %v2505, 4294901760
        %v3142 = vsub.f32 %v2505, %v3141
        %v3143 = vand.u32 %v3142, 4294901760
        %v3144 = vsub.f32 %v3142, %v3143
        %v3145 = vand.u32 %v3144, 4294901760
        %3146 = vmatpush.msra.mxu0 %v3145
        %v3147 = vand.u32 %v2503, 4294901760
        %v3148 = vsub.f32 %v2503, %v3147
        %v3149 = vand.u32 %v3148, 4294901760
        %v3150 = vsub.f32 %v3148, %v3149
        %v3151 = vand.u32 %v3150, 4294901760
        %3152 = vmatpush.msra.mxu0 %v3151
        %v3153 = vand.u32 %v2897, 4294901760
        %3154 = vmatmul.f32.gmra.mxu0 %v3153
        %v3155 = vpop.f32.mrf.mxu0
        %v3156 = vadd.f32 %v3117, %v3155
        %v3157 = vand.u32 %v2900, 4294901760
        %3158 = vmatmul.f32.gmra.mxu0 %v3157
        %v3159 = vpop.f32.mrf.mxu0
        %v3160 = vadd.f32 %v3125, %v3159
        %3161 = vdwg.mxu0
        %3162 = vmatpush.msra.mxu0 0.0
        %3163 = vmatpush.msra.mxu0 0.0
        %3164 = vmatpush.msra.mxu0 0.0
        %3165 = vmatpush.msra.mxu0 0.0
        %3166 = vmatpush.msra.mxu0 0.0
        %3167 = vmatpush.msra.mxu0 0.0
        %3168 = vmatpush.msra.mxu0 0.0
        %3169 = vmatpush.msra.mxu0 0.0
        %3170 = vmatpush.msra.mxu0 0.0
        %3171 = vmatpush.msra.mxu0 0.0
        %3172 = vmatpush.msra.mxu0 0.0
        %3173 = vmatpush.msra.mxu0 0.0
        %3174 = vmatpush.msra.mxu0 0.0
        %3175 = vmatpush.msra.mxu0 0.0
        %v3176 = vand.u32 %v2505, 4294901760
        %v3177 = vsub.f32 %v2505, %v3176
        %3178 = vmatpush.msra.mxu0 %v3177
        %v3179 = vand.u32 %v2503, 4294901760
        %v3180 = vsub.f32 %v2503, %v3179
        %3181 = vmatpush.msra.mxu0 %v3180
        %v3182 = vand.u32 %v2897, 4294901760
        %v3183 = vsub.f32 %v2897, %v3182
        %3184 = vmatmul.f32.gmra.mxu0 %v3183
        %v3185 = vpop.f32.mrf.mxu0
        %v3186 = vadd.f32 %v3156, %v3185
        %v3187 = vand.u32 %v2900, 4294901760
        %v3188 = vsub.f32 %v2900, %v3187
        %3189 = vmatmul.f32.gmra.mxu0 %v3188
        %v3190 = vpop.f32.mrf.mxu0
        %v3191 = vadd.f32 %v3160, %v3190
        %3192 = vdwg.mxu0
        %3193 = vmatpush.msra.mxu0 0.0
        %3194 = vmatpush.msra.mxu0 0.0
        %3195 = vmatpush.msra.mxu0 0.0
        %3196 = vmatpush.msra.mxu0 0.0
        %3197 = vmatpush.msra.mxu0 0.0
        %3198 = vmatpush.msra.mxu0 0.0
        %3199 = vmatpush.msra.mxu0 0.0
        %3200 = vmatpush.msra.mxu0 0.0
        %3201 = vmatpush.msra.mxu0 0.0
        %3202 = vmatpush.msra.mxu0 0.0
        %3203 = vmatpush.msra.mxu0 0.0
        %3204 = vmatpush.msra.mxu0 0.0
        %3205 = vmatpush.msra.mxu0 0.0
        %3206 = vmatpush.msra.mxu0 0.0
        %v3207 = vand.u32 %v2505, 4294901760
        %3208 = vmatpush.msra.mxu0 %v3207
        %v3209 = vand.u32 %v2503, 4294901760
        %3210 = vmatpush.msra.mxu0 %v3209
        %v3211 = vand.u32 %v2897, 4294901760
        %v3212 = vsub.f32 %v2897, %v3211
        %v3213 = vand.u32 %v3212, 4294901760
        %3214 = vmatmul.f32.gmra.mxu0 %v3213
        %v3215 = vpop.f32.mrf.mxu0
        %v3216 = vadd.f32 %v3186, %v3215
        %v3217 = vand.u32 %v2900, 4294901760
        %v3218 = vsub.f32 %v2900, %v3217
        %v3219 = vand.u32 %v3218, 4294901760
        %3220 = vmatmul.f32.gmra.mxu0 %v3219
        %v3221 = vpop.f32.mrf.mxu0
        %v3222 = vadd.f32 %v3191, %v3221
        %3223 = vdwg.mxu0
        %3224 = vmatpush.msra.mxu0 0.0
        %3225 = vmatpush.msra.mxu0 0.0
        %3226 = vmatpush.msra.mxu0 0.0
        %3227 = vmatpush.msra.mxu0 0.0
        %3228 = vmatpush.msra.mxu0 0.0
        %3229 = vmatpush.msra.mxu0 0.0
        %3230 = vmatpush.msra.mxu0 0.0
        %3231 = vmatpush.msra.mxu0 0.0
        %3232 = vmatpush.msra.mxu0 0.0
        %3233 = vmatpush.msra.mxu0 0.0
        %3234 = vmatpush.msra.mxu0 0.0
        %3235 = vmatpush.msra.mxu0 0.0
        %3236 = vmatpush.msra.mxu0 0.0
        %3237 = vmatpush.msra.mxu0 0.0
        %v3238 = vand.u32 %v2505, 4294901760
        %v3239 = vsub.f32 %v2505, %v3238
        %v3240 = vand.u32 %v3239, 4294901760
        %3241 = vmatpush.msra.mxu0 %v3240
        %v3242 = vand.u32 %v2503, 4294901760
        %v3243 = vsub.f32 %v2503, %v3242
        %v3244 = vand.u32 %v3243, 4294901760
        %3245 = vmatpush.msra.mxu0 %v3244
        %v3246 = vand.u32 %v2897, 4294901760
        %3247 = vmatmul.f32.gmra.mxu0 %v3246
        %v3248 = vpop.f32.mrf.mxu0
        %v3249 = vadd.f32 %v3216, %v3248
        %v3250 = vand.u32 %v2900, 4294901760
        %3251 = vmatmul.f32.gmra.mxu0 %v3250
        %v3252 = vpop.f32.mrf.mxu0
        %v3253 = vadd.f32 %v3222, %v3252
        %3254 = vdwg.mxu0
        %3255 = vmatpush.msra.mxu0 0.0
        %3256 = vmatpush.msra.mxu0 0.0
        %3257 = vmatpush.msra.mxu0 0.0
        %3258 = vmatpush.msra.mxu0 0.0
        %3259 = vmatpush.msra.mxu0 0.0
        %3260 = vmatpush.msra.mxu0 0.0
        %3261 = vmatpush.msra.mxu0 0.0
        %3262 = vmatpush.msra.mxu0 0.0
        %3263 = vmatpush.msra.mxu0 0.0
        %3264 = vmatpush.msra.mxu0 0.0
        %3265 = vmatpush.msra.mxu0 0.0
        %3266 = vmatpush.msra.mxu0 0.0
        %3267 = vmatpush.msra.mxu0 0.0
        %3268 = vmatpush.msra.mxu0 0.0
        %v3269 = vand.u32 %v2505, 4294901760
        %3270 = vmatpush.msra.mxu0 %v3269
        %v3271 = vand.u32 %v2503, 4294901760
        %3272 = vmatpush.msra.mxu0 %v3271
        %v3273 = vand.u32 %v2897, 4294901760
        %3274 = vmatmul.f32.gmra.mxu0 %v3273
        %v3275 = vpop.f32.mrf.mxu0
        %v3276 = vadd.f32 %v3249, %v3275
        %v3277 = vand.u32 %v2900, 4294901760
        %3278 = vmatmul.f32.gmra.mxu0 %v3277
        %v3279 = vpop.f32.mrf.mxu0
        %v3280 = vadd.f32 %v3253, %v3279
        %3281 = vdwg.mxu0
        %v3282 = vld [vmem:[%s12] sm:$0xff]
        %v3283 = vld [vmem:[%s12 + $0x8] sm:$0xff]
        %3285 = vset.pattern.permute.xlu0 0
        %3286 = vperm.xlu0 %3285, %v3282
        %v3287 = vpop.permute.xlu0 %3286
        %3290 = vset.pattern.permute.xlu0 0
        %3291 = vperm.xlu0 %3290, %v3283
        %v3292 = vpop.permute.xlu0 %3291
        %v3294 = vadd.f32 %v3086, %v3287
        %v3295 = vadd.f32 %v3276, %v3287
        %v3296 = vadd.f32 %v3090, %v3292
        %v3297 = vadd.f32 %v3280, %v3292
        %3298 = vst [vmem:[%s644] sm:$0xff] %v2498
        %3299 = vst [vmem:[%s644 + $0x8] sm:$0xff] %v2499
        %3300 = vst [vmem:[%s651] sm:$0xff] %v2500
        %3301 = vst [vmem:[%s651 + $0x8] sm:$0xff] %v2501
        %3302 = vst [vmem:[%s658] sm:$0xff] %v3294
        %3303 = vst [vmem:[%s658 + $0x8] sm:$0xff] %v3295
        %3304 = vst [vmem:[%s665] sm:$0xff] %v3296
        %3305 = vst [vmem:[%s665 + $0x8] sm:$0xff] %v3297
        %s3306 = sand.u32 %s338, 1
        %s3307 = scalar_lea.sflag [#allocation4], %s3306
        %s3308 = sand.u32 %s338, 1
        %s3309 = smul.addr %s3308, 16
        %s3310 = scalar_lea.vmem [#allocation11], %s3309
        %s3311 = sand.u32 %s42, 1
        %s3312 = scalar_lea.sflag [#allocation13], %s3311
        %s3313 = sand.u32 %s364, 1
        %s3314 = smul.addr %s3313, 16
        %s3315 = scalar_lea.vmem [#allocation12], %s3314
        %s3316 = sand.u32 %s42, 1
        %s3317 = scalar_lea.sflag [#allocation13], %s3316
        %s3318 = sand.u32 %s390, 1
        %s3319 = smul.addr %s3318, 16
        %s3320 = scalar_lea.vmem [#allocation14], %s3319
        %s3321 = sand.u32 %s416, 1
        %s3322 = scalar_lea.sflag [#allocation16], %s3321
        %s3323 = sand.u32 %s416, 1
        %s3324 = smul.addr %s3323, 16
        %s3325 = scalar_lea.vmem [#allocation15], %s3324
        // Predicated region
        $region93: #{tpu_custom_call.1} parent=71 // pred_check
          %p3326 = pneg %p348
        $region94: #{tpu_custom_call.1} parent=71 // pred_check_branch
          %3328 = sbr.rel (%p3326) target = $region96
        $region95: #{tpu_custom_call.1} parent=71 // pred_region
          %3330 = vsyncadd %s3307, 0
          %s3331 = smul.addr %s42, 2
          %s3332 = smul.addr %s3331, 8
          %s3333 = scalar_lea.hbm %s13, %s3332
          %s3335 = sshll.u32 %s3310, 4
          %s3336 = int_to_ptr.vmem [resolvable:$true] %s3335
          %s3337 = sshll.u32 %s3333, 4
          %s3338 = int_to_ptr.hbm [resolvable:$true] %s3337
          %3340 = dma.vmem_to_hbm [thread:$0]  %s3336, 256, %s3338, %s3307
        $region96: #{tpu_custom_call.1} parent=71 // pred_fallthru
          _
        // Predicated region
        $region97: #{tpu_custom_call.1} parent=71 // pred_check
          %p3341 = pneg %p374
        $region98: #{tpu_custom_call.1} parent=71 // pred_check_branch
          %3343 = sbr.rel (%p3341) target = $region100
        $region99: #{tpu_custom_call.1} parent=71 // pred_region
          %3345 = vsyncadd %s3312, 0
          %s3346 = smul.addr %s42, 2
          %s3347 = smul.addr %s3346, 8
          %s3348 = scalar_lea.hbm %s14, %s3347
          %s3350 = sshll.u32 %s3315, 4
          %s3351 = int_to_ptr.vmem [resolvable:$true] %s3350
          %s3352 = sshll.u32 %s3348, 4
          %s3353 = int_to_ptr.hbm [resolvable:$true] %s3352
          %3355 = dma.vmem_to_hbm [thread:$0]  %s3351, 256, %s3353, %s3312
        $region100: #{tpu_custom_call.1} parent=71 // pred_fallthru
          _
        // Predicated region
        $region101: #{tpu_custom_call.1} parent=71 // pred_check
          %p3356 = pneg %p400
        $region102: #{tpu_custom_call.1} parent=71 // pred_check_branch
          %3358 = sbr.rel (%p3356) target = $region104
        $region103: #{tpu_custom_call.1} parent=71 // pred_region
          %3360 = vsyncadd %s3317, 0
          %s3361 = smul.addr %s42, 2
          %s3362 = smul.addr %s3361, 8
          %s3363 = scalar_lea.hbm %s15, %s3362
          %s3365 = sshll.u32 %s3320, 4
          %s3366 = int_to_ptr.vmem [resolvable:$true] %s3365
          %s3367 = sshll.u32 %s3363, 4
          %s3368 = int_to_ptr.hbm [resolvable:$true] %s3367
          %3370 = dma.vmem_to_hbm [thread:$0]  %s3366, 256, %s3368, %s3317
        $region104: #{tpu_custom_call.1} parent=71 // pred_fallthru
          _
        // Predicated region
        $region105: #{tpu_custom_call.1} parent=71 // pred_check
          %p3371 = pneg %p426
        $region106: #{tpu_custom_call.1} parent=71 // pred_check_branch
          %3373 = sbr.rel (%p3371) target = $region108
        $region107: #{tpu_custom_call.1} parent=71 // pred_region
          %3375 = vsyncadd %s3322, 0
          %s3376 = smul.addr %s42, 2
          %s3377 = smul.addr %s3376, 8
          %s3378 = scalar_lea.hbm %s16, %s3377
          %s3380 = sshll.u32 %s3325, 4
          %s3381 = int_to_ptr.vmem [resolvable:$true] %s3380
          %s3382 = sshll.u32 %s3378, 4
          %s3383 = int_to_ptr.hbm [resolvable:$true] %s3382
          %3385 = dma.vmem_to_hbm [thread:$0]  %s3381, 256, %s3383, %s3322
        $region108: #{tpu_custom_call.1} parent=71 // pred_fallthru
          _
      $region72: #{tpu_custom_call.1} parent=5 // pred_fallthru
        _
      %p3386 = scmp.le.s32.totalorder 2, %s37
      // Predicated region
      $region109: #{tpu_custom_call.1} parent=5 // pred_check
        %p3387 = pneg %p3386
      $region110: #{tpu_custom_call.1} parent=5 // pred_check_branch
        %3389 = sbr.rel (%p3387) target = $region112
      $region111: #{tpu_custom_call.1} parent=5 // pred_region
        %s3390 = ssub.s32 %s37, 2
        // Predicated region
        $region113: #{tpu_custom_call.1} parent=111 // pred_check
          %p3391 = pneg %p354
        $region114: #{tpu_custom_call.1} parent=111 // pred_check_branch
          %3393 = sbr.rel (%p3391) target = $region116
        $region115: #{tpu_custom_call.1} parent=111 // pred_region
          %s3394 = sand.u32 %s339, 1
          %s3395 = scalar_lea.sflag [#allocation4], %s3394
          %s3396 = sand.u32 %s339, 1
          %s3397 = smul.addr %s3396, 16
          %s3398 = scalar_lea.vmem [#allocation11], %s3397
          %3400 = dma.done %s3395, 256
        $region116: #{tpu_custom_call.1} parent=111 // pred_fallthru
          _
        // Predicated region
        $region117: #{tpu_custom_call.1} parent=111 // pred_check
          %p3401 = pneg %p380
        $region118: #{tpu_custom_call.1} parent=111 // pred_check_branch
          %3403 = sbr.rel (%p3401) target = $region120
        $region119: #{tpu_custom_call.1} parent=111 // pred_region
          %s3404 = sand.u32 %s43, 1
          %s3405 = scalar_lea.sflag [#allocation13], %s3404
          %s3406 = sand.u32 %s365, 1
          %s3407 = smul.addr %s3406, 16
          %s3408 = scalar_lea.vmem [#allocation12], %s3407
          %3410 = dma.done %s3405, 256
        $region120: #{tpu_custom_call.1} parent=111 // pred_fallthru
          _
        // Predicated region
        $region121: #{tpu_custom_call.1} parent=111 // pred_check
          %p3411 = pneg %p406
        $region122: #{tpu_custom_call.1} parent=111 // pred_check_branch
          %3413 = sbr.rel (%p3411) target = $region124
        $region123: #{tpu_custom_call.1} parent=111 // pred_region
          %s3414 = sand.u32 %s43, 1
          %s3415 = scalar_lea.sflag [#allocation13], %s3414
          %s3416 = sand.u32 %s391, 1
          %s3417 = smul.addr %s3416, 16
          %s3418 = scalar_lea.vmem [#allocation14], %s3417
          %3420 = dma.done %s3415, 256
        $region124: #{tpu_custom_call.1} parent=111 // pred_fallthru
          _
        // Predicated region
        $region125: #{tpu_custom_call.1} parent=111 // pred_check
          %p3421 = pneg %p432
        $region126: #{tpu_custom_call.1} parent=111 // pred_check_branch
          %3423 = sbr.rel (%p3421) target = $region128
        $region127: #{tpu_custom_call.1} parent=111 // pred_region
          %s3424 = sand.u32 %s417, 1
          %s3425 = scalar_lea.sflag [#allocation16], %s3424
          %s3426 = sand.u32 %s417, 1
          %s3427 = smul.addr %s3426, 16
          %s3428 = scalar_lea.vmem [#allocation15], %s3427
          %3430 = dma.done %s3425, 256
        $region128: #{tpu_custom_call.1} parent=111 // pred_fallthru
          _
      $region112: #{tpu_custom_call.1} parent=5 // pred_fallthru
        _
    $region6: #{tpu_custom_call.1} parent=1 // loop_footer
      %s41 = sadd.s32 1, %s37
    $region7: #{tpu_custom_call.1} parent=1 // loop_footer_branch
      %36 = sbr.rel target = $region3
    $region8: #{tpu_custom_call.1} parent=1 // loop_exit
      _
    %3431 = vsyncpa [#allocation3], 1
    %s3432 = scalar_lea.sflag [#allocation3], 1
    %3433 = vsyncpa %s3432, 1
    %3434 = vsyncpa [#allocation6], 1
    %3435 = vsyncpa [#allocation9], 1
    %3436 = vsyncpa [#allocation4], 1
    %s3437 = scalar_lea.sflag [#allocation4], 1
    %3438 = vsyncpa %s3437, 1
    %3439 = vsyncpa [#allocation13], 1
    %s3440 = scalar_lea.sflag [#allocation13], 1
    %3441 = vsyncpa %s3440, 1
    %3442 = vsyncpa [#allocation16], 1
    %s3443 = scalar_lea.sflag [#allocation16], 1
    %3444 = vsyncpa %s3443, 1

</llo_original>
